<compile_context>
chip_gen: v6e
topology: v6e:2x2x1
jax: 0.10.0
libtpu: 0.0.40
codegen_flags: <defaults>
</compile_context>

<pallas_src>
import functools

import jax
import jax.numpy as jnp
from jax.experimental import pallas as pl
from jax.experimental.pallas import tpu as pltpu


def _round_up(n, m):
    return ((n + m - 1) // m) * m


def _mutan_kernel(x01_ref, w01_ref, b01_ref, wm01_ref, bm01_ref,
                  wo_ref, bo_ref, out_ref, *, rank, mp):
    bt = x01_ref.shape[0]

    # Stage 1: fused linear0/linear1 via a block-diagonal weight (one MXU pass).
    h01 = (jnp.dot(x01_ref[...], w01_ref[...],
                   preferred_element_type=jnp.float32)
           + b01_ref[...]).astype(jnp.bfloat16)          # [bt, 2*Mp]

    # Stage 2: per-rank merge matmuls fused block-diagonally into a single
    # 256-wide (K=N=2*Mp) MXU matmul; Hadamard product + Tucker rank-sum are
    # accumulated in registers (no VMEM scratch round-trips).
    z = jnp.zeros((bt, mp), jnp.float32)
    for r in range(rank):                                # static unroll (rank small)
        m01 = jnp.dot(h01, wm01_ref[r],
                      preferred_element_type=jnp.float32) + bm01_ref[r]
        z = z + m01[:, :mp] * m01[:, mp:]                # lane-aligned split

    # Stage 3: output projection; lane-dense bf16 store (Op padded to 128).
    y = jnp.dot(z.astype(jnp.bfloat16), wo_ref[...],
                preferred_element_type=jnp.float32) + bo_ref[...]
    out_ref[...] = y.astype(out_ref.dtype)


@functools.partial(jax.jit,
                   static_argnames=("batch_tile", "single_buffer_weights"))
def mutan_forward(x0, x1, w0, b0, w1, b1, wm0, bm0, wm1, bm1, wo, bo,
                  *, batch_tile=128, single_buffer_weights=True):
    """Mutan forward. Weights are in PyTorch nn.Linear layout ([out, in])."""
    f32, bf16 = jnp.float32, jnp.bfloat16

    B, D0 = x0.shape
    _, D1 = x1.shape
    M = w0.shape[0]                 # mm_dim
    O = wo.shape[0]                 # output_dim
    rank = wm0.shape[0] // M        # merge_linear out = mm_dim * rank

    Mp = _round_up(M, 128)          # lane-pad mm_dim
    Op = _round_up(O, 128)          # lane-pad output_dim
    Dk = D0 + D1
    Dkp = _round_up(Dk, 128)        # lane-pad fused K
    Bp = _round_up(B, batch_tile)   # batch-pad to the tile

    # --- inputs: concat [x0 | x1], zero-pad, bf16 --------------------------
    x01 = jnp.zeros((Bp, Dkp), bf16)
    x01 = x01.at[:B, :D0].set(x0.astype(bf16))
    x01 = x01.at[:B, D0:Dk].set(x1.astype(bf16))

    # --- stage-1 block-diagonal weight [Dkp, 2*Mp], bias [1, 2*Mp] ---------
    w01 = jnp.zeros((Dkp, 2 * Mp), bf16)
    w01 = w01.at[:D0, :M].set(w0.T.astype(bf16))
    w01 = w01.at[D0:Dk, Mp:Mp + M].set(w1.T.astype(bf16))
    b01 = jnp.zeros((1, 2 * Mp), f32)
    b01 = b01.at[0, :M].set(b0.astype(f32))
    b01 = b01.at[0, Mp:Mp + M].set(b1.astype(f32))

    # --- merge weights: per-rank block-diagonal [rank, 2*Mp, 2*Mp] ---------
    # torch row j of wm corresponds to (r = j // M, d_out = j % M), matching
    # m.view(-1, rank, mm_dim); per rank we need [in, out] = wm[r].T.
    wm0_3 = wm0.reshape(rank, M, M).transpose(0, 2, 1).astype(bf16)
    wm1_3 = wm1.reshape(rank, M, M).transpose(0, 2, 1).astype(bf16)
    wm01 = jnp.zeros((rank, 2 * Mp, 2 * Mp), bf16)
    wm01 = wm01.at[:, :M, :M].set(wm0_3)
    wm01 = wm01.at[:, Mp:Mp + M, Mp:Mp + M].set(wm1_3)
    bm01 = jnp.zeros((rank, 1, 2 * Mp), f32)
    bm01 = bm01.at[:, 0, :M].set(bm0.reshape(rank, M).astype(f32))
    bm01 = bm01.at[:, 0, Mp:Mp + M].set(bm1.reshape(rank, M).astype(f32))

    # --- output projection (lane-dense) ------------------------------------
    wo_p = jnp.zeros((Mp, Op), bf16).at[:M, :O].set(wo.T.astype(bf16))
    bo_p = jnp.zeros((1, Op), f32).at[0, :O].set(bo.astype(f32))

    grid = (Bp // batch_tile,)
    kernel = functools.partial(_mutan_kernel, rank=rank, mp=Mp)

    def wspec(shape, index_map):
        # Constant-index blocks: single-buffer when supported (saves the
        # double-buffered copy of every resident weight).
        if single_buffer_weights:
            return pl.BlockSpec(shape, index_map, pipeline_mode=pl.Buffered(1))
        return pl.BlockSpec(shape, index_map)

    out_p = pl.pallas_call(
        kernel,
        out_shape=jax.ShapeDtypeStruct((Bp, Op), bf16),
        grid_spec=pltpu.PrefetchScalarGridSpec(
            num_scalar_prefetch=0,
            grid=grid,
            in_specs=[
                pl.BlockSpec((batch_tile, Dkp), lambda i: (i, 0)),       # [x0|x1]
                wspec((Dkp, 2 * Mp), lambda i: (0, 0)),                  # blockdiag W01
                wspec((1, 2 * Mp), lambda i: (0, 0)),                    # b0|b1
                wspec((rank, 2 * Mp, 2 * Mp), lambda i: (0, 0, 0)),      # blockdiag Wm
                wspec((rank, 1, 2 * Mp), lambda i: (0, 0, 0)),           # bm0|bm1
                wspec((Mp, Op), lambda i: (0, 0)),                       # Wout^T
                wspec((1, Op), lambda i: (0, 0)),                        # bout
            ],
            out_specs=pl.BlockSpec((batch_tile, Op), lambda i: (i, 0)),
        ),
        compiler_params=pltpu.CompilerParams(
            dimension_semantics=("parallel",),
            vmem_limit_bytes=32 * 1024 * 1024,
        ),
    )(x01, w01, b01, wm01, bm01, wo_p, bo_p)

    return out_p[:B, :O]


def _init_linear(key, in_dim, out_dim):
    """PyTorch nn.Linear default init: U(-1/sqrt(in), 1/sqrt(in))."""
    kw, kb = jax.random.split(key)
    bound = 1.0 / jnp.sqrt(jnp.float32(in_dim))
    w = jax.random.uniform(kw, (out_dim, in_dim), jnp.float32, -bound, bound)
    b = jax.random.uniform(kb, (out_dim,), jnp.float32, -bound, bound)
    return w, b


def mutan_reference(x0, x1, w0, b0, w1, b1, wm0, bm0, wm1, bm1, wo, bo, rank):
    """Mixed-precision (bf16 matmul / f32 accumulate) reference mirroring the
    kernel's numerics; structurally identical to the PyTorch forward."""
    bf16, f32 = jnp.bfloat16, jnp.float32

    def dot(a, b):
        return jnp.dot(a.astype(bf16), b.astype(bf16),
                       preferred_element_type=f32)

    M = w0.shape[0]
    h0 = dot(x0, w0.T) + b0
    h1 = dot(x1, w1.T) + b1
    m0 = dot(h0, wm0.T) + bm0
    m1 = dot(h1, wm1.T) + bm1
    m = (m0 * m1).reshape(-1, rank, M)
    z = m.sum(axis=1)
    return dot(z, wo.T) + bo


if __name__ == "__main__":
    # Small shapes consistent with Mutan(input_dims=(32, 48), output_dim=16,
    # mm_dim=32, rank=4); B=256 so the batch grid has 2 parallel steps.
    B = 256
    D0, D1 = 32, 48
    MM_DIM = 32
    RANK = 4
    OUT_DIM = 16

    key = jax.random.PRNGKey(0)
    keys = jax.random.split(key, 7)

    x0 = jax.random.normal(keys[0], (B, D0), jnp.float32)
    x1 = jax.random.normal(keys[1], (B, D1), jnp.float32)

    w0, b0 = _init_linear(keys[2], D0, MM_DIM)
    w1, b1 = _init_linear(keys[3], D1, MM_DIM)
    wm0, bm0 = _init_linear(keys[4], MM_DIM, MM_DIM * RANK)
    wm1, bm1 = _init_linear(keys[5], MM_DIM, MM_DIM * RANK)
    wo, bo = _init_linear(keys[6], MM_DIM, OUT_DIM)

    args = (x0, x1, w0, b0, w1, b1, wm0, bm0, wm1, bm1, wo, bo)
    try:
        out = jax.block_until_ready(
            mutan_forward(*args, batch_tile=128, single_buffer_weights=True))
    except Exception:
        # pipeline_mode=pl.Buffered(1) not accepted by this jax/libtpu build;
        # fall back to default double-buffered constant weights.
        out = jax.block_until_ready(
            mutan_forward(*args, batch_tile=128, single_buffer_weights=False))

    ref = mutan_reference(*args, RANK)

    assert out.shape == (B, OUT_DIM)
    assert out.dtype == jnp.bfloat16
    out_f32 = out.astype(jnp.float32)
    max_err = float(jnp.max(jnp.abs(out_f32 - ref)))
    assert jnp.allclose(out_f32, ref, atol=2e-2, rtol=2e-2), max_err

    print("KERNEL_OK")
</pallas_src>

<mosaic_0001>
module attributes {stable_mosaic.version = 11 : i64} {
  func.func @_mutan_kernel(%arg0: i32, %arg1: memref<128x128xbf16, #tpu.memory_space<vmem>>, %arg2: memref<128x256xbf16, #tpu.memory_space<vmem>>, %arg3: memref<1x256xf32, #tpu.memory_space<vmem>>, %arg4: memref<4x256x256xbf16, #tpu.memory_space<vmem>>, %arg5: memref<4x1x256xf32, #tpu.memory_space<vmem>>, %arg6: memref<128x128xbf16, #tpu.memory_space<vmem>>, %arg7: memref<1x128xf32, #tpu.memory_space<vmem>>, %arg8: memref<128x128xbf16, #tpu.memory_space<vmem>>) attributes {dimension_semantics = [#tpu.dimension_semantics<parallel>], iteration_bounds = array<i64: 2>, scalar_prefetch = 0 : i64, scratch_operands = 0 : i64, tpu.core_type = #tpu.core_type<tc>, window_params = [{transform_indices = @transform_0, window_bounds = array<i64: 128, 128>}, {pipeline_mode = #tpu.pipeline_mode<synchronous>, transform_indices = @transform_1, window_bounds = array<i64: 128, 256>}, {pipeline_mode = #tpu.pipeline_mode<synchronous>, transform_indices = @transform_2, window_bounds = array<i64: 1, 256>}, {pipeline_mode = #tpu.pipeline_mode<synchronous>, transform_indices = @transform_3, window_bounds = array<i64: 4, 256, 256>}, {pipeline_mode = #tpu.pipeline_mode<synchronous>, transform_indices = @transform_4, window_bounds = array<i64: 4, 1, 256>}, {pipeline_mode = #tpu.pipeline_mode<synchronous>, transform_indices = @transform_5, window_bounds = array<i64: 128, 128>}, {pipeline_mode = #tpu.pipeline_mode<synchronous>, transform_indices = @transform_6, window_bounds = array<i64: 1, 128>}, {transform_indices = @transform_7, window_bounds = array<i64: 128, 128>}]} {
    %c0 = arith.constant 0 : index
    %c0_0 = arith.constant 0 : index
    %0 = vector.load %arg1[%c0, %c0_0] : memref<128x128xbf16, #tpu.memory_space<vmem>>, vector<128x128xbf16>
    %c0_1 = arith.constant 0 : index
    %c0_2 = arith.constant 0 : index
    %1 = vector.load %arg2[%c0_1, %c0_2] : memref<128x256xbf16, #tpu.memory_space<vmem>>, vector<128x256xbf16>
    %cst = arith.constant dense<0.000000e+00> : vector<128x256xf32>
    %2 = tpu.matmul %0, %1, %cst {dimension_numbers = #tpu.dot_dimension_numbers<[1], [0], [0], [1], [0, 0, 1, 1], [], []>} : vector<128x128xbf16>, vector<128x256xbf16>, vector<128x256xf32> -> vector<128x256xf32>
    %c0_3 = arith.constant 0 : index
    %c0_4 = arith.constant 0 : index
    %3 = vector.load %arg3[%c0_3, %c0_4] : memref<1x256xf32, #tpu.memory_space<vmem>>, vector<1x256xf32>
    %4 = vector.broadcast %3 : vector<1x256xf32> to vector<128x256xf32>
    %5 = arith.addf %2, %4 : vector<128x256xf32>
    %6 = arith.truncf %5 : vector<128x256xf32> to vector<128x256xbf16>
    %cst_5 = arith.constant 0.000000e+00 : f32
    %7 = vector.broadcast %cst_5 : f32 to vector<128x128xf32>
    %c0_6 = arith.constant 0 : index
    %c0_7 = arith.constant 0 : index
    %c0_8 = arith.constant 0 : index
    %8 = vector.load %arg4[%c0_6, %c0_7, %c0_8] : memref<4x256x256xbf16, #tpu.memory_space<vmem>>, vector<1x256x256xbf16>
    %9 = vector.shape_cast %8 : vector<1x256x256xbf16> to vector<256x256xbf16>
    %cst_9 = arith.constant dense<0.000000e+00> : vector<128x256xf32>
    %10 = tpu.matmul %6, %9, %cst_9 {dimension_numbers = #tpu.dot_dimension_numbers<[1], [0], [0], [1], [0, 0, 1, 1], [], []>} : vector<128x256xbf16>, vector<256x256xbf16>, vector<128x256xf32> -> vector<128x256xf32>
    %c0_10 = arith.constant 0 : index
    %c0_11 = arith.constant 0 : index
    %c0_12 = arith.constant 0 : index
    %11 = vector.load %arg5[%c0_10, %c0_11, %c0_12] : memref<4x1x256xf32, #tpu.memory_space<vmem>>, vector<1x1x256xf32>
    %12 = vector.shape_cast %11 : vector<1x1x256xf32> to vector<1x256xf32>
    %13 = vector.broadcast %12 : vector<1x256xf32> to vector<128x256xf32>
    %14 = arith.addf %10, %13 : vector<128x256xf32>
    %15 = vector.extract_strided_slice %14 {offsets = [0, 0], sizes = [128, 128], strides = [1, 1]} : vector<128x256xf32> to vector<128x128xf32>
    %16 = vector.extract_strided_slice %14 {offsets = [0, 128], sizes = [128, 128], strides = [1, 1]} : vector<128x256xf32> to vector<128x128xf32>
    %17 = arith.mulf %15, %16 : vector<128x128xf32>
    %18 = arith.addf %7, %17 : vector<128x128xf32>
    %c1 = arith.constant 1 : index
    %c0_13 = arith.constant 0 : index
    %c0_14 = arith.constant 0 : index
    %19 = vector.load %arg4[%c1, %c0_13, %c0_14] : memref<4x256x256xbf16, #tpu.memory_space<vmem>>, vector<1x256x256xbf16>
    %20 = vector.shape_cast %19 : vector<1x256x256xbf16> to vector<256x256xbf16>
    %cst_15 = arith.constant dense<0.000000e+00> : vector<128x256xf32>
    %21 = tpu.matmul %6, %20, %cst_15 {dimension_numbers = #tpu.dot_dimension_numbers<[1], [0], [0], [1], [0, 0, 1, 1], [], []>} : vector<128x256xbf16>, vector<256x256xbf16>, vector<128x256xf32> -> vector<128x256xf32>
    %c1_16 = arith.constant 1 : index
    %c0_17 = arith.constant 0 : index
    %c0_18 = arith.constant 0 : index
    %22 = vector.load %arg5[%c1_16, %c0_17, %c0_18] : memref<4x1x256xf32, #tpu.memory_space<vmem>>, vector<1x1x256xf32>
    %23 = vector.shape_cast %22 : vector<1x1x256xf32> to vector<1x256xf32>
    %24 = vector.broadcast %23 : vector<1x256xf32> to vector<128x256xf32>
    %25 = arith.addf %21, %24 : vector<128x256xf32>
    %26 = vector.extract_strided_slice %25 {offsets = [0, 0], sizes = [128, 128], strides = [1, 1]} : vector<128x256xf32> to vector<128x128xf32>
    %27 = vector.extract_strided_slice %25 {offsets = [0, 128], sizes = [128, 128], strides = [1, 1]} : vector<128x256xf32> to vector<128x128xf32>
    %28 = arith.mulf %26, %27 : vector<128x128xf32>
    %29 = arith.addf %18, %28 : vector<128x128xf32>
    %c2 = arith.constant 2 : index
    %c0_19 = arith.constant 0 : index
    %c0_20 = arith.constant 0 : index
    %30 = vector.load %arg4[%c2, %c0_19, %c0_20] : memref<4x256x256xbf16, #tpu.memory_space<vmem>>, vector<1x256x256xbf16>
    %31 = vector.shape_cast %30 : vector<1x256x256xbf16> to vector<256x256xbf16>
    %cst_21 = arith.constant dense<0.000000e+00> : vector<128x256xf32>
    %32 = tpu.matmul %6, %31, %cst_21 {dimension_numbers = #tpu.dot_dimension_numbers<[1], [0], [0], [1], [0, 0, 1, 1], [], []>} : vector<128x256xbf16>, vector<256x256xbf16>, vector<128x256xf32> -> vector<128x256xf32>
    %c2_22 = arith.constant 2 : index
    %c0_23 = arith.constant 0 : index
    %c0_24 = arith.constant 0 : index
    %33 = vector.load %arg5[%c2_22, %c0_23, %c0_24] : memref<4x1x256xf32, #tpu.memory_space<vmem>>, vector<1x1x256xf32>
    %34 = vector.shape_cast %33 : vector<1x1x256xf32> to vector<1x256xf32>
    %35 = vector.broadcast %34 : vector<1x256xf32> to vector<128x256xf32>
    %36 = arith.addf %32, %35 : vector<128x256xf32>
    %37 = vector.extract_strided_slice %36 {offsets = [0, 0], sizes = [128, 128], strides = [1, 1]} : vector<128x256xf32> to vector<128x128xf32>
    %38 = vector.extract_strided_slice %36 {offsets = [0, 128], sizes = [128, 128], strides = [1, 1]} : vector<128x256xf32> to vector<128x128xf32>
    %39 = arith.mulf %37, %38 : vector<128x128xf32>
    %40 = arith.addf %29, %39 : vector<128x128xf32>
    %c3 = arith.constant 3 : index
    %c0_25 = arith.constant 0 : index
    %c0_26 = arith.constant 0 : index
    %41 = vector.load %arg4[%c3, %c0_25, %c0_26] : memref<4x256x256xbf16, #tpu.memory_space<vmem>>, vector<1x256x256xbf16>
    %42 = vector.shape_cast %41 : vector<1x256x256xbf16> to vector<256x256xbf16>
    %cst_27 = arith.constant dense<0.000000e+00> : vector<128x256xf32>
    %43 = tpu.matmul %6, %42, %cst_27 {dimension_numbers = #tpu.dot_dimension_numbers<[1], [0], [0], [1], [0, 0, 1, 1], [], []>} : vector<128x256xbf16>, vector<256x256xbf16>, vector<128x256xf32> -> vector<128x256xf32>
    %c3_28 = arith.constant 3 : index
    %c0_29 = arith.constant 0 : index
    %c0_30 = arith.constant 0 : index
    %44 = vector.load %arg5[%c3_28, %c0_29, %c0_30] : memref<4x1x256xf32, #tpu.memory_space<vmem>>, vector<1x1x256xf32>
    %45 = vector.shape_cast %44 : vector<1x1x256xf32> to vector<1x256xf32>
    %46 = vector.broadcast %45 : vector<1x256xf32> to vector<128x256xf32>
    %47 = arith.addf %43, %46 : vector<128x256xf32>
    %48 = vector.extract_strided_slice %47 {offsets = [0, 0], sizes = [128, 128], strides = [1, 1]} : vector<128x256xf32> to vector<128x128xf32>
    %49 = vector.extract_strided_slice %47 {offsets = [0, 128], sizes = [128, 128], strides = [1, 1]} : vector<128x256xf32> to vector<128x128xf32>
    %50 = arith.mulf %48, %49 : vector<128x128xf32>
    %51 = arith.addf %40, %50 : vector<128x128xf32>
    %52 = arith.truncf %51 : vector<128x128xf32> to vector<128x128xbf16>
    %c0_31 = arith.constant 0 : index
    %c0_32 = arith.constant 0 : index
    %53 = vector.load %arg6[%c0_31, %c0_32] : memref<128x128xbf16, #tpu.memory_space<vmem>>, vector<128x128xbf16>
    %cst_33 = arith.constant dense<0.000000e+00> : vector<128x128xf32>
    %54 = tpu.matmul %52, %53, %cst_33 {dimension_numbers = #tpu.dot_dimension_numbers<[1], [0], [0], [1], [0, 0, 1, 1], [], []>} : vector<128x128xbf16>, vector<128x128xbf16>, vector<128x128xf32> -> vector<128x128xf32>
    %c0_34 = arith.constant 0 : index
    %c0_35 = arith.constant 0 : index
    %55 = vector.load %arg7[%c0_34, %c0_35] : memref<1x128xf32, #tpu.memory_space<vmem>>, vector<1x128xf32>
    %56 = vector.broadcast %55 : vector<1x128xf32> to vector<128x128xf32>
    %57 = arith.addf %54, %56 : vector<128x128xf32>
    %58 = arith.truncf %57 : vector<128x128xf32> to vector<128x128xbf16>
    %c0_36 = arith.constant 0 : index
    %c0_37 = arith.constant 0 : index
    %59 = vector.load %arg8[%c0_36, %c0_37] : memref<128x128xbf16, #tpu.memory_space<vmem>>, vector<128x128xbf16>
    tpu.vector_store %arg8[%c0_36, %c0_37], %58 {strides = array<i32>} : memref<128x128xbf16, #tpu.memory_space<vmem>>, vector<128x128xbf16>,
    return
  }
  func.func @transform_0(%arg0: i32) -> (i32, i32) {
    %c0_i32 = arith.constant 0 : i32
    %c0_i32_0 = arith.constant 0 : i32
    return %arg0, %c0_i32 : i32, i32
  }
  func.func @transform_1(%arg0: i32) -> (i32, i32) {
    %c0_i32 = arith.constant 0 : i32
    %c0_i32_0 = arith.constant 0 : i32
    %c0_i32_1 = arith.constant 0 : i32
    return %c0_i32, %c0_i32_0 : i32, i32
  }
  func.func @transform_2(%arg0: i32) -> (i32, i32) {
    %c0_i32 = arith.constant 0 : i32
    %c0_i32_0 = arith.constant 0 : i32
    %c0_i32_1 = arith.constant 0 : i32
    return %c0_i32, %c0_i32_0 : i32, i32
  }
  func.func @transform_3(%arg0: i32) -> (i32, i32, i32) {
    %c0_i32 = arith.constant 0 : i32
    %c0_i32_0 = arith.constant 0 : i32
    %c0_i32_1 = arith.constant 0 : i32
    %c0_i32_2 = arith.constant 0 : i32
    return %c0_i32, %c0_i32_0, %c0_i32_1 : i32, i32, i32
  }
  func.func @transform_4(%arg0: i32) -> (i32, i32, i32) {
    %c0_i32 = arith.constant 0 : i32
    %c0_i32_0 = arith.constant 0 : i32
    %c0_i32_1 = arith.constant 0 : i32
    %c0_i32_2 = arith.constant 0 : i32
    return %c0_i32, %c0_i32_0, %c0_i32_1 : i32, i32, i32
  }
  func.func @transform_5(%arg0: i32) -> (i32, i32) {
    %c0_i32 = arith.constant 0 : i32
    %c0_i32_0 = arith.constant 0 : i32
    %c0_i32_1 = arith.constant 0 : i32
    return %c0_i32, %c0_i32_0 : i32, i32
  }
  func.func @transform_6(%arg0: i32) -> (i32, i32) {
    %c0_i32 = arith.constant 0 : i32
    %c0_i32_0 = arith.constant 0 : i32
    %c0_i32_1 = arith.constant 0 : i32
    return %c0_i32, %c0_i32_0 : i32, i32
  }
  func.func @transform_7(%arg0: i32) -> (i32, i32) {
    %c0_i32 = arith.constant 0 : i32
    %c0_i32_0 = arith.constant 0 : i32
    return %arg0, %c0_i32 : i32, i32
  }
}

module attributes {stable_mosaic.version = 11 : i64} {
  func.func @_mutan_kernel(%arg0: i32, %arg1: memref<128x128xbf16, #tpu.memory_space<vmem>>, %arg2: memref<128x256xbf16, #tpu.memory_space<vmem>>, %arg3: memref<1x256xf32, #tpu.memory_space<vmem>>, %arg4: memref<4x256x256xbf16, #tpu.memory_space<vmem>>, %arg5: memref<4x1x256xf32, #tpu.memory_space<vmem>>, %arg6: memref<128x128xbf16, #tpu.memory_space<vmem>>, %arg7: memref<1x128xf32, #tpu.memory_space<vmem>>, %arg8: memref<128x128xbf16, #tpu.memory_space<vmem>>) attributes {dimension_semantics = [#tpu.dimension_semantics<parallel>], iteration_bounds = array<i64: 2>, scalar_prefetch = 0 : i64, scratch_operands = 0 : i64, tpu.core_type = #tpu.core_type<tc>, window_params = [{transform_indices = @transform_0, window_bounds = array<i64: 128, 128>}, {pipeline_mode = #tpu.pipeline_mode<synchronous>, transform_indices = @transform_1, window_bounds = array<i64: 128, 256>}, {pipeline_mode = #tpu.pipeline_mode<synchronous>, transform_indices = @transform_2, window_bounds = array<i64: 1, 256>}, {pipeline_mode = #tpu.pipeline_mode<synchronous>, transform_indices = @transform_3, window_bounds = array<i64: 4, 256, 256>}, {pipeline_mode = #tpu.pipeline_mode<synchronous>, transform_indices = @transform_4, window_bounds = array<i64: 4, 1, 256>}, {pipeline_mode = #tpu.pipeline_mode<synchronous>, transform_indices = @transform_5, window_bounds = array<i64: 128, 128>}, {pipeline_mode = #tpu.pipeline_mode<synchronous>, transform_indices = @transform_6, window_bounds = array<i64: 1, 128>}, {transform_indices = @transform_7, window_bounds = array<i64: 128, 128>}]} {
    %c0 = arith.constant 0 : index
    %c0_0 = arith.constant 0 : index
    %0 = vector.load %arg1[%c0, %c0_0] : memref<128x128xbf16, #tpu.memory_space<vmem>>, vector<128x128xbf16>
    %c0_1 = arith.constant 0 : index
    %c0_2 = arith.constant 0 : index
    %1 = vector.load %arg2[%c0_1, %c0_2] : memref<128x256xbf16, #tpu.memory_space<vmem>>, vector<128x256xbf16>
    %cst = arith.constant dense<0.000000e+00> : vector<128x256xf32>
    %2 = tpu.matmul %0, %1, %cst {dimension_numbers = #tpu.dot_dimension_numbers<[1], [0], [0], [1], [0, 0, 1, 1], [], []>} : vector<128x128xbf16>, vector<128x256xbf16>, vector<128x256xf32> -> vector<128x256xf32>
    %c0_3 = arith.constant 0 : index
    %c0_4 = arith.constant 0 : index
    %3 = vector.load %arg3[%c0_3, %c0_4] : memref<1x256xf32, #tpu.memory_space<vmem>>, vector<1x256xf32>
    %4 = vector.broadcast %3 : vector<1x256xf32> to vector<128x256xf32>
    %5 = arith.addf %2, %4 : vector<128x256xf32>
    %6 = arith.truncf %5 : vector<128x256xf32> to vector<128x256xbf16>
    %cst_5 = arith.constant 0.000000e+00 : f32
    %7 = vector.broadcast %cst_5 : f32 to vector<128x128xf32>
    %c0_6 = arith.constant 0 : index
    %c0_7 = arith.constant 0 : index
    %c0_8 = arith.constant 0 : index
    %8 = vector.load %arg4[%c0_6, %c0_7, %c0_8] : memref<4x256x256xbf16, #tpu.memory_space<vmem>>, vector<1x256x256xbf16>
    %9 = vector.shape_cast %8 : vector<1x256x256xbf16> to vector<256x256xbf16>
    %cst_9 = arith.constant dense<0.000000e+00> : vector<128x256xf32>
    %10 = tpu.matmul %6, %9, %cst_9 {dimension_numbers = #tpu.dot_dimension_numbers<[1], [0], [0], [1], [0, 0, 1, 1], [], []>} : vector<128x256xbf16>, vector<256x256xbf16>, vector<128x256xf32> -> vector<128x256xf32>
    %c0_10 = arith.constant 0 : index
    %c0_11 = arith.constant 0 : index
    %c0_12 = arith.constant 0 : index
    %11 = vector.load %arg5[%c0_10, %c0_11, %c0_12] : memref<4x1x256xf32, #tpu.memory_space<vmem>>, vector<1x1x256xf32>
    %12 = vector.shape_cast %11 : vector<1x1x256xf32> to vector<1x256xf32>
    %13 = vector.broadcast %12 : vector<1x256xf32> to vector<128x256xf32>
    %14 = arith.addf %10, %13 : vector<128x256xf32>
    %15 = vector.extract_strided_slice %14 {offsets = [0, 0], sizes = [128, 128], strides = [1, 1]} : vector<128x256xf32> to vector<128x128xf32>
    %16 = vector.extract_strided_slice %14 {offsets = [0, 128], sizes = [128, 128], strides = [1, 1]} : vector<128x256xf32> to vector<128x128xf32>
    %17 = arith.mulf %15, %16 : vector<128x128xf32>
    %18 = arith.addf %7, %17 : vector<128x128xf32>
    %c1 = arith.constant 1 : index
    %c0_13 = arith.constant 0 : index
    %c0_14 = arith.constant 0 : index
    %19 = vector.load %arg4[%c1, %c0_13, %c0_14] : memref<4x256x256xbf16, #tpu.memory_space<vmem>>, vector<1x256x256xbf16>
    %20 = vector.shape_cast %19 : vector<1x256x256xbf16> to vector<256x256xbf16>
    %cst_15 = arith.constant dense<0.000000e+00> : vector<128x256xf32>
    %21 = tpu.matmul %6, %20, %cst_15 {dimension_numbers = #tpu.dot_dimension_numbers<[1], [0], [0], [1], [0, 0, 1, 1], [], []>} : vector<128x256xbf16>, vector<256x256xbf16>, vector<128x256xf32> -> vector<128x256xf32>
    %c1_16 = arith.constant 1 : index
    %c0_17 = arith.constant 0 : index
    %c0_18 = arith.constant 0 : index
    %22 = vector.load %arg5[%c1_16, %c0_17, %c0_18] : memref<4x1x256xf32, #tpu.memory_space<vmem>>, vector<1x1x256xf32>
    %23 = vector.shape_cast %22 : vector<1x1x256xf32> to vector<1x256xf32>
    %24 = vector.broadcast %23 : vector<1x256xf32> to vector<128x256xf32>
    %25 = arith.addf %21, %24 : vector<128x256xf32>
    %26 = vector.extract_strided_slice %25 {offsets = [0, 0], sizes = [128, 128], strides = [1, 1]} : vector<128x256xf32> to vector<128x128xf32>
    %27 = vector.extract_strided_slice %25 {offsets = [0, 128], sizes = [128, 128], strides = [1, 1]} : vector<128x256xf32> to vector<128x128xf32>
    %28 = arith.mulf %26, %27 : vector<128x128xf32>
    %29 = arith.addf %18, %28 : vector<128x128xf32>
    %c2 = arith.constant 2 : index
    %c0_19 = arith.constant 0 : index
    %c0_20 = arith.constant 0 : index
    %30 = vector.load %arg4[%c2, %c0_19, %c0_20] : memref<4x256x256xbf16, #tpu.memory_space<vmem>>, vector<1x256x256xbf16>
    %31 = vector.shape_cast %30 : vector<1x256x256xbf16> to vector<256x256xbf16>
    %cst_21 = arith.constant dense<0.000000e+00> : vector<128x256xf32>
    %32 = tpu.matmul %6, %31, %cst_21 {dimension_numbers = #tpu.dot_dimension_numbers<[1], [0], [0], [1], [0, 0, 1, 1], [], []>} : vector<128x256xbf16>, vector<256x256xbf16>, vector<128x256xf32> -> vector<128x256xf32>
    %c2_22 = arith.constant 2 : index
    %c0_23 = arith.constant 0 : index
    %c0_24 = arith.constant 0 : index
    %33 = vector.load %arg5[%c2_22, %c0_23, %c0_24] : memref<4x1x256xf32, #tpu.memory_space<vmem>>, vector<1x1x256xf32>
    %34 = vector.shape_cast %33 : vector<1x1x256xf32> to vector<1x256xf32>
    %35 = vector.broadcast %34 : vector<1x256xf32> to vector<128x256xf32>
    %36 = arith.addf %32, %35 : vector<128x256xf32>
    %37 = vector.extract_strided_slice %36 {offsets = [0, 0], sizes = [128, 128], strides = [1, 1]} : vector<128x256xf32> to vector<128x128xf32>
    %38 = vector.extract_strided_slice %36 {offsets = [0, 128], sizes = [128, 128], strides = [1, 1]} : vector<128x256xf32> to vector<128x128xf32>
    %39 = arith.mulf %37, %38 : vector<128x128xf32>
    %40 = arith.addf %29, %39 : vector<128x128xf32>
    %c3 = arith.constant 3 : index
    %c0_25 = arith.constant 0 : index
    %c0_26 = arith.constant 0 : index
    %41 = vector.load %arg4[%c3, %c0_25, %c0_26] : memref<4x256x256xbf16, #tpu.memory_space<vmem>>, vector<1x256x256xbf16>
    %42 = vector.shape_cast %41 : vector<1x256x256xbf16> to vector<256x256xbf16>
    %cst_27 = arith.constant dense<0.000000e+00> : vector<128x256xf32>
    %43 = tpu.matmul %6, %42, %cst_27 {dimension_numbers = #tpu.dot_dimension_numbers<[1], [0], [0], [1], [0, 0, 1, 1], [], []>} : vector<128x256xbf16>, vector<256x256xbf16>, vector<128x256xf32> -> vector<128x256xf32>
    %c3_28 = arith.constant 3 : index
    %c0_29 = arith.constant 0 : index
    %c0_30 = arith.constant 0 : index
    %44 = vector.load %arg5[%c3_28, %c0_29, %c0_30] : memref<4x1x256xf32, #tpu.memory_space<vmem>>, vector<1x1x256xf32>
    %45 = vector.shape_cast %44 : vector<1x1x256xf32> to vector<1x256xf32>
    %46 = vector.broadcast %45 : vector<1x256xf32> to vector<128x256xf32>
    %47 = arith.addf %43, %46 : vector<128x256xf32>
    %48 = vector.extract_strided_slice %47 {offsets = [0, 0], sizes = [128, 128], strides = [1, 1]} : vector<128x256xf32> to vector<128x128xf32>
    %49 = vector.extract_strided_slice %47 {offsets = [0, 128], sizes = [128, 128], strides = [1, 1]} : vector<128x256xf32> to vector<128x128xf32>
    %50 = arith.mulf %48, %49 : vector<128x128xf32>
    %51 = arith.addf %40, %50 : vector<128x128xf32>
    %52 = arith.truncf %51 : vector<128x128xf32> to vector<128x128xbf16>
    %c0_31 = arith.constant 0 : index
    %c0_32 = arith.constant 0 : index
    %53 = vector.load %arg6[%c0_31, %c0_32] : memref<128x128xbf16, #tpu.memory_space<vmem>>, vector<128x128xbf16>
    %cst_33 = arith.constant dense<0.000000e+00> : vector<128x128xf32>
    %54 = tpu.matmul %52, %53, %cst_33 {dimension_numbers = #tpu.dot_dimension_numbers<[1], [0], [0], [1], [0, 0, 1, 1], [], []>} : vector<128x128xbf16>, vector<128x128xbf16>, vector<128x128xf32> -> vector<128x128xf32>
    %c0_34 = arith.constant 0 : index
    %c0_35 = arith.constant 0 : index
    %55 = vector.load %arg7[%c0_34, %c0_35] : memref<1x128xf32, #tpu.memory_space<vmem>>, vector<1x128xf32>
    %56 = vector.broadcast %55 : vector<1x128xf32> to vector<128x128xf32>
    %57 = arith.addf %54, %56 : vector<128x128xf32>
    %58 = arith.truncf %57 : vector<128x128xf32> to vector<128x128xbf16>
    %c0_36 = arith.constant 0 : index
    %c0_37 = arith.constant 0 : index
    %59 = vector.load %arg8[%c0_36, %c0_37] : memref<128x128xbf16, #tpu.memory_space<vmem>>, vector<128x128xbf16>
    tpu.vector_store %arg8[%c0_36, %c0_37], %58 {strides = array<i32>} : memref<128x128xbf16, #tpu.memory_space<vmem>>, vector<128x128xbf16>,
    return
  }
  func.func @transform_0(%arg0: i32) -> (i32, i32) {
    %c0_i32 = arith.constant 0 : i32
    %c0_i32_0 = arith.constant 0 : i32
    return %arg0, %c0_i32 : i32, i32
  }
  func.func @transform_1(%arg0: i32) -> (i32, i32) {
    %c0_i32 = arith.constant 0 : i32
    %c0_i32_0 = arith.constant 0 : i32
    %c0_i32_1 = arith.constant 0 : i32
    return %c0_i32, %c0_i32_0 : i32, i32
  }
  func.func @transform_2(%arg0: i32) -> (i32, i32) {
    %c0_i32 = arith.constant 0 : i32
    %c0_i32_0 = arith.constant 0 : i32
    %c0_i32_1 = arith.constant 0 : i32
    return %c0_i32, %c0_i32_0 : i32, i32
  }
  func.func @transform_3(%arg0: i32) -> (i32, i32, i32) {
    %c0_i32 = arith.constant 0 : i32
    %c0_i32_0 = arith.constant 0 : i32
    %c0_i32_1 = arith.constant 0 : i32
    %c0_i32_2 = arith.constant 0 : i32
    return %c0_i32, %c0_i32_0, %c0_i32_1 : i32, i32, i32
  }
  func.func @transform_4(%arg0: i32) -> (i32, i32, i32) {
    %c0_i32 = arith.constant 0 : i32
    %c0_i32_0 = arith.constant 0 : i32
    %c0_i32_1 = arith.constant 0 : i32
    %c0_i32_2 = arith.constant 0 : i32
    return %c0_i32, %c0_i32_0, %c0_i32_1 : i32, i32, i32
  }
  func.func @transform_5(%arg0: i32) -> (i32, i32) {
    %c0_i32 = arith.constant 0 : i32
    %c0_i32_0 = arith.constant 0 : i32
    %c0_i32_1 = arith.constant 0 : i32
    return %c0_i32, %c0_i32_0 : i32, i32
  }
  func.func @transform_6(%arg0: i32) -> (i32, i32) {
    %c0_i32 = arith.constant 0 : i32
    %c0_i32_0 = arith.constant 0 : i32
    %c0_i32_1 = arith.constant 0 : i32
    return %c0_i32, %c0_i32_0 : i32, i32
  }
  func.func @transform_7(%arg0: i32) -> (i32, i32) {
    %c0_i32 = arith.constant 0 : i32
    %c0_i32_0 = arith.constant 0 : i32
    return %arg0, %c0_i32 : i32, i32
  }
}

</mosaic_0001>

<llo_original>
// kernel: mutan_forward.1
$region0: #{mutan_forward.1}
  #allocation0 [shape = 'u32[]', space=smem, size = 0x4, offset = 0x4, fixed_abs, tag = 'smem constant byte address 0x4 - core index']
  #allocation1 [shape = 'u32[144,128]{1,0:T(1,128)}', space=vmem, size = 0x12000, scoped, tag = 'internal scratch']
  %s0 = inlined_call_operand.vmem [shape: bf16[256,128], index: 0, kind: input, shape index: {}]
  %s1 = inlined_call_operand.vmem [shape: bf16[128,256], index: 1, kind: input, shape index: {}]
  %s2 = inlined_call_operand.vmem [shape: f32[1,256], index: 2, kind: input, shape index: {}]
  %s3 = inlined_call_operand.vmem [shape: bf16[4,256,256], index: 3, kind: input, shape index: {}]
  %s4 = inlined_call_operand.vmem [shape: f32[4,1,256], index: 4, kind: input, shape index: {}]
  %s5 = inlined_call_operand.vmem [shape: bf16[128,128], index: 5, kind: input, shape index: {}]
  %s6 = inlined_call_operand.vmem [shape: f32[1,128], index: 6, kind: input, shape index: {}]
  %s7 = inlined_call_operand.vmem [shape: bf16[256,128], index: 7, kind: output, shape index: {}]
  %s8 = sld [smem:[#allocation0]]
  $region61: #{mutan_forward.1} parent=0
    _
  %s10 = ssub.s32 1, %s8
  %s11 = scalar_select 0, %s10, %s8
  loop: start=0, step=1, limit=4
  $region2: #{mutan_forward.1} parent=0 // loop_pre_header
    _
  $region3: #{mutan_forward.1} parent=0 // loop_header
    %s13 = sphi 0, %s17
    %p14 = scmp.ge.s32.totalorder %s13, 4
    %s23 = sphi 0, %s25
    %s26 = sphi 0, %s23
    %s27 = sphi 0, %s26
    %s43 = sphi 0, %s27
    %s47 = sphi 0, %s47
    %s49 = sphi 0, %s47
    %s50 = sphi 0, %s49
    %s64 = sphi 0, %s50
    %s68 = sphi 0, %s68
    %s70 = sphi 0, %s68
    %s71 = sphi 0, %s70
    %s85 = sphi 0, %s71
    %s89 = sphi 0, %s89
    %s91 = sphi 0, %s89
    %s92 = sphi 0, %s91
    %s106 = sphi 0, %s92
    %s110 = sphi 0, %s110
    %s112 = sphi 0, %s110
    %s113 = sphi 0, %s112
    %s127 = sphi 0, %s113
    %s131 = sphi 0, %s131
    %s133 = sphi 0, %s131
    %s134 = sphi 0, %s133
    %s148 = sphi 0, %s134
    %s152 = sphi 0, %s152
    %s154 = sphi 0, %s152
    %s155 = sphi 0, %s154
    %s169 = sphi 0, %s155
    %s175 = sphi 0, %s177
    %s178 = sphi 0, %s175
    %s179 = sphi 0, %s178
    %s195 = sphi 0, %s179
  $region4: #{mutan_forward.1} parent=0 // loop_header_branch
    %16 = sbr.rel (%p14) target = $region8
  $region5: #{mutan_forward.1} parent=0 // loop_body
    %s18 = ssub.s32 %s13, 1
    %s19 = ssub.s32 %s13, 2
    %s20 = sadd.s32 %s13, 1
    %s21 = ssub.s32 %s13, %s20
    %p22 = scmp.eq.s32.totalorder %s21, 0
    %s24 = sadd.s32 %s23, 1
    %s25 = scalar_select %p22, %s23, %s24
    %p28 = pneg %p22
    %p29 = scmp.eq.s32.totalorder %s13, 1
    %p30 = por %p28, %p29
    %p31 = scmp.ne.s32.totalorder %s23, %s26
    %p32 = scmp.eq.s32.totalorder %s13, 0
    %p33 = por %p31, %p32
    %p34 = scmp.ne.s32.totalorder %s23, %s26
    %p35 = scmp.eq.s32.totalorder %s18, 1
    %p36 = por %p34, %p35
    %p37 = scmp.ne.s32.totalorder %s26, %s27
    %p38 = scmp.eq.s32.totalorder %s18, 0
    %p39 = por %p37, %p38
    %p40 = scmp.ne.s32.totalorder %s26, %s27
    %p41 = scmp.eq.s32.totalorder %s19, 1
    %p42 = por %p40, %p41
    %p44 = scmp.ne.s32.totalorder %s27, %s43
    %p45 = scmp.eq.s32.totalorder %s19, 0
    %p46 = por %p44, %p45
    %s48 = sadd.s32 %s47, 1
    %p51 = scmp.eq.s32.totalorder %s13, 1
    %p52 = scmp.ne.s32.totalorder %s47, %s49
    %p53 = scmp.eq.s32.totalorder %s13, 0
    %p54 = por %p52, %p53
    %p55 = scmp.ne.s32.totalorder %s47, %s49
    %p56 = scmp.eq.s32.totalorder %s18, 1
    %p57 = por %p55, %p56
    %p58 = scmp.ne.s32.totalorder %s49, %s50
    %p59 = scmp.eq.s32.totalorder %s18, 0
    %p60 = por %p58, %p59
    %p61 = scmp.ne.s32.totalorder %s49, %s50
    %p62 = scmp.eq.s32.totalorder %s19, 1
    %p63 = por %p61, %p62
    %p65 = scmp.ne.s32.totalorder %s50, %s64
    %p66 = scmp.eq.s32.totalorder %s19, 0
    %p67 = por %p65, %p66
    %s69 = sadd.s32 %s68, 1
    %p72 = scmp.eq.s32.totalorder %s13, 1
    %p73 = scmp.ne.s32.totalorder %s68, %s70
    %p74 = scmp.eq.s32.totalorder %s13, 0
    %p75 = por %p73, %p74
    %p76 = scmp.ne.s32.totalorder %s68, %s70
    %p77 = scmp.eq.s32.totalorder %s18, 1
    %p78 = por %p76, %p77
    %p79 = scmp.ne.s32.totalorder %s70, %s71
    %p80 = scmp.eq.s32.totalorder %s18, 0
    %p81 = por %p79, %p80
    %p82 = scmp.ne.s32.totalorder %s70, %s71
    %p83 = scmp.eq.s32.totalorder %s19, 1
    %p84 = por %p82, %p83
    %p86 = scmp.ne.s32.totalorder %s71, %s85
    %p87 = scmp.eq.s32.totalorder %s19, 0
    %p88 = por %p86, %p87
    %s90 = sadd.s32 %s89, 1
    %p93 = scmp.eq.s32.totalorder %s13, 1
    %p94 = scmp.ne.s32.totalorder %s89, %s91
    %p95 = scmp.eq.s32.totalorder %s13, 0
    %p96 = por %p94, %p95
    %p97 = scmp.ne.s32.totalorder %s89, %s91
    %p98 = scmp.eq.s32.totalorder %s18, 1
    %p99 = por %p97, %p98
    %p100 = scmp.ne.s32.totalorder %s91, %s92
    %p101 = scmp.eq.s32.totalorder %s18, 0
    %p102 = por %p100, %p101
    %p103 = scmp.ne.s32.totalorder %s91, %s92
    %p104 = scmp.eq.s32.totalorder %s19, 1
    %p105 = por %p103, %p104
    %p107 = scmp.ne.s32.totalorder %s92, %s106
    %p108 = scmp.eq.s32.totalorder %s19, 0
    %p109 = por %p107, %p108
    %s111 = sadd.s32 %s110, 1
    %p114 = scmp.eq.s32.totalorder %s13, 1
    %p115 = scmp.ne.s32.totalorder %s110, %s112
    %p116 = scmp.eq.s32.totalorder %s13, 0
    %p117 = por %p115, %p116
    %p118 = scmp.ne.s32.totalorder %s110, %s112
    %p119 = scmp.eq.s32.totalorder %s18, 1
    %p120 = por %p118, %p119
    %p121 = scmp.ne.s32.totalorder %s112, %s113
    %p122 = scmp.eq.s32.totalorder %s18, 0
    %p123 = por %p121, %p122
    %p124 = scmp.ne.s32.totalorder %s112, %s113
    %p125 = scmp.eq.s32.totalorder %s19, 1
    %p126 = por %p124, %p125
    %p128 = scmp.ne.s32.totalorder %s113, %s127
    %p129 = scmp.eq.s32.totalorder %s19, 0
    %p130 = por %p128, %p129
    %s132 = sadd.s32 %s131, 1
    %p135 = scmp.eq.s32.totalorder %s13, 1
    %p136 = scmp.ne.s32.totalorder %s131, %s133
    %p137 = scmp.eq.s32.totalorder %s13, 0
    %p138 = por %p136, %p137
    %p139 = scmp.ne.s32.totalorder %s131, %s133
    %p140 = scmp.eq.s32.totalorder %s18, 1
    %p141 = por %p139, %p140
    %p142 = scmp.ne.s32.totalorder %s133, %s134
    %p143 = scmp.eq.s32.totalorder %s18, 0
    %p144 = por %p142, %p143
    %p145 = scmp.ne.s32.totalorder %s133, %s134
    %p146 = scmp.eq.s32.totalorder %s19, 1
    %p147 = por %p145, %p146
    %p149 = scmp.ne.s32.totalorder %s134, %s148
    %p150 = scmp.eq.s32.totalorder %s19, 0
    %p151 = por %p149, %p150
    %s153 = sadd.s32 %s152, 1
    %p156 = scmp.eq.s32.totalorder %s13, 1
    %p157 = scmp.ne.s32.totalorder %s152, %s154
    %p158 = scmp.eq.s32.totalorder %s13, 0
    %p159 = por %p157, %p158
    %p160 = scmp.ne.s32.totalorder %s152, %s154
    %p161 = scmp.eq.s32.totalorder %s18, 1
    %p162 = por %p160, %p161
    %p163 = scmp.ne.s32.totalorder %s154, %s155
    %p164 = scmp.eq.s32.totalorder %s18, 0
    %p165 = por %p163, %p164
    %p166 = scmp.ne.s32.totalorder %s154, %s155
    %p167 = scmp.eq.s32.totalorder %s19, 1
    %p168 = por %p166, %p167
    %p170 = scmp.ne.s32.totalorder %s155, %s169
    %p171 = scmp.eq.s32.totalorder %s19, 0
    %p172 = por %p170, %p171
    %s173 = ssub.s32 %s13, %s20
    %p174 = scmp.eq.s32.totalorder %s173, 0
    %s176 = sadd.s32 %s175, 1
    %s177 = scalar_select %p174, %s175, %s176
    %p180 = pneg %p174
    %p181 = scmp.eq.s32.totalorder %s13, 1
    %p182 = por %p180, %p181
    %p183 = scmp.ne.s32.totalorder %s175, %s178
    %p184 = scmp.eq.s32.totalorder %s13, 0
    %p185 = por %p183, %p184
    %p186 = scmp.ne.s32.totalorder %s175, %s178
    %p187 = scmp.eq.s32.totalorder %s18, 1
    %p188 = por %p186, %p187
    %p189 = scmp.ne.s32.totalorder %s178, %s179
    %p190 = scmp.eq.s32.totalorder %s18, 0
    %p191 = por %p189, %p190
    %p192 = scmp.ne.s32.totalorder %s178, %s179
    %p193 = scmp.eq.s32.totalorder %s19, 1
    %p194 = por %p192, %p193
    %p196 = scmp.ne.s32.totalorder %s179, %s195
    %p197 = scmp.eq.s32.totalorder %s19, 0
    %p198 = por %p196, %p197
    %p199 = scmp.le.s32.totalorder 1, %s13
    %p200 = scmp.lt.s32.totalorder %s13, 3
    %p201 = pnand %p199, %p200
    %p202 = pneg %p201
    // Predicated region
    $region9: #{mutan_forward.1} parent=5 // pred_check
      _
    $region10: #{mutan_forward.1} parent=5 // pred_check_branch
      %204 = sbr.rel (%p201) target = $region12
    $region11: #{mutan_forward.1} parent=5 // pred_region
      %s205 = ssub.s32 %s13, 1
      // Predicated region
      $region13: #{mutan_forward.1} parent=11 // pred_check
        %p206 = pneg %p60
      $region14: #{mutan_forward.1} parent=11 // pred_check_branch
        %208 = sbr.rel (%p206) target = $region16
      $region15: #{mutan_forward.1} parent=11 // pred_region
        _
      $region16: #{mutan_forward.1} parent=11 // pred_fallthru
        _
      // Predicated region
      $region17: #{mutan_forward.1} parent=11 // pred_check
        %p209 = pneg %p81
      $region18: #{mutan_forward.1} parent=11 // pred_check_branch
        %211 = sbr.rel (%p209) target = $region20
      $region19: #{mutan_forward.1} parent=11 // pred_region
        _
      $region20: #{mutan_forward.1} parent=11 // pred_fallthru
        _
      // Predicated region
      $region21: #{mutan_forward.1} parent=11 // pred_check
        %p212 = pneg %p102
      $region22: #{mutan_forward.1} parent=11 // pred_check_branch
        %214 = sbr.rel (%p212) target = $region24
      $region23: #{mutan_forward.1} parent=11 // pred_region
        _
      $region24: #{mutan_forward.1} parent=11 // pred_fallthru
        _
      // Predicated region
      $region25: #{mutan_forward.1} parent=11 // pred_check
        %p215 = pneg %p123
      $region26: #{mutan_forward.1} parent=11 // pred_check_branch
        %217 = sbr.rel (%p215) target = $region28
      $region27: #{mutan_forward.1} parent=11 // pred_region
        _
      $region28: #{mutan_forward.1} parent=11 // pred_fallthru
        _
      // Predicated region
      $region29: #{mutan_forward.1} parent=11 // pred_check
        %p218 = pneg %p144
      $region30: #{mutan_forward.1} parent=11 // pred_check_branch
        %220 = sbr.rel (%p218) target = $region32
      $region31: #{mutan_forward.1} parent=11 // pred_region
        _
      $region32: #{mutan_forward.1} parent=11 // pred_fallthru
        _
      // Predicated region
      $region33: #{mutan_forward.1} parent=11 // pred_check
        %p221 = pneg %p165
      $region34: #{mutan_forward.1} parent=11 // pred_check_branch
        %223 = sbr.rel (%p221) target = $region36
      $region35: #{mutan_forward.1} parent=11 // pred_region
        _
      $region36: #{mutan_forward.1} parent=11 // pred_fallthru
        _
    $region12: #{mutan_forward.1} parent=5 // pred_fallthru
      _
    %p224 = scmp.lt.s32.totalorder %s13, 2
    // Predicated region
    $region37: #{mutan_forward.1} parent=5 // pred_check
      %p225 = pneg %p224
    $region38: #{mutan_forward.1} parent=5 // pred_check_branch
      %227 = sbr.rel (%p225) target = $region40
    $region39: #{mutan_forward.1} parent=5 // pred_region
      // Predicated region
      $region41: #{mutan_forward.1} parent=39 // pred_check
        %p228 = pneg %p33
      $region42: #{mutan_forward.1} parent=39 // pred_check_branch
        %230 = sbr.rel (%p228) target = $region44
      $region43: #{mutan_forward.1} parent=39 // pred_region
        %s231 = smul.u32 16, %s13
        %p232 = scmp.lt.s32.totalorder %s231, 31
        %s233 = scalar_select %p232, %s231, 31
        %s234 = smul.addr %s233, 4
        %s235 = scalar_lea.vmem %s0, %s234
        %s236 = smul.u32 16, %s13
      $region44: #{mutan_forward.1} parent=39 // pred_fallthru
        _
    $region40: #{mutan_forward.1} parent=5 // pred_fallthru
      _
    %p237 = scmp.le.s32.totalorder 1, %s13
    %p238 = scmp.lt.s32.totalorder %s13, 3
    %p239 = pnand %p237, %p238
    %p240 = pneg %p239
    // Predicated region
    $region45: #{mutan_forward.1} parent=5 // pred_check
      _
    $region46: #{mutan_forward.1} parent=5 // pred_check_branch
      %242 = sbr.rel (%p239) target = $region48
    $region47: #{mutan_forward.1} parent=5 // pred_region
      %s243 = ssub.s32 %s13, 1
      %s244 = smul.u32 16, %s18
      %p245 = scmp.lt.s32.totalorder %s244, 31
      %s246 = scalar_select %p245, %s244, 31
      %s247 = smul.addr %s246, 4
      %s248 = scalar_lea.vmem %s0, %s247
      %p249 = pneg %p39
      %p250 = pneg %p36
      %p251 = pneg %p60
      %p252 = pneg %p57
      %p253 = pneg %p81
      %p254 = pneg %p78
      %p255 = pneg %p102
      %p256 = pneg %p99
      %p257 = pneg %p123
      %p258 = pneg %p120
      %p259 = pneg %p144
      %p260 = pneg %p141
      %p261 = pneg %p165
      %p262 = pneg %p162
      %p263 = pneg %p191
      %p264 = pneg %p188
      %s265 = smul.u32 16, %s18
      %p266 = scmp.lt.s32.totalorder %s265, 31
      %s267 = scalar_select %p266, %s265, 31
      %s268 = smul.addr %s267, 4
      %s269 = scalar_lea.vmem %s7, %s268
      %s270 = smul.u32 16, %s18
      %p271 = scmp.lt.s32.totalorder %s270, 31
      %s272 = scalar_select %p271, %s270, 31
      %s273 = smul.addr %s272, 4
      %s274 = scalar_lea.vmem %s0, %s273
      %s275 = smul.u32 16, %s18
      %s276 = smul.u32 16, %s18
      %p277 = scmp.lt.s32.totalorder %s276, 31
      %s278 = scalar_select %p277, %s276, 31
      %s279 = smul.addr %s278, 4
      %s280 = scalar_lea.vmem %s7, %s279
      %s281 = smul.u32 16, %s18
      %v283 = vld [vmem:[%s274] sm:$0xf]
      %v284 = vld [vmem:[%s274 + $0x4] sm:$0xf]
      %v285 = vld [vmem:[%s274 + $0x8] sm:$0xf]
      %v286 = vld [vmem:[%s274 + $0xc] sm:$0xf]
      %v287 = vld [vmem:[%s274 + $0x10] sm:$0xf]
      %v288 = vld [vmem:[%s274 + $0x14] sm:$0xf]
      %v289 = vld [vmem:[%s274 + $0x18] sm:$0xf]
      %v290 = vld [vmem:[%s274 + $0x1c] sm:$0xf]
      %v291 = vld [vmem:[%s274 + $0x20] sm:$0xf]
      %v292 = vld [vmem:[%s274 + $0x24] sm:$0xf]
      %v293 = vld [vmem:[%s274 + $0x28] sm:$0xf]
      %v294 = vld [vmem:[%s274 + $0x2c] sm:$0xf]
      %v295 = vld [vmem:[%s274 + $0x30] sm:$0xf]
      %v296 = vld [vmem:[%s274 + $0x34] sm:$0xf]
      %v297 = vld [vmem:[%s274 + $0x38] sm:$0xf]
      %v298 = vld [vmem:[%s274 + $0x3c] sm:$0xf]
      %v299 = vld [vmem:[%s1] sm:$0xff]
      %v300 = vld [vmem:[%s1 + $0x8] sm:$0xff]
      %v301 = vld [vmem:[%s1 + $0x10] sm:$0xff]
      %v302 = vld [vmem:[%s1 + $0x18] sm:$0xff]
      %v303 = vld [vmem:[%s1 + $0x20] sm:$0xff]
      %v304 = vld [vmem:[%s1 + $0x28] sm:$0xff]
      %v305 = vld [vmem:[%s1 + $0x30] sm:$0xff]
      %v306 = vld [vmem:[%s1 + $0x38] sm:$0xff]
      %v307 = vld [vmem:[%s1 + $0x40] sm:$0xff]
      %v308 = vld [vmem:[%s1 + $0x48] sm:$0xff]
      %v309 = vld [vmem:[%s1 + $0x50] sm:$0xff]
      %v310 = vld [vmem:[%s1 + $0x58] sm:$0xff]
      %v311 = vld [vmem:[%s1 + $0x60] sm:$0xff]
      %v312 = vld [vmem:[%s1 + $0x68] sm:$0xff]
      %v313 = vld [vmem:[%s1 + $0x70] sm:$0xff]
      %v314 = vld [vmem:[%s1 + $0x78] sm:$0xff]
      %v315 = vld [vmem:[%s2] sm:$0x3]
      %v317 = vlaneseq
      %v318 = vshrl.u32 %v317, 7
      %v319 = vsub.s32 0, %v318
      %v320 = vrot.slane %v315, %v319
      %v321 = vlaneseq
      %v322 = vshrl.u32 %v321, 7
      %v323 = vsub.s32 1, %v322
      %v324 = vrot.slane %v315, %v323
      %v343 = vunpack.c.l.b16 %v283
      %v344 = vunpack.c.l.b16 %v284
      %v345 = vunpack.c.l.b16 %v285
      %v346 = vunpack.c.l.b16 %v286
      %v347 = vunpack.c.l.b16 %v287
      %v348 = vunpack.c.l.b16 %v288
      %v349 = vunpack.c.l.b16 %v289
      %v350 = vunpack.c.l.b16 %v290
      %v351 = vunpack.c.l.b16 %v291
      %v352 = vunpack.c.l.b16 %v292
      %v353 = vunpack.c.l.b16 %v293
      %v354 = vunpack.c.l.b16 %v294
      %v355 = vunpack.c.l.b16 %v295
      %v356 = vunpack.c.l.b16 %v296
      %v357 = vunpack.c.l.b16 %v297
      %v358 = vunpack.c.l.b16 %v298
      %v359 = vpack.c.b16 %v344, %v343
      %v360 = vpack.c.b16 %v346, %v345
      %v361 = vpack.c.b16 %v348, %v347
      %v362 = vpack.c.b16 %v350, %v349
      %v363 = vpack.c.b16 %v352, %v351
      %v364 = vpack.c.b16 %v354, %v353
      %v365 = vpack.c.b16 %v356, %v355
      %v366 = vpack.c.b16 %v358, %v357
      %v391 = vunpack.c.l.b16 %v299
      %v392 = vunpack.c.h.b16 %v299
      %v393 = vunpack.c.l.b16 %v300
      %v394 = vunpack.c.h.b16 %v300
      %v395 = vunpack.c.l.b16 %v301
      %v396 = vunpack.c.h.b16 %v301
      %v397 = vunpack.c.l.b16 %v302
      %v398 = vunpack.c.h.b16 %v302
      %v399 = vunpack.c.l.b16 %v303
      %v400 = vunpack.c.h.b16 %v303
      %v401 = vunpack.c.l.b16 %v304
      %v402 = vunpack.c.h.b16 %v304
      %v403 = vunpack.c.l.b16 %v305
      %v404 = vunpack.c.h.b16 %v305
      %v405 = vunpack.c.l.b16 %v306
      %v406 = vunpack.c.h.b16 %v306
      %v407 = vunpack.c.l.b16 %v307
      %v408 = vunpack.c.h.b16 %v307
      %v409 = vunpack.c.l.b16 %v308
      %v410 = vunpack.c.h.b16 %v308
      %v411 = vunpack.c.l.b16 %v309
      %v412 = vunpack.c.h.b16 %v309
      %v413 = vunpack.c.l.b16 %v310
      %v414 = vunpack.c.h.b16 %v310
      %v415 = vunpack.c.l.b16 %v311
      %v416 = vunpack.c.h.b16 %v311
      %v417 = vunpack.c.l.b16 %v312
      %v418 = vunpack.c.h.b16 %v312
      %v419 = vunpack.c.l.b16 %v313
      %v420 = vunpack.c.h.b16 %v313
      %v421 = vunpack.c.l.b16 %v314
      %v422 = vunpack.c.h.b16 %v314
      %v423 = vpack.c.b16 %v393, %v391
      %v424 = vpack.c.b16 %v394, %v392
      %v425 = vpack.c.b16 %v397, %v395
      %v426 = vpack.c.b16 %v398, %v396
      %v427 = vpack.c.b16 %v401, %v399
      %v428 = vpack.c.b16 %v402, %v400
      %v429 = vpack.c.b16 %v405, %v403
      %v430 = vpack.c.b16 %v406, %v404
      %v431 = vpack.c.b16 %v409, %v407
      %v432 = vpack.c.b16 %v410, %v408
      %v433 = vpack.c.b16 %v413, %v411
      %v434 = vpack.c.b16 %v414, %v412
      %v435 = vpack.c.b16 %v417, %v415
      %v436 = vpack.c.b16 %v418, %v416
      %v437 = vpack.c.b16 %v421, %v419
      %v438 = vpack.c.b16 %v422, %v420
      %455 = vmatprep.subr.bf16.mxu0 %v438
      %456 = vmatpush1.bf16.msra.mxu0 %v437
      %457 = vmatprep.subr.bf16.mxu0 %v436
      %458 = vmatpush1.bf16.msra.mxu0 %v435
      %459 = vmatprep.subr.bf16.mxu0 %v434
      %460 = vmatpush1.bf16.msra.mxu0 %v433
      %461 = vmatprep.subr.bf16.mxu0 %v432
      %462 = vmatpush1.bf16.msra.mxu0 %v431
      %463 = vmatprep.subr.bf16.mxu0 %v430
      %464 = vmatpush1.bf16.msra.mxu0 %v429
      %465 = vmatprep.subr.bf16.mxu0 %v428
      %466 = vmatpush1.bf16.msra.mxu0 %v427
      %467 = vmatprep.subr.bf16.mxu0 %v426
      %468 = vmatpush1.bf16.msra.mxu0 %v425
      %469 = vmatprep.subr.bf16.mxu0 %v424
      %470 = vmatpush1.bf16.msra.mxu0 %v423
      %471 = vmatprep.subr.bf16.mxu0 0
      %472 = vmatpush2.bf16.msra.mxu0 0
      %473 = vmatprep.subr.bf16.mxu0 0
      %474 = vmatpush2.bf16.msra.mxu0 0
      %475 = vmatprep.subr.bf16.mxu0 0
      %476 = vmatpush2.bf16.msra.mxu0 0
      %477 = vmatprep.subr.bf16.mxu0 0
      %478 = vmatpush2.bf16.msra.mxu0 0
      %479 = vmatprep.subr.bf16.mxu0 0
      %480 = vmatpush2.bf16.msra.mxu0 0
      %481 = vmatprep.subr.bf16.mxu0 0
      %482 = vmatpush2.bf16.msra.mxu0 0
      %483 = vmatprep.subr.bf16.mxu0 0
      %484 = vmatpush2.bf16.msra.mxu0 0
      %485 = vmatprep.subr.bf16.mxu0 0
      %486 = vmatpush2.bf16.msra.mxu0 0
      %487 = vmatprep.mubr.bf16.mxu0 0
      %488 = vmatmul.mubr.bf16.gmra.mxu0 %v359
      %v489 = vpop.f32.mrf.mxu0
      %v490 = vadd.f32 %v320, %v489
      %v491 = vpop.f32.mrf.mxu0
      %v492 = vadd.f32 %v324, %v491
      %v493 = vpop.f32.mrf.mxu0
      %v494 = vadd.f32 %v320, %v493
      %v495 = vpop.f32.mrf.mxu0
      %v496 = vadd.f32 %v324, %v495
      %497 = vmatprep.mubr.bf16.mxu0 0
      %498 = vmatmul.mubr.bf16.gmra.mxu0 %v360
      %v499 = vpop.f32.mrf.mxu0
      %v500 = vadd.f32 %v320, %v499
      %v501 = vpop.f32.mrf.mxu0
      %v502 = vadd.f32 %v324, %v501
      %v503 = vpop.f32.mrf.mxu0
      %v504 = vadd.f32 %v320, %v503
      %v505 = vpop.f32.mrf.mxu0
      %v506 = vadd.f32 %v324, %v505
      %507 = vmatprep.mubr.bf16.mxu0 0
      %508 = vmatmul.mubr.bf16.gmra.mxu0 %v361
      %v509 = vpop.f32.mrf.mxu0
      %v510 = vadd.f32 %v320, %v509
      %v511 = vpop.f32.mrf.mxu0
      %v512 = vadd.f32 %v324, %v511
      %v513 = vpop.f32.mrf.mxu0
      %v514 = vadd.f32 %v320, %v513
      %v515 = vpop.f32.mrf.mxu0
      %v516 = vadd.f32 %v324, %v515
      %517 = vmatprep.mubr.bf16.mxu0 0
      %518 = vmatmul.mubr.bf16.gmra.mxu0 %v362
      %v519 = vpop.f32.mrf.mxu0
      %v520 = vadd.f32 %v320, %v519
      %v521 = vpop.f32.mrf.mxu0
      %v522 = vadd.f32 %v324, %v521
      %v523 = vpop.f32.mrf.mxu0
      %v524 = vadd.f32 %v320, %v523
      %v525 = vpop.f32.mrf.mxu0
      %v526 = vadd.f32 %v324, %v525
      %527 = vmatprep.mubr.bf16.mxu0 0
      %528 = vmatmul.mubr.bf16.gmra.mxu0 %v363
      %v529 = vpop.f32.mrf.mxu0
      %v530 = vadd.f32 %v320, %v529
      %v531 = vpop.f32.mrf.mxu0
      %v532 = vadd.f32 %v324, %v531
      %v533 = vpop.f32.mrf.mxu0
      %v534 = vadd.f32 %v320, %v533
      %v535 = vpop.f32.mrf.mxu0
      %v536 = vadd.f32 %v324, %v535
      %537 = vmatprep.mubr.bf16.mxu0 0
      %538 = vmatmul.mubr.bf16.gmra.mxu0 %v364
      %v539 = vpop.f32.mrf.mxu0
      %v540 = vadd.f32 %v320, %v539
      %v541 = vpop.f32.mrf.mxu0
      %v542 = vadd.f32 %v324, %v541
      %v543 = vpop.f32.mrf.mxu0
      %v544 = vadd.f32 %v320, %v543
      %v545 = vpop.f32.mrf.mxu0
      %v546 = vadd.f32 %v324, %v545
      %547 = vmatprep.mubr.bf16.mxu0 0
      %548 = vmatmul.mubr.bf16.gmra.mxu0 %v365
      %v549 = vpop.f32.mrf.mxu0
      %v550 = vadd.f32 %v320, %v549
      %v551 = vpop.f32.mrf.mxu0
      %v552 = vadd.f32 %v324, %v551
      %v553 = vpop.f32.mrf.mxu0
      %v554 = vadd.f32 %v320, %v553
      %v555 = vpop.f32.mrf.mxu0
      %v556 = vadd.f32 %v324, %v555
      %557 = vmatprep.mubr.bf16.mxu0 0
      %558 = vmatmul.mubr.bf16.gmra.mxu0 %v366
      %v559 = vpop.f32.mrf.mxu0
      %v560 = vadd.f32 %v320, %v559
      %v561 = vpop.f32.mrf.mxu0
      %v562 = vadd.f32 %v324, %v561
      %v563 = vpop.f32.mrf.mxu0
      %v564 = vadd.f32 %v320, %v563
      %v565 = vpop.f32.mrf.mxu0
      %v566 = vadd.f32 %v324, %v565
      %567 = vdwg.mxu0
      %v568 = vpack.c.bf16 %v494, %v490
      %v569 = vpack.c.bf16 %v496, %v492
      %v570 = vpack.c.bf16 %v504, %v500
      %v571 = vpack.c.bf16 %v506, %v502
      %v572 = vpack.c.bf16 %v514, %v510
      %v573 = vpack.c.bf16 %v516, %v512
      %v574 = vpack.c.bf16 %v524, %v520
      %v575 = vpack.c.bf16 %v526, %v522
      %v576 = vpack.c.bf16 %v534, %v530
      %v577 = vpack.c.bf16 %v536, %v532
      %v578 = vpack.c.bf16 %v544, %v540
      %v579 = vpack.c.bf16 %v546, %v542
      %v580 = vpack.c.bf16 %v554, %v550
      %v581 = vpack.c.bf16 %v556, %v552
      %v582 = vpack.c.bf16 %v564, %v560
      %v583 = vpack.c.bf16 %v566, %v562
      %v584 = vld [vmem:[%s3] sm:$0xff]
      %v585 = vld [vmem:[%s3 + $0x8] sm:$0xff]
      %v586 = vld [vmem:[%s3 + $0x10] sm:$0xff]
      %v587 = vld [vmem:[%s3 + $0x18] sm:$0xff]
      %v588 = vld [vmem:[%s3 + $0x20] sm:$0xff]
      %v589 = vld [vmem:[%s3 + $0x28] sm:$0xff]
      %v590 = vld [vmem:[%s3 + $0x30] sm:$0xff]
      %v591 = vld [vmem:[%s3 + $0x38] sm:$0xff]
      %v592 = vld [vmem:[%s3 + $0x40] sm:$0xff]
      %v593 = vld [vmem:[%s3 + $0x48] sm:$0xff]
      %v594 = vld [vmem:[%s3 + $0x50] sm:$0xff]
      %v595 = vld [vmem:[%s3 + $0x58] sm:$0xff]
      %v596 = vld [vmem:[%s3 + $0x60] sm:$0xff]
      %v597 = vld [vmem:[%s3 + $0x68] sm:$0xff]
      %v598 = vld [vmem:[%s3 + $0x70] sm:$0xff]
      %v599 = vld [vmem:[%s3 + $0x78] sm:$0xff]
      %v600 = vld [vmem:[%s3 + $0x80] sm:$0xff]
      %v601 = vld [vmem:[%s3 + $0x88] sm:$0xff]
      %v602 = vld [vmem:[%s3 + $0x90] sm:$0xff]
      %v603 = vld [vmem:[%s3 + $0x98] sm:$0xff]
      %v604 = vld [vmem:[%s3 + $0xa0] sm:$0xff]
      %v605 = vld [vmem:[%s3 + $0xa8] sm:$0xff]
      %v606 = vld [vmem:[%s3 + $0xb0] sm:$0xff]
      %v607 = vld [vmem:[%s3 + $0xb8] sm:$0xff]
      %v608 = vld [vmem:[%s3 + $0xc0] sm:$0xff]
      %v609 = vld [vmem:[%s3 + $0xc8] sm:$0xff]
      %v610 = vld [vmem:[%s3 + $0xd0] sm:$0xff]
      %v611 = vld [vmem:[%s3 + $0xd8] sm:$0xff]
      %v612 = vld [vmem:[%s3 + $0xe0] sm:$0xff]
      %v613 = vld [vmem:[%s3 + $0xe8] sm:$0xff]
      %v614 = vld [vmem:[%s3 + $0xf0] sm:$0xff]
      %v615 = vld [vmem:[%s3 + $0xf8] sm:$0xff]
      %v616 = vld [vmem:[%s4] sm:$0x3]
      %v618 = vlaneseq
      %v619 = vshrl.u32 %v618, 7
      %v620 = vsub.s32 0, %v619
      %v621 = vrot.slane %v616, %v620
      %v622 = vlaneseq
      %v623 = vshrl.u32 %v622, 7
      %v624 = vsub.s32 1, %v623
      %v625 = vrot.slane %v616, %v624
      %v660 = vunpack.c.l.b16 %v584
      %v661 = vunpack.c.h.b16 %v584
      %v662 = vunpack.c.l.b16 %v585
      %v663 = vunpack.c.h.b16 %v585
      %v664 = vunpack.c.l.b16 %v586
      %v665 = vunpack.c.h.b16 %v586
      %v666 = vunpack.c.l.b16 %v587
      %v667 = vunpack.c.h.b16 %v587
      %v668 = vunpack.c.l.b16 %v588
      %v669 = vunpack.c.h.b16 %v588
      %v670 = vunpack.c.l.b16 %v589
      %v671 = vunpack.c.h.b16 %v589
      %v672 = vunpack.c.l.b16 %v590
      %v673 = vunpack.c.h.b16 %v590
      %v674 = vunpack.c.l.b16 %v591
      %v675 = vunpack.c.h.b16 %v591
      %v676 = vunpack.c.l.b16 %v592
      %v677 = vunpack.c.h.b16 %v592
      %v678 = vunpack.c.l.b16 %v593
      %v679 = vunpack.c.h.b16 %v593
      %v680 = vunpack.c.l.b16 %v594
      %v681 = vunpack.c.h.b16 %v594
      %v682 = vunpack.c.l.b16 %v595
      %v683 = vunpack.c.h.b16 %v595
      %v684 = vunpack.c.l.b16 %v596
      %v685 = vunpack.c.h.b16 %v596
      %v686 = vunpack.c.l.b16 %v597
      %v687 = vunpack.c.h.b16 %v597
      %v688 = vunpack.c.l.b16 %v598
      %v689 = vunpack.c.h.b16 %v598
      %v690 = vunpack.c.l.b16 %v599
      %v691 = vunpack.c.h.b16 %v599
      %v692 = vunpack.c.l.b16 %v600
      %v693 = vunpack.c.h.b16 %v600
      %v694 = vunpack.c.l.b16 %v601
      %v695 = vunpack.c.h.b16 %v601
      %v696 = vunpack.c.l.b16 %v602
      %v697 = vunpack.c.h.b16 %v602
      %v698 = vunpack.c.l.b16 %v603
      %v699 = vunpack.c.h.b16 %v603
      %v700 = vunpack.c.l.b16 %v604
      %v701 = vunpack.c.h.b16 %v604
      %v702 = vunpack.c.l.b16 %v605
      %v703 = vunpack.c.h.b16 %v605
      %v704 = vunpack.c.l.b16 %v606
      %v705 = vunpack.c.h.b16 %v606
      %v706 = vunpack.c.l.b16 %v607
      %v707 = vunpack.c.h.b16 %v607
      %v708 = vunpack.c.l.b16 %v608
      %v709 = vunpack.c.h.b16 %v608
      %v710 = vunpack.c.l.b16 %v609
      %v711 = vunpack.c.h.b16 %v609
      %v712 = vunpack.c.l.b16 %v610
      %v713 = vunpack.c.h.b16 %v610
      %v714 = vunpack.c.l.b16 %v611
      %v715 = vunpack.c.h.b16 %v611
      %v716 = vunpack.c.l.b16 %v612
      %v717 = vunpack.c.h.b16 %v612
      %v718 = vunpack.c.l.b16 %v613
      %v719 = vunpack.c.h.b16 %v613
      %v720 = vunpack.c.l.b16 %v614
      %v721 = vunpack.c.h.b16 %v614
      %v722 = vunpack.c.l.b16 %v615
      %v723 = vunpack.c.h.b16 %v615
      %v724 = vpack.c.b16 %v662, %v660
      %v725 = vpack.c.b16 %v663, %v661
      %v726 = vpack.c.b16 %v666, %v664
      %v727 = vpack.c.b16 %v667, %v665
      %v728 = vpack.c.b16 %v670, %v668
      %v729 = vpack.c.b16 %v671, %v669
      %v730 = vpack.c.b16 %v674, %v672
      %v731 = vpack.c.b16 %v675, %v673
      %v732 = vpack.c.b16 %v678, %v676
      %v733 = vpack.c.b16 %v679, %v677
      %v734 = vpack.c.b16 %v682, %v680
      %v735 = vpack.c.b16 %v683, %v681
      %v736 = vpack.c.b16 %v686, %v684
      %v737 = vpack.c.b16 %v687, %v685
      %v738 = vpack.c.b16 %v690, %v688
      %v739 = vpack.c.b16 %v691, %v689
      %v740 = vpack.c.b16 %v694, %v692
      %v741 = vpack.c.b16 %v695, %v693
      %v742 = vpack.c.b16 %v698, %v696
      %v743 = vpack.c.b16 %v699, %v697
      %v744 = vpack.c.b16 %v702, %v700
      %v745 = vpack.c.b16 %v703, %v701
      %v746 = vpack.c.b16 %v706, %v704
      %v747 = vpack.c.b16 %v707, %v705
      %v748 = vpack.c.b16 %v710, %v708
      %v749 = vpack.c.b16 %v711, %v709
      %v750 = vpack.c.b16 %v714, %v712
      %v751 = vpack.c.b16 %v715, %v713
      %v752 = vpack.c.b16 %v718, %v716
      %v753 = vpack.c.b16 %v719, %v717
      %v754 = vpack.c.b16 %v722, %v720
      %v755 = vpack.c.b16 %v723, %v721
      %788 = vmatprep.subr.bf16.mxu0 %v739
      %789 = vmatpush1.bf16.msra.mxu0 %v738
      %790 = vmatprep.subr.bf16.mxu0 %v737
      %791 = vmatpush1.bf16.msra.mxu0 %v736
      %792 = vmatprep.subr.bf16.mxu0 %v735
      %793 = vmatpush1.bf16.msra.mxu0 %v734
      %794 = vmatprep.subr.bf16.mxu0 %v733
      %795 = vmatpush1.bf16.msra.mxu0 %v732
      %796 = vmatprep.subr.bf16.mxu0 %v731
      %797 = vmatpush1.bf16.msra.mxu0 %v730
      %798 = vmatprep.subr.bf16.mxu0 %v729
      %799 = vmatpush1.bf16.msra.mxu0 %v728
      %800 = vmatprep.subr.bf16.mxu0 %v727
      %801 = vmatpush1.bf16.msra.mxu0 %v726
      %802 = vmatprep.subr.bf16.mxu0 %v725
      %803 = vmatpush1.bf16.msra.mxu0 %v724
      %804 = vmatprep.subr.bf16.mxu0 %v755
      %805 = vmatpush2.bf16.msra.mxu0 %v754
      %806 = vmatprep.subr.bf16.mxu0 %v753
      %807 = vmatpush2.bf16.msra.mxu0 %v752
      %808 = vmatprep.subr.bf16.mxu0 %v751
      %809 = vmatpush2.bf16.msra.mxu0 %v750
      %810 = vmatprep.subr.bf16.mxu0 %v749
      %811 = vmatpush2.bf16.msra.mxu0 %v748
      %812 = vmatprep.subr.bf16.mxu0 %v747
      %813 = vmatpush2.bf16.msra.mxu0 %v746
      %814 = vmatprep.subr.bf16.mxu0 %v745
      %815 = vmatpush2.bf16.msra.mxu0 %v744
      %816 = vmatprep.subr.bf16.mxu0 %v743
      %817 = vmatpush2.bf16.msra.mxu0 %v742
      %818 = vmatprep.subr.bf16.mxu0 %v741
      %819 = vmatpush2.bf16.msra.mxu0 %v740
      %820 = vmatprep.mubr.bf16.mxu0 %v569
      %821 = vmatmul.mubr.bf16.gmra.mxu0 %v568
      %v822 = vpop.f32.mrf.mxu0
      %v823 = vadd.f32 %v621, %v822
      %v824 = vpop.f32.mrf.mxu0
      %v825 = vadd.f32 %v625, %v824
      %v826 = vpop.f32.mrf.mxu0
      %v827 = vadd.f32 %v621, %v826
      %v828 = vpop.f32.mrf.mxu0
      %v829 = vadd.f32 %v625, %v828
      %830 = vmatprep.mubr.bf16.mxu0 %v571
      %831 = vmatmul.mubr.bf16.gmra.mxu0 %v570
      %v832 = vpop.f32.mrf.mxu0
      %v833 = vadd.f32 %v621, %v832
      %v834 = vpop.f32.mrf.mxu0
      %v835 = vadd.f32 %v625, %v834
      %v836 = vpop.f32.mrf.mxu0
      %v837 = vadd.f32 %v621, %v836
      %v838 = vpop.f32.mrf.mxu0
      %v839 = vadd.f32 %v625, %v838
      %840 = vmatprep.mubr.bf16.mxu0 %v573
      %841 = vmatmul.mubr.bf16.gmra.mxu0 %v572
      %v842 = vpop.f32.mrf.mxu0
      %v843 = vadd.f32 %v621, %v842
      %v844 = vpop.f32.mrf.mxu0
      %v845 = vadd.f32 %v625, %v844
      %v846 = vpop.f32.mrf.mxu0
      %v847 = vadd.f32 %v621, %v846
      %v848 = vpop.f32.mrf.mxu0
      %v849 = vadd.f32 %v625, %v848
      %850 = vmatprep.mubr.bf16.mxu0 %v575
      %851 = vmatmul.mubr.bf16.gmra.mxu0 %v574
      %v852 = vpop.f32.mrf.mxu0
      %v853 = vadd.f32 %v621, %v852
      %v854 = vpop.f32.mrf.mxu0
      %v855 = vadd.f32 %v625, %v854
      %v856 = vpop.f32.mrf.mxu0
      %v857 = vadd.f32 %v621, %v856
      %v858 = vpop.f32.mrf.mxu0
      %v859 = vadd.f32 %v625, %v858
      %860 = vmatprep.mubr.bf16.mxu0 %v577
      %861 = vmatmul.mubr.bf16.gmra.mxu0 %v576
      %v862 = vpop.f32.mrf.mxu0
      %v863 = vadd.f32 %v621, %v862
      %v864 = vpop.f32.mrf.mxu0
      %v865 = vadd.f32 %v625, %v864
      %v866 = vpop.f32.mrf.mxu0
      %v867 = vadd.f32 %v621, %v866
      %v868 = vpop.f32.mrf.mxu0
      %v869 = vadd.f32 %v625, %v868
      %870 = vmatprep.mubr.bf16.mxu0 %v579
      %871 = vmatmul.mubr.bf16.gmra.mxu0 %v578
      %v872 = vpop.f32.mrf.mxu0
      %v873 = vadd.f32 %v621, %v872
      %v874 = vpop.f32.mrf.mxu0
      %v875 = vadd.f32 %v625, %v874
      %v876 = vpop.f32.mrf.mxu0
      %v877 = vadd.f32 %v621, %v876
      %v878 = vpop.f32.mrf.mxu0
      %v879 = vadd.f32 %v625, %v878
      %880 = vmatprep.mubr.bf16.mxu0 %v581
      %881 = vmatmul.mubr.bf16.gmra.mxu0 %v580
      %v882 = vpop.f32.mrf.mxu0
      %v883 = vadd.f32 %v621, %v882
      %v884 = vpop.f32.mrf.mxu0
      %v885 = vadd.f32 %v625, %v884
      %v886 = vpop.f32.mrf.mxu0
      %v887 = vadd.f32 %v621, %v886
      %v888 = vpop.f32.mrf.mxu0
      %v889 = vadd.f32 %v625, %v888
      %890 = vmatprep.mubr.bf16.mxu0 %v583
      %891 = vmatmul.mubr.bf16.gmra.mxu0 %v582
      %v892 = vpop.f32.mrf.mxu0
      %v893 = vadd.f32 %v621, %v892
      %v894 = vpop.f32.mrf.mxu0
      %v895 = vadd.f32 %v625, %v894
      %v896 = vpop.f32.mrf.mxu0
      %v897 = vadd.f32 %v621, %v896
      %v898 = vpop.f32.mrf.mxu0
      %v899 = vadd.f32 %v625, %v898
      %900 = vdwg.mxu0
      %v901 = vmul.f32 %v823, %v825
      %v902 = vmul.f32 %v827, %v829
      %v903 = vmul.f32 %v833, %v835
      %v904 = vmul.f32 %v837, %v839
      %v905 = vmul.f32 %v843, %v845
      %v906 = vmul.f32 %v847, %v849
      %v907 = vmul.f32 %v853, %v855
      %v908 = vmul.f32 %v857, %v859
      %v909 = vmul.f32 %v863, %v865
      %v910 = vmul.f32 %v867, %v869
      %v911 = vmul.f32 %v873, %v875
      %v912 = vmul.f32 %v877, %v879
      %v913 = vmul.f32 %v883, %v885
      %v914 = vmul.f32 %v887, %v889
      %v915 = vmul.f32 %v893, %v895
      %v916 = vmul.f32 %v897, %v899
      %v917 = vadd.f32 %v901, 0.0
      %v918 = vadd.f32 %v902, 0.0
      %v919 = vadd.f32 %v903, 0.0
      %v920 = vadd.f32 %v904, 0.0
      %v921 = vadd.f32 %v905, 0.0
      %v922 = vadd.f32 %v906, 0.0
      %v923 = vadd.f32 %v907, 0.0
      %v924 = vadd.f32 %v908, 0.0
      %v925 = vadd.f32 %v909, 0.0
      %v926 = vadd.f32 %v910, 0.0
      %v927 = vadd.f32 %v911, 0.0
      %v928 = vadd.f32 %v912, 0.0
      %v929 = vadd.f32 %v913, 0.0
      %v930 = vadd.f32 %v914, 0.0
      %v931 = vadd.f32 %v915, 0.0
      %v932 = vadd.f32 %v916, 0.0
      %s933 = scalar_lea.vmem %s3, 256
      %v934 = vld [vmem:[%s933] sm:$0xff]
      %v935 = vld [vmem:[%s933 + $0x8] sm:$0xff]
      %v936 = vld [vmem:[%s933 + $0x10] sm:$0xff]
      %v937 = vld [vmem:[%s933 + $0x18] sm:$0xff]
      %v938 = vld [vmem:[%s933 + $0x20] sm:$0xff]
      %v939 = vld [vmem:[%s933 + $0x28] sm:$0xff]
      %v940 = vld [vmem:[%s933 + $0x30] sm:$0xff]
      %v941 = vld [vmem:[%s933 + $0x38] sm:$0xff]
      %v942 = vld [vmem:[%s933 + $0x40] sm:$0xff]
      %v943 = vld [vmem:[%s933 + $0x48] sm:$0xff]
      %v944 = vld [vmem:[%s933 + $0x50] sm:$0xff]
      %v945 = vld [vmem:[%s933 + $0x58] sm:$0xff]
      %v946 = vld [vmem:[%s933 + $0x60] sm:$0xff]
      %v947 = vld [vmem:[%s933 + $0x68] sm:$0xff]
      %v948 = vld [vmem:[%s933 + $0x70] sm:$0xff]
      %v949 = vld [vmem:[%s933 + $0x78] sm:$0xff]
      %v950 = vld [vmem:[%s933 + $0x80] sm:$0xff]
      %v951 = vld [vmem:[%s933 + $0x88] sm:$0xff]
      %v952 = vld [vmem:[%s933 + $0x90] sm:$0xff]
      %v953 = vld [vmem:[%s933 + $0x98] sm:$0xff]
      %v954 = vld [vmem:[%s933 + $0xa0] sm:$0xff]
      %v955 = vld [vmem:[%s933 + $0xa8] sm:$0xff]
      %v956 = vld [vmem:[%s933 + $0xb0] sm:$0xff]
      %v957 = vld [vmem:[%s933 + $0xb8] sm:$0xff]
      %v958 = vld [vmem:[%s933 + $0xc0] sm:$0xff]
      %v959 = vld [vmem:[%s933 + $0xc8] sm:$0xff]
      %v960 = vld [vmem:[%s933 + $0xd0] sm:$0xff]
      %v961 = vld [vmem:[%s933 + $0xd8] sm:$0xff]
      %v962 = vld [vmem:[%s933 + $0xe0] sm:$0xff]
      %v963 = vld [vmem:[%s933 + $0xe8] sm:$0xff]
      %v964 = vld [vmem:[%s933 + $0xf0] sm:$0xff]
      %v965 = vld [vmem:[%s933 + $0xf8] sm:$0xff]
      %s966 = scalar_lea.vmem %s4, 2
      %v967 = vld [vmem:[%s966] sm:$0x3]
      %v969 = vlaneseq
      %v970 = vshrl.u32 %v969, 7
      %v971 = vsub.s32 0, %v970
      %v972 = vrot.slane %v967, %v971
      %v973 = vlaneseq
      %v974 = vshrl.u32 %v973, 7
      %v975 = vsub.s32 1, %v974
      %v976 = vrot.slane %v967, %v975
      %v1011 = vunpack.c.l.b16 %v934
      %v1012 = vunpack.c.h.b16 %v934
      %v1013 = vunpack.c.l.b16 %v935
      %v1014 = vunpack.c.h.b16 %v935
      %v1015 = vunpack.c.l.b16 %v936
      %v1016 = vunpack.c.h.b16 %v936
      %v1017 = vunpack.c.l.b16 %v937
      %v1018 = vunpack.c.h.b16 %v937
      %v1019 = vunpack.c.l.b16 %v938
      %v1020 = vunpack.c.h.b16 %v938
      %v1021 = vunpack.c.l.b16 %v939
      %v1022 = vunpack.c.h.b16 %v939
      %v1023 = vunpack.c.l.b16 %v940
      %v1024 = vunpack.c.h.b16 %v940
      %v1025 = vunpack.c.l.b16 %v941
      %v1026 = vunpack.c.h.b16 %v941
      %v1027 = vunpack.c.l.b16 %v942
      %v1028 = vunpack.c.h.b16 %v942
      %v1029 = vunpack.c.l.b16 %v943
      %v1030 = vunpack.c.h.b16 %v943
      %v1031 = vunpack.c.l.b16 %v944
      %v1032 = vunpack.c.h.b16 %v944
      %v1033 = vunpack.c.l.b16 %v945
      %v1034 = vunpack.c.h.b16 %v945
      %v1035 = vunpack.c.l.b16 %v946
      %v1036 = vunpack.c.h.b16 %v946
      %v1037 = vunpack.c.l.b16 %v947
      %v1038 = vunpack.c.h.b16 %v947
      %v1039 = vunpack.c.l.b16 %v948
      %v1040 = vunpack.c.h.b16 %v948
      %v1041 = vunpack.c.l.b16 %v949
      %v1042 = vunpack.c.h.b16 %v949
      %v1043 = vunpack.c.l.b16 %v950
      %v1044 = vunpack.c.h.b16 %v950
      %v1045 = vunpack.c.l.b16 %v951
      %v1046 = vunpack.c.h.b16 %v951
      %v1047 = vunpack.c.l.b16 %v952
      %v1048 = vunpack.c.h.b16 %v952
      %v1049 = vunpack.c.l.b16 %v953
      %v1050 = vunpack.c.h.b16 %v953
      %v1051 = vunpack.c.l.b16 %v954
      %v1052 = vunpack.c.h.b16 %v954
      %v1053 = vunpack.c.l.b16 %v955
      %v1054 = vunpack.c.h.b16 %v955
      %v1055 = vunpack.c.l.b16 %v956
      %v1056 = vunpack.c.h.b16 %v956
      %v1057 = vunpack.c.l.b16 %v957
      %v1058 = vunpack.c.h.b16 %v957
      %v1059 = vunpack.c.l.b16 %v958
      %v1060 = vunpack.c.h.b16 %v958
      %v1061 = vunpack.c.l.b16 %v959
      %v1062 = vunpack.c.h.b16 %v959
      %v1063 = vunpack.c.l.b16 %v960
      %v1064 = vunpack.c.h.b16 %v960
      %v1065 = vunpack.c.l.b16 %v961
      %v1066 = vunpack.c.h.b16 %v961
      %v1067 = vunpack.c.l.b16 %v962
      %v1068 = vunpack.c.h.b16 %v962
      %v1069 = vunpack.c.l.b16 %v963
      %v1070 = vunpack.c.h.b16 %v963
      %v1071 = vunpack.c.l.b16 %v964
      %v1072 = vunpack.c.h.b16 %v964
      %v1073 = vunpack.c.l.b16 %v965
      %v1074 = vunpack.c.h.b16 %v965
      %v1075 = vpack.c.b16 %v1013, %v1011
      %v1076 = vpack.c.b16 %v1014, %v1012
      %v1077 = vpack.c.b16 %v1017, %v1015
      %v1078 = vpack.c.b16 %v1018, %v1016
      %v1079 = vpack.c.b16 %v1021, %v1019
      %v1080 = vpack.c.b16 %v1022, %v1020
      %v1081 = vpack.c.b16 %v1025, %v1023
      %v1082 = vpack.c.b16 %v1026, %v1024
      %v1083 = vpack.c.b16 %v1029, %v1027
      %v1084 = vpack.c.b16 %v1030, %v1028
      %v1085 = vpack.c.b16 %v1033, %v1031
      %v1086 = vpack.c.b16 %v1034, %v1032
      %v1087 = vpack.c.b16 %v1037, %v1035
      %v1088 = vpack.c.b16 %v1038, %v1036
      %v1089 = vpack.c.b16 %v1041, %v1039
      %v1090 = vpack.c.b16 %v1042, %v1040
      %v1091 = vpack.c.b16 %v1045, %v1043
      %v1092 = vpack.c.b16 %v1046, %v1044
      %v1093 = vpack.c.b16 %v1049, %v1047
      %v1094 = vpack.c.b16 %v1050, %v1048
      %v1095 = vpack.c.b16 %v1053, %v1051
      %v1096 = vpack.c.b16 %v1054, %v1052
      %v1097 = vpack.c.b16 %v1057, %v1055
      %v1098 = vpack.c.b16 %v1058, %v1056
      %v1099 = vpack.c.b16 %v1061, %v1059
      %v1100 = vpack.c.b16 %v1062, %v1060
      %v1101 = vpack.c.b16 %v1065, %v1063
      %v1102 = vpack.c.b16 %v1066, %v1064
      %v1103 = vpack.c.b16 %v1069, %v1067
      %v1104 = vpack.c.b16 %v1070, %v1068
      %v1105 = vpack.c.b16 %v1073, %v1071
      %v1106 = vpack.c.b16 %v1074, %v1072
      %1139 = vmatprep.subr.bf16.mxu0 %v1090
      %1140 = vmatpush1.bf16.msra.mxu0 %v1089
      %1141 = vmatprep.subr.bf16.mxu0 %v1088
      %1142 = vmatpush1.bf16.msra.mxu0 %v1087
      %1143 = vmatprep.subr.bf16.mxu0 %v1086
      %1144 = vmatpush1.bf16.msra.mxu0 %v1085
      %1145 = vmatprep.subr.bf16.mxu0 %v1084
      %1146 = vmatpush1.bf16.msra.mxu0 %v1083
      %1147 = vmatprep.subr.bf16.mxu0 %v1082
      %1148 = vmatpush1.bf16.msra.mxu0 %v1081
      %1149 = vmatprep.subr.bf16.mxu0 %v1080
      %1150 = vmatpush1.bf16.msra.mxu0 %v1079
      %1151 = vmatprep.subr.bf16.mxu0 %v1078
      %1152 = vmatpush1.bf16.msra.mxu0 %v1077
      %1153 = vmatprep.subr.bf16.mxu0 %v1076
      %1154 = vmatpush1.bf16.msra.mxu0 %v1075
      %1155 = vmatprep.subr.bf16.mxu0 %v1106
      %1156 = vmatpush2.bf16.msra.mxu0 %v1105
      %1157 = vmatprep.subr.bf16.mxu0 %v1104
      %1158 = vmatpush2.bf16.msra.mxu0 %v1103
      %1159 = vmatprep.subr.bf16.mxu0 %v1102
      %1160 = vmatpush2.bf16.msra.mxu0 %v1101
      %1161 = vmatprep.subr.bf16.mxu0 %v1100
      %1162 = vmatpush2.bf16.msra.mxu0 %v1099
      %1163 = vmatprep.subr.bf16.mxu0 %v1098
      %1164 = vmatpush2.bf16.msra.mxu0 %v1097
      %1165 = vmatprep.subr.bf16.mxu0 %v1096
      %1166 = vmatpush2.bf16.msra.mxu0 %v1095
      %1167 = vmatprep.subr.bf16.mxu0 %v1094
      %1168 = vmatpush2.bf16.msra.mxu0 %v1093
      %1169 = vmatprep.subr.bf16.mxu0 %v1092
      %1170 = vmatpush2.bf16.msra.mxu0 %v1091
      %1171 = vmatprep.mubr.bf16.mxu0 %v569
      %1172 = vmatmul.mubr.bf16.gmra.mxu0 %v568
      %v1173 = vpop.f32.mrf.mxu0
      %v1174 = vadd.f32 %v972, %v1173
      %v1175 = vpop.f32.mrf.mxu0
      %v1176 = vadd.f32 %v976, %v1175
      %v1177 = vpop.f32.mrf.mxu0
      %v1178 = vadd.f32 %v972, %v1177
      %v1179 = vpop.f32.mrf.mxu0
      %v1180 = vadd.f32 %v976, %v1179
      %1181 = vmatprep.mubr.bf16.mxu0 %v571
      %1182 = vmatmul.mubr.bf16.gmra.mxu0 %v570
      %v1183 = vpop.f32.mrf.mxu0
      %v1184 = vadd.f32 %v972, %v1183
      %v1185 = vpop.f32.mrf.mxu0
      %v1186 = vadd.f32 %v976, %v1185
      %v1187 = vpop.f32.mrf.mxu0
      %v1188 = vadd.f32 %v972, %v1187
      %v1189 = vpop.f32.mrf.mxu0
      %v1190 = vadd.f32 %v976, %v1189
      %1191 = vmatprep.mubr.bf16.mxu0 %v573
      %1192 = vmatmul.mubr.bf16.gmra.mxu0 %v572
      %v1193 = vpop.f32.mrf.mxu0
      %v1194 = vadd.f32 %v972, %v1193
      %v1195 = vpop.f32.mrf.mxu0
      %v1196 = vadd.f32 %v976, %v1195
      %v1197 = vpop.f32.mrf.mxu0
      %v1198 = vadd.f32 %v972, %v1197
      %v1199 = vpop.f32.mrf.mxu0
      %v1200 = vadd.f32 %v976, %v1199
      %1201 = vmatprep.mubr.bf16.mxu0 %v575
      %1202 = vmatmul.mubr.bf16.gmra.mxu0 %v574
      %v1203 = vpop.f32.mrf.mxu0
      %v1204 = vadd.f32 %v972, %v1203
      %v1205 = vpop.f32.mrf.mxu0
      %v1206 = vadd.f32 %v976, %v1205
      %v1207 = vpop.f32.mrf.mxu0
      %v1208 = vadd.f32 %v972, %v1207
      %v1209 = vpop.f32.mrf.mxu0
      %v1210 = vadd.f32 %v976, %v1209
      %1211 = vmatprep.mubr.bf16.mxu0 %v577
      %1212 = vmatmul.mubr.bf16.gmra.mxu0 %v576
      %v1213 = vpop.f32.mrf.mxu0
      %v1214 = vadd.f32 %v972, %v1213
      %v1215 = vpop.f32.mrf.mxu0
      %v1216 = vadd.f32 %v976, %v1215
      %v1217 = vpop.f32.mrf.mxu0
      %v1218 = vadd.f32 %v972, %v1217
      %v1219 = vpop.f32.mrf.mxu0
      %v1220 = vadd.f32 %v976, %v1219
      %1221 = vmatprep.mubr.bf16.mxu0 %v579
      %1222 = vmatmul.mubr.bf16.gmra.mxu0 %v578
      %v1223 = vpop.f32.mrf.mxu0
      %v1224 = vadd.f32 %v972, %v1223
      %v1225 = vpop.f32.mrf.mxu0
      %v1226 = vadd.f32 %v976, %v1225
      %v1227 = vpop.f32.mrf.mxu0
      %v1228 = vadd.f32 %v972, %v1227
      %v1229 = vpop.f32.mrf.mxu0
      %v1230 = vadd.f32 %v976, %v1229
      %1231 = vmatprep.mubr.bf16.mxu0 %v581
      %1232 = vmatmul.mubr.bf16.gmra.mxu0 %v580
      %v1233 = vpop.f32.mrf.mxu0
      %v1234 = vadd.f32 %v972, %v1233
      %v1235 = vpop.f32.mrf.mxu0
      %v1236 = vadd.f32 %v976, %v1235
      %v1237 = vpop.f32.mrf.mxu0
      %v1238 = vadd.f32 %v972, %v1237
      %v1239 = vpop.f32.mrf.mxu0
      %v1240 = vadd.f32 %v976, %v1239
      %1241 = vmatprep.mubr.bf16.mxu0 %v583
      %1242 = vmatmul.mubr.bf16.gmra.mxu0 %v582
      %v1243 = vpop.f32.mrf.mxu0
      %v1244 = vadd.f32 %v972, %v1243
      %v1245 = vpop.f32.mrf.mxu0
      %v1246 = vadd.f32 %v976, %v1245
      %v1247 = vpop.f32.mrf.mxu0
      %v1248 = vadd.f32 %v972, %v1247
      %v1249 = vpop.f32.mrf.mxu0
      %v1250 = vadd.f32 %v976, %v1249
      %1251 = vdwg.mxu0
      %v1252 = vmul.f32 %v1174, %v1176
      %v1253 = vmul.f32 %v1178, %v1180
      %v1254 = vmul.f32 %v1184, %v1186
      %v1255 = vmul.f32 %v1188, %v1190
      %v1256 = vmul.f32 %v1194, %v1196
      %v1257 = vmul.f32 %v1198, %v1200
      %v1258 = vmul.f32 %v1204, %v1206
      %v1259 = vmul.f32 %v1208, %v1210
      %v1260 = vmul.f32 %v1214, %v1216
      %v1261 = vmul.f32 %v1218, %v1220
      %v1262 = vmul.f32 %v1224, %v1226
      %v1263 = vmul.f32 %v1228, %v1230
      %v1264 = vmul.f32 %v1234, %v1236
      %v1265 = vmul.f32 %v1238, %v1240
      %v1266 = vmul.f32 %v1244, %v1246
      %v1267 = vmul.f32 %v1248, %v1250
      %v1268 = vadd.f32 %v917, %v1252
      %v1269 = vadd.f32 %v918, %v1253
      %v1270 = vadd.f32 %v919, %v1254
      %v1271 = vadd.f32 %v920, %v1255
      %v1272 = vadd.f32 %v921, %v1256
      %v1273 = vadd.f32 %v922, %v1257
      %v1274 = vadd.f32 %v923, %v1258
      %v1275 = vadd.f32 %v924, %v1259
      %v1276 = vadd.f32 %v925, %v1260
      %v1277 = vadd.f32 %v926, %v1261
      %v1278 = vadd.f32 %v927, %v1262
      %v1279 = vadd.f32 %v928, %v1263
      %v1280 = vadd.f32 %v929, %v1264
      %v1281 = vadd.f32 %v930, %v1265
      %v1282 = vadd.f32 %v931, %v1266
      %v1283 = vadd.f32 %v932, %v1267
      %s1284 = scalar_lea.vmem %s3, 512
      %v1285 = vld [vmem:[%s1284] sm:$0xff]
      %v1286 = vld [vmem:[%s1284 + $0x8] sm:$0xff]
      %v1287 = vld [vmem:[%s1284 + $0x10] sm:$0xff]
      %v1288 = vld [vmem:[%s1284 + $0x18] sm:$0xff]
      %v1289 = vld [vmem:[%s1284 + $0x20] sm:$0xff]
      %v1290 = vld [vmem:[%s1284 + $0x28] sm:$0xff]
      %v1291 = vld [vmem:[%s1284 + $0x30] sm:$0xff]
      %v1292 = vld [vmem:[%s1284 + $0x38] sm:$0xff]
      %v1293 = vld [vmem:[%s1284 + $0x40] sm:$0xff]
      %v1294 = vld [vmem:[%s1284 + $0x48] sm:$0xff]
      %v1295 = vld [vmem:[%s1284 + $0x50] sm:$0xff]
      %v1296 = vld [vmem:[%s1284 + $0x58] sm:$0xff]
      %v1297 = vld [vmem:[%s1284 + $0x60] sm:$0xff]
      %v1298 = vld [vmem:[%s1284 + $0x68] sm:$0xff]
      %v1299 = vld [vmem:[%s1284 + $0x70] sm:$0xff]
      %v1300 = vld [vmem:[%s1284 + $0x78] sm:$0xff]
      %v1301 = vld [vmem:[%s1284 + $0x80] sm:$0xff]
      %v1302 = vld [vmem:[%s1284 + $0x88] sm:$0xff]
      %v1303 = vld [vmem:[%s1284 + $0x90] sm:$0xff]
      %v1304 = vld [vmem:[%s1284 + $0x98] sm:$0xff]
      %v1305 = vld [vmem:[%s1284 + $0xa0] sm:$0xff]
      %v1306 = vld [vmem:[%s1284 + $0xa8] sm:$0xff]
      %v1307 = vld [vmem:[%s1284 + $0xb0] sm:$0xff]
      %v1308 = vld [vmem:[%s1284 + $0xb8] sm:$0xff]
      %v1309 = vld [vmem:[%s1284 + $0xc0] sm:$0xff]
      %v1310 = vld [vmem:[%s1284 + $0xc8] sm:$0xff]
      %v1311 = vld [vmem:[%s1284 + $0xd0] sm:$0xff]
      %v1312 = vld [vmem:[%s1284 + $0xd8] sm:$0xff]
      %v1313 = vld [vmem:[%s1284 + $0xe0] sm:$0xff]
      %v1314 = vld [vmem:[%s1284 + $0xe8] sm:$0xff]
      %v1315 = vld [vmem:[%s1284 + $0xf0] sm:$0xff]
      %v1316 = vld [vmem:[%s1284 + $0xf8] sm:$0xff]
      %s1317 = scalar_lea.vmem %s4, 4
      %v1318 = vld [vmem:[%s1317] sm:$0x3]
      %v1320 = vlaneseq
      %v1321 = vshrl.u32 %v1320, 7
      %v1322 = vsub.s32 0, %v1321
      %v1323 = vrot.slane %v1318, %v1322
      %v1324 = vlaneseq
      %v1325 = vshrl.u32 %v1324, 7
      %v1326 = vsub.s32 1, %v1325
      %v1327 = vrot.slane %v1318, %v1326
      %v1362 = vunpack.c.l.b16 %v1285
      %v1363 = vunpack.c.h.b16 %v1285
      %v1364 = vunpack.c.l.b16 %v1286
      %v1365 = vunpack.c.h.b16 %v1286
      %v1366 = vunpack.c.l.b16 %v1287
      %v1367 = vunpack.c.h.b16 %v1287
      %v1368 = vunpack.c.l.b16 %v1288
      %v1369 = vunpack.c.h.b16 %v1288
      %v1370 = vunpack.c.l.b16 %v1289
      %v1371 = vunpack.c.h.b16 %v1289
      %v1372 = vunpack.c.l.b16 %v1290
      %v1373 = vunpack.c.h.b16 %v1290
      %v1374 = vunpack.c.l.b16 %v1291
      %v1375 = vunpack.c.h.b16 %v1291
      %v1376 = vunpack.c.l.b16 %v1292
      %v1377 = vunpack.c.h.b16 %v1292
      %v1378 = vunpack.c.l.b16 %v1293
      %v1379 = vunpack.c.h.b16 %v1293
      %v1380 = vunpack.c.l.b16 %v1294
      %v1381 = vunpack.c.h.b16 %v1294
      %v1382 = vunpack.c.l.b16 %v1295
      %v1383 = vunpack.c.h.b16 %v1295
      %v1384 = vunpack.c.l.b16 %v1296
      %v1385 = vunpack.c.h.b16 %v1296
      %v1386 = vunpack.c.l.b16 %v1297
      %v1387 = vunpack.c.h.b16 %v1297
      %v1388 = vunpack.c.l.b16 %v1298
      %v1389 = vunpack.c.h.b16 %v1298
      %v1390 = vunpack.c.l.b16 %v1299
      %v1391 = vunpack.c.h.b16 %v1299
      %v1392 = vunpack.c.l.b16 %v1300
      %v1393 = vunpack.c.h.b16 %v1300
      %v1394 = vunpack.c.l.b16 %v1301
      %v1395 = vunpack.c.h.b16 %v1301
      %v1396 = vunpack.c.l.b16 %v1302
      %v1397 = vunpack.c.h.b16 %v1302
      %v1398 = vunpack.c.l.b16 %v1303
      %v1399 = vunpack.c.h.b16 %v1303
      %v1400 = vunpack.c.l.b16 %v1304
      %v1401 = vunpack.c.h.b16 %v1304
      %v1402 = vunpack.c.l.b16 %v1305
      %v1403 = vunpack.c.h.b16 %v1305
      %v1404 = vunpack.c.l.b16 %v1306
      %v1405 = vunpack.c.h.b16 %v1306
      %v1406 = vunpack.c.l.b16 %v1307
      %v1407 = vunpack.c.h.b16 %v1307
      %v1408 = vunpack.c.l.b16 %v1308
      %v1409 = vunpack.c.h.b16 %v1308
      %v1410 = vunpack.c.l.b16 %v1309
      %v1411 = vunpack.c.h.b16 %v1309
      %v1412 = vunpack.c.l.b16 %v1310
      %v1413 = vunpack.c.h.b16 %v1310
      %v1414 = vunpack.c.l.b16 %v1311
      %v1415 = vunpack.c.h.b16 %v1311
      %v1416 = vunpack.c.l.b16 %v1312
      %v1417 = vunpack.c.h.b16 %v1312
      %v1418 = vunpack.c.l.b16 %v1313
      %v1419 = vunpack.c.h.b16 %v1313
      %v1420 = vunpack.c.l.b16 %v1314
      %v1421 = vunpack.c.h.b16 %v1314
      %v1422 = vunpack.c.l.b16 %v1315
      %v1423 = vunpack.c.h.b16 %v1315
      %v1424 = vunpack.c.l.b16 %v1316
      %v1425 = vunpack.c.h.b16 %v1316
      %v1426 = vpack.c.b16 %v1364, %v1362
      %v1427 = vpack.c.b16 %v1365, %v1363
      %v1428 = vpack.c.b16 %v1368, %v1366
      %v1429 = vpack.c.b16 %v1369, %v1367
      %v1430 = vpack.c.b16 %v1372, %v1370
      %v1431 = vpack.c.b16 %v1373, %v1371
      %v1432 = vpack.c.b16 %v1376, %v1374
      %v1433 = vpack.c.b16 %v1377, %v1375
      %v1434 = vpack.c.b16 %v1380, %v1378
      %v1435 = vpack.c.b16 %v1381, %v1379
      %v1436 = vpack.c.b16 %v1384, %v1382
      %v1437 = vpack.c.b16 %v1385, %v1383
      %v1438 = vpack.c.b16 %v1388, %v1386
      %v1439 = vpack.c.b16 %v1389, %v1387
      %v1440 = vpack.c.b16 %v1392, %v1390
      %v1441 = vpack.c.b16 %v1393, %v1391
      %v1442 = vpack.c.b16 %v1396, %v1394
      %v1443 = vpack.c.b16 %v1397, %v1395
      %v1444 = vpack.c.b16 %v1400, %v1398
      %v1445 = vpack.c.b16 %v1401, %v1399
      %v1446 = vpack.c.b16 %v1404, %v1402
      %v1447 = vpack.c.b16 %v1405, %v1403
      %v1448 = vpack.c.b16 %v1408, %v1406
      %v1449 = vpack.c.b16 %v1409, %v1407
      %v1450 = vpack.c.b16 %v1412, %v1410
      %v1451 = vpack.c.b16 %v1413, %v1411
      %v1452 = vpack.c.b16 %v1416, %v1414
      %v1453 = vpack.c.b16 %v1417, %v1415
      %v1454 = vpack.c.b16 %v1420, %v1418
      %v1455 = vpack.c.b16 %v1421, %v1419
      %v1456 = vpack.c.b16 %v1424, %v1422
      %v1457 = vpack.c.b16 %v1425, %v1423
      %1490 = vmatprep.subr.bf16.mxu0 %v1441
      %1491 = vmatpush1.bf16.msra.mxu0 %v1440
      %1492 = vmatprep.subr.bf16.mxu0 %v1439
      %1493 = vmatpush1.bf16.msra.mxu0 %v1438
      %1494 = vmatprep.subr.bf16.mxu0 %v1437
      %1495 = vmatpush1.bf16.msra.mxu0 %v1436
      %1496 = vmatprep.subr.bf16.mxu0 %v1435
      %1497 = vmatpush1.bf16.msra.mxu0 %v1434
      %1498 = vmatprep.subr.bf16.mxu0 %v1433
      %1499 = vmatpush1.bf16.msra.mxu0 %v1432
      %1500 = vmatprep.subr.bf16.mxu0 %v1431
      %1501 = vmatpush1.bf16.msra.mxu0 %v1430
      %1502 = vmatprep.subr.bf16.mxu0 %v1429
      %1503 = vmatpush1.bf16.msra.mxu0 %v1428
      %1504 = vmatprep.subr.bf16.mxu0 %v1427
      %1505 = vmatpush1.bf16.msra.mxu0 %v1426
      %1506 = vmatprep.subr.bf16.mxu0 %v1457
      %1507 = vmatpush2.bf16.msra.mxu0 %v1456
      %1508 = vmatprep.subr.bf16.mxu0 %v1455
      %1509 = vmatpush2.bf16.msra.mxu0 %v1454
      %1510 = vmatprep.subr.bf16.mxu0 %v1453
      %1511 = vmatpush2.bf16.msra.mxu0 %v1452
      %1512 = vmatprep.subr.bf16.mxu0 %v1451
      %1513 = vmatpush2.bf16.msra.mxu0 %v1450
      %1514 = vmatprep.subr.bf16.mxu0 %v1449
      %1515 = vmatpush2.bf16.msra.mxu0 %v1448
      %1516 = vmatprep.subr.bf16.mxu0 %v1447
      %1517 = vmatpush2.bf16.msra.mxu0 %v1446
      %1518 = vmatprep.subr.bf16.mxu0 %v1445
      %1519 = vmatpush2.bf16.msra.mxu0 %v1444
      %1520 = vmatprep.subr.bf16.mxu0 %v1443
      %1521 = vmatpush2.bf16.msra.mxu0 %v1442
      %1522 = vmatprep.mubr.bf16.mxu0 %v569
      %1523 = vmatmul.mubr.bf16.gmra.mxu0 %v568
      %v1524 = vpop.f32.mrf.mxu0
      %v1525 = vadd.f32 %v1323, %v1524
      %v1526 = vpop.f32.mrf.mxu0
      %v1527 = vadd.f32 %v1327, %v1526
      %v1528 = vpop.f32.mrf.mxu0
      %v1529 = vadd.f32 %v1323, %v1528
      %v1530 = vpop.f32.mrf.mxu0
      %v1531 = vadd.f32 %v1327, %v1530
      %1532 = vmatprep.mubr.bf16.mxu0 %v571
      %1533 = vmatmul.mubr.bf16.gmra.mxu0 %v570
      %v1534 = vpop.f32.mrf.mxu0
      %v1535 = vadd.f32 %v1323, %v1534
      %v1536 = vpop.f32.mrf.mxu0
      %v1537 = vadd.f32 %v1327, %v1536
      %v1538 = vpop.f32.mrf.mxu0
      %v1539 = vadd.f32 %v1323, %v1538
      %v1540 = vpop.f32.mrf.mxu0
      %v1541 = vadd.f32 %v1327, %v1540
      %1542 = vmatprep.mubr.bf16.mxu0 %v573
      %1543 = vmatmul.mubr.bf16.gmra.mxu0 %v572
      %v1544 = vpop.f32.mrf.mxu0
      %v1545 = vadd.f32 %v1323, %v1544
      %v1546 = vpop.f32.mrf.mxu0
      %v1547 = vadd.f32 %v1327, %v1546
      %v1548 = vpop.f32.mrf.mxu0
      %v1549 = vadd.f32 %v1323, %v1548
      %v1550 = vpop.f32.mrf.mxu0
      %v1551 = vadd.f32 %v1327, %v1550
      %1552 = vmatprep.mubr.bf16.mxu0 %v575
      %1553 = vmatmul.mubr.bf16.gmra.mxu0 %v574
      %v1554 = vpop.f32.mrf.mxu0
      %v1555 = vadd.f32 %v1323, %v1554
      %v1556 = vpop.f32.mrf.mxu0
      %v1557 = vadd.f32 %v1327, %v1556
      %v1558 = vpop.f32.mrf.mxu0
      %v1559 = vadd.f32 %v1323, %v1558
      %v1560 = vpop.f32.mrf.mxu0
      %v1561 = vadd.f32 %v1327, %v1560
      %1562 = vmatprep.mubr.bf16.mxu0 %v577
      %1563 = vmatmul.mubr.bf16.gmra.mxu0 %v576
      %v1564 = vpop.f32.mrf.mxu0
      %v1565 = vadd.f32 %v1323, %v1564
      %v1566 = vpop.f32.mrf.mxu0
      %v1567 = vadd.f32 %v1327, %v1566
      %v1568 = vpop.f32.mrf.mxu0
      %v1569 = vadd.f32 %v1323, %v1568
      %v1570 = vpop.f32.mrf.mxu0
      %v1571 = vadd.f32 %v1327, %v1570
      %1572 = vmatprep.mubr.bf16.mxu0 %v579
      %1573 = vmatmul.mubr.bf16.gmra.mxu0 %v578
      %v1574 = vpop.f32.mrf.mxu0
      %v1575 = vadd.f32 %v1323, %v1574
      %v1576 = vpop.f32.mrf.mxu0
      %v1577 = vadd.f32 %v1327, %v1576
      %v1578 = vpop.f32.mrf.mxu0
      %v1579 = vadd.f32 %v1323, %v1578
      %v1580 = vpop.f32.mrf.mxu0
      %v1581 = vadd.f32 %v1327, %v1580
      %1582 = vmatprep.mubr.bf16.mxu0 %v581
      %1583 = vmatmul.mubr.bf16.gmra.mxu0 %v580
      %v1584 = vpop.f32.mrf.mxu0
      %v1585 = vadd.f32 %v1323, %v1584
      %v1586 = vpop.f32.mrf.mxu0
      %v1587 = vadd.f32 %v1327, %v1586
      %v1588 = vpop.f32.mrf.mxu0
      %v1589 = vadd.f32 %v1323, %v1588
      %v1590 = vpop.f32.mrf.mxu0
      %v1591 = vadd.f32 %v1327, %v1590
      %1592 = vmatprep.mubr.bf16.mxu0 %v583
      %1593 = vmatmul.mubr.bf16.gmra.mxu0 %v582
      %v1594 = vpop.f32.mrf.mxu0
      %v1595 = vadd.f32 %v1323, %v1594
      %v1596 = vpop.f32.mrf.mxu0
      %v1597 = vadd.f32 %v1327, %v1596
      %v1598 = vpop.f32.mrf.mxu0
      %v1599 = vadd.f32 %v1323, %v1598
      %v1600 = vpop.f32.mrf.mxu0
      %v1601 = vadd.f32 %v1327, %v1600
      %1602 = vdwg.mxu0
      %v1603 = vmul.f32 %v1525, %v1527
      %v1604 = vmul.f32 %v1529, %v1531
      %v1605 = vmul.f32 %v1535, %v1537
      %v1606 = vmul.f32 %v1539, %v1541
      %v1607 = vmul.f32 %v1545, %v1547
      %v1608 = vmul.f32 %v1549, %v1551
      %v1609 = vmul.f32 %v1555, %v1557
      %v1610 = vmul.f32 %v1559, %v1561
      %v1611 = vmul.f32 %v1565, %v1567
      %v1612 = vmul.f32 %v1569, %v1571
      %v1613 = vmul.f32 %v1575, %v1577
      %v1614 = vmul.f32 %v1579, %v1581
      %v1615 = vmul.f32 %v1585, %v1587
      %v1616 = vmul.f32 %v1589, %v1591
      %v1617 = vmul.f32 %v1595, %v1597
      %v1618 = vmul.f32 %v1599, %v1601
      %v1619 = vadd.f32 %v1268, %v1603
      %v1620 = vadd.f32 %v1269, %v1604
      %v1621 = vadd.f32 %v1270, %v1605
      %v1622 = vadd.f32 %v1271, %v1606
      %v1623 = vadd.f32 %v1272, %v1607
      %v1624 = vadd.f32 %v1273, %v1608
      %v1625 = vadd.f32 %v1274, %v1609
      %v1626 = vadd.f32 %v1275, %v1610
      %v1627 = vadd.f32 %v1276, %v1611
      %v1628 = vadd.f32 %v1277, %v1612
      %v1629 = vadd.f32 %v1278, %v1613
      %v1630 = vadd.f32 %v1279, %v1614
      %v1631 = vadd.f32 %v1280, %v1615
      %v1632 = vadd.f32 %v1281, %v1616
      %v1633 = vadd.f32 %v1282, %v1617
      %v1634 = vadd.f32 %v1283, %v1618
      %s1635 = scalar_lea.vmem %s3, 768
      %v1636 = vld [vmem:[%s1635] sm:$0xff]
      %v1637 = vld [vmem:[%s1635 + $0x8] sm:$0xff]
      %v1638 = vld [vmem:[%s1635 + $0x10] sm:$0xff]
      %v1639 = vld [vmem:[%s1635 + $0x18] sm:$0xff]
      %v1640 = vld [vmem:[%s1635 + $0x20] sm:$0xff]
      %v1641 = vld [vmem:[%s1635 + $0x28] sm:$0xff]
      %v1642 = vld [vmem:[%s1635 + $0x30] sm:$0xff]
      %v1643 = vld [vmem:[%s1635 + $0x38] sm:$0xff]
      %v1644 = vld [vmem:[%s1635 + $0x40] sm:$0xff]
      %v1645 = vld [vmem:[%s1635 + $0x48] sm:$0xff]
      %v1646 = vld [vmem:[%s1635 + $0x50] sm:$0xff]
      %v1647 = vld [vmem:[%s1635 + $0x58] sm:$0xff]
      %v1648 = vld [vmem:[%s1635 + $0x60] sm:$0xff]
      %v1649 = vld [vmem:[%s1635 + $0x68] sm:$0xff]
      %v1650 = vld [vmem:[%s1635 + $0x70] sm:$0xff]
      %v1651 = vld [vmem:[%s1635 + $0x78] sm:$0xff]
      %v1652 = vld [vmem:[%s1635 + $0x80] sm:$0xff]
      %v1653 = vld [vmem:[%s1635 + $0x88] sm:$0xff]
      %v1654 = vld [vmem:[%s1635 + $0x90] sm:$0xff]
      %v1655 = vld [vmem:[%s1635 + $0x98] sm:$0xff]
      %v1656 = vld [vmem:[%s1635 + $0xa0] sm:$0xff]
      %v1657 = vld [vmem:[%s1635 + $0xa8] sm:$0xff]
      %v1658 = vld [vmem:[%s1635 + $0xb0] sm:$0xff]
      %v1659 = vld [vmem:[%s1635 + $0xb8] sm:$0xff]
      %v1660 = vld [vmem:[%s1635 + $0xc0] sm:$0xff]
      %v1661 = vld [vmem:[%s1635 + $0xc8] sm:$0xff]
      %v1662 = vld [vmem:[%s1635 + $0xd0] sm:$0xff]
      %v1663 = vld [vmem:[%s1635 + $0xd8] sm:$0xff]
      %v1664 = vld [vmem:[%s1635 + $0xe0] sm:$0xff]
      %v1665 = vld [vmem:[%s1635 + $0xe8] sm:$0xff]
      %v1666 = vld [vmem:[%s1635 + $0xf0] sm:$0xff]
      %v1667 = vld [vmem:[%s1635 + $0xf8] sm:$0xff]
      %s1668 = scalar_lea.vmem %s4, 6
      %v1669 = vld [vmem:[%s1668] sm:$0x3]
      %v1671 = vlaneseq
      %v1672 = vshrl.u32 %v1671, 7
      %v1673 = vsub.s32 0, %v1672
      %v1674 = vrot.slane %v1669, %v1673
      %v1675 = vlaneseq
      %v1676 = vshrl.u32 %v1675, 7
      %v1677 = vsub.s32 1, %v1676
      %v1678 = vrot.slane %v1669, %v1677
      %v1713 = vunpack.c.l.b16 %v1636
      %v1714 = vunpack.c.h.b16 %v1636
      %v1715 = vunpack.c.l.b16 %v1637
      %v1716 = vunpack.c.h.b16 %v1637
      %v1717 = vunpack.c.l.b16 %v1638
      %v1718 = vunpack.c.h.b16 %v1638
      %v1719 = vunpack.c.l.b16 %v1639
      %v1720 = vunpack.c.h.b16 %v1639
      %v1721 = vunpack.c.l.b16 %v1640
      %v1722 = vunpack.c.h.b16 %v1640
      %v1723 = vunpack.c.l.b16 %v1641
      %v1724 = vunpack.c.h.b16 %v1641
      %v1725 = vunpack.c.l.b16 %v1642
      %v1726 = vunpack.c.h.b16 %v1642
      %v1727 = vunpack.c.l.b16 %v1643
      %v1728 = vunpack.c.h.b16 %v1643
      %v1729 = vunpack.c.l.b16 %v1644
      %v1730 = vunpack.c.h.b16 %v1644
      %v1731 = vunpack.c.l.b16 %v1645
      %v1732 = vunpack.c.h.b16 %v1645
      %v1733 = vunpack.c.l.b16 %v1646
      %v1734 = vunpack.c.h.b16 %v1646
      %v1735 = vunpack.c.l.b16 %v1647
      %v1736 = vunpack.c.h.b16 %v1647
      %v1737 = vunpack.c.l.b16 %v1648
      %v1738 = vunpack.c.h.b16 %v1648
      %v1739 = vunpack.c.l.b16 %v1649
      %v1740 = vunpack.c.h.b16 %v1649
      %v1741 = vunpack.c.l.b16 %v1650
      %v1742 = vunpack.c.h.b16 %v1650
      %v1743 = vunpack.c.l.b16 %v1651
      %v1744 = vunpack.c.h.b16 %v1651
      %v1745 = vunpack.c.l.b16 %v1652
      %v1746 = vunpack.c.h.b16 %v1652
      %v1747 = vunpack.c.l.b16 %v1653
      %v1748 = vunpack.c.h.b16 %v1653
      %v1749 = vunpack.c.l.b16 %v1654
      %v1750 = vunpack.c.h.b16 %v1654
      %v1751 = vunpack.c.l.b16 %v1655
      %v1752 = vunpack.c.h.b16 %v1655
      %v1753 = vunpack.c.l.b16 %v1656
      %v1754 = vunpack.c.h.b16 %v1656
      %v1755 = vunpack.c.l.b16 %v1657
      %v1756 = vunpack.c.h.b16 %v1657
      %v1757 = vunpack.c.l.b16 %v1658
      %v1758 = vunpack.c.h.b16 %v1658
      %v1759 = vunpack.c.l.b16 %v1659
      %v1760 = vunpack.c.h.b16 %v1659
      %v1761 = vunpack.c.l.b16 %v1660
      %v1762 = vunpack.c.h.b16 %v1660
      %v1763 = vunpack.c.l.b16 %v1661
      %v1764 = vunpack.c.h.b16 %v1661
      %v1765 = vunpack.c.l.b16 %v1662
      %v1766 = vunpack.c.h.b16 %v1662
      %v1767 = vunpack.c.l.b16 %v1663
      %v1768 = vunpack.c.h.b16 %v1663
      %v1769 = vunpack.c.l.b16 %v1664
      %v1770 = vunpack.c.h.b16 %v1664
      %v1771 = vunpack.c.l.b16 %v1665
      %v1772 = vunpack.c.h.b16 %v1665
      %v1773 = vunpack.c.l.b16 %v1666
      %v1774 = vunpack.c.h.b16 %v1666
      %v1775 = vunpack.c.l.b16 %v1667
      %v1776 = vunpack.c.h.b16 %v1667
      %v1777 = vpack.c.b16 %v1715, %v1713
      %v1778 = vpack.c.b16 %v1716, %v1714
      %v1779 = vpack.c.b16 %v1719, %v1717
      %v1780 = vpack.c.b16 %v1720, %v1718
      %v1781 = vpack.c.b16 %v1723, %v1721
      %v1782 = vpack.c.b16 %v1724, %v1722
      %v1783 = vpack.c.b16 %v1727, %v1725
      %v1784 = vpack.c.b16 %v1728, %v1726
      %v1785 = vpack.c.b16 %v1731, %v1729
      %v1786 = vpack.c.b16 %v1732, %v1730
      %v1787 = vpack.c.b16 %v1735, %v1733
      %v1788 = vpack.c.b16 %v1736, %v1734
      %v1789 = vpack.c.b16 %v1739, %v1737
      %v1790 = vpack.c.b16 %v1740, %v1738
      %v1791 = vpack.c.b16 %v1743, %v1741
      %v1792 = vpack.c.b16 %v1744, %v1742
      %v1793 = vpack.c.b16 %v1747, %v1745
      %v1794 = vpack.c.b16 %v1748, %v1746
      %v1795 = vpack.c.b16 %v1751, %v1749
      %v1796 = vpack.c.b16 %v1752, %v1750
      %v1797 = vpack.c.b16 %v1755, %v1753
      %v1798 = vpack.c.b16 %v1756, %v1754
      %v1799 = vpack.c.b16 %v1759, %v1757
      %v1800 = vpack.c.b16 %v1760, %v1758
      %v1801 = vpack.c.b16 %v1763, %v1761
      %v1802 = vpack.c.b16 %v1764, %v1762
      %v1803 = vpack.c.b16 %v1767, %v1765
      %v1804 = vpack.c.b16 %v1768, %v1766
      %v1805 = vpack.c.b16 %v1771, %v1769
      %v1806 = vpack.c.b16 %v1772, %v1770
      %v1807 = vpack.c.b16 %v1775, %v1773
      %v1808 = vpack.c.b16 %v1776, %v1774
      %1841 = vmatprep.subr.bf16.mxu0 %v1792
      %1842 = vmatpush1.bf16.msra.mxu0 %v1791
      %1843 = vmatprep.subr.bf16.mxu0 %v1790
      %1844 = vmatpush1.bf16.msra.mxu0 %v1789
      %1845 = vmatprep.subr.bf16.mxu0 %v1788
      %1846 = vmatpush1.bf16.msra.mxu0 %v1787
      %1847 = vmatprep.subr.bf16.mxu0 %v1786
      %1848 = vmatpush1.bf16.msra.mxu0 %v1785
      %1849 = vmatprep.subr.bf16.mxu0 %v1784
      %1850 = vmatpush1.bf16.msra.mxu0 %v1783
      %1851 = vmatprep.subr.bf16.mxu0 %v1782
      %1852 = vmatpush1.bf16.msra.mxu0 %v1781
      %1853 = vmatprep.subr.bf16.mxu0 %v1780
      %1854 = vmatpush1.bf16.msra.mxu0 %v1779
      %1855 = vmatprep.subr.bf16.mxu0 %v1778
      %1856 = vmatpush1.bf16.msra.mxu0 %v1777
      %1857 = vmatprep.subr.bf16.mxu0 %v1808
      %1858 = vmatpush2.bf16.msra.mxu0 %v1807
      %1859 = vmatprep.subr.bf16.mxu0 %v1806
      %1860 = vmatpush2.bf16.msra.mxu0 %v1805
      %1861 = vmatprep.subr.bf16.mxu0 %v1804
      %1862 = vmatpush2.bf16.msra.mxu0 %v1803
      %1863 = vmatprep.subr.bf16.mxu0 %v1802
      %1864 = vmatpush2.bf16.msra.mxu0 %v1801
      %1865 = vmatprep.subr.bf16.mxu0 %v1800
      %1866 = vmatpush2.bf16.msra.mxu0 %v1799
      %1867 = vmatprep.subr.bf16.mxu0 %v1798
      %1868 = vmatpush2.bf16.msra.mxu0 %v1797
      %1869 = vmatprep.subr.bf16.mxu0 %v1796
      %1870 = vmatpush2.bf16.msra.mxu0 %v1795
      %1871 = vmatprep.subr.bf16.mxu0 %v1794
      %1872 = vmatpush2.bf16.msra.mxu0 %v1793
      %1873 = vmatprep.mubr.bf16.mxu0 %v569
      %1874 = vmatmul.mubr.bf16.gmra.mxu0 %v568
      %v1875 = vpop.f32.mrf.mxu0
      %v1876 = vadd.f32 %v1674, %v1875
      %v1877 = vpop.f32.mrf.mxu0
      %v1878 = vadd.f32 %v1678, %v1877
      %v1879 = vpop.f32.mrf.mxu0
      %v1880 = vadd.f32 %v1674, %v1879
      %v1881 = vpop.f32.mrf.mxu0
      %v1882 = vadd.f32 %v1678, %v1881
      %1883 = vmatprep.mubr.bf16.mxu0 %v571
      %1884 = vmatmul.mubr.bf16.gmra.mxu0 %v570
      %v1885 = vpop.f32.mrf.mxu0
      %v1886 = vadd.f32 %v1674, %v1885
      %v1887 = vpop.f32.mrf.mxu0
      %v1888 = vadd.f32 %v1678, %v1887
      %v1889 = vpop.f32.mrf.mxu0
      %v1890 = vadd.f32 %v1674, %v1889
      %v1891 = vpop.f32.mrf.mxu0
      %v1892 = vadd.f32 %v1678, %v1891
      %1893 = vmatprep.mubr.bf16.mxu0 %v573
      %1894 = vmatmul.mubr.bf16.gmra.mxu0 %v572
      %v1895 = vpop.f32.mrf.mxu0
      %v1896 = vadd.f32 %v1674, %v1895
      %v1897 = vpop.f32.mrf.mxu0
      %v1898 = vadd.f32 %v1678, %v1897
      %v1899 = vpop.f32.mrf.mxu0
      %v1900 = vadd.f32 %v1674, %v1899
      %v1901 = vpop.f32.mrf.mxu0
      %v1902 = vadd.f32 %v1678, %v1901
      %1903 = vmatprep.mubr.bf16.mxu0 %v575
      %1904 = vmatmul.mubr.bf16.gmra.mxu0 %v574
      %v1905 = vpop.f32.mrf.mxu0
      %v1906 = vadd.f32 %v1674, %v1905
      %v1907 = vpop.f32.mrf.mxu0
      %v1908 = vadd.f32 %v1678, %v1907
      %v1909 = vpop.f32.mrf.mxu0
      %v1910 = vadd.f32 %v1674, %v1909
      %v1911 = vpop.f32.mrf.mxu0
      %v1912 = vadd.f32 %v1678, %v1911
      %1913 = vmatprep.mubr.bf16.mxu0 %v577
      %1914 = vmatmul.mubr.bf16.gmra.mxu0 %v576
      %v1915 = vpop.f32.mrf.mxu0
      %v1916 = vadd.f32 %v1674, %v1915
      %v1917 = vpop.f32.mrf.mxu0
      %v1918 = vadd.f32 %v1678, %v1917
      %v1919 = vpop.f32.mrf.mxu0
      %v1920 = vadd.f32 %v1674, %v1919
      %v1921 = vpop.f32.mrf.mxu0
      %v1922 = vadd.f32 %v1678, %v1921
      %1923 = vmatprep.mubr.bf16.mxu0 %v579
      %1924 = vmatmul.mubr.bf16.gmra.mxu0 %v578
      %v1925 = vpop.f32.mrf.mxu0
      %v1926 = vadd.f32 %v1674, %v1925
      %v1927 = vpop.f32.mrf.mxu0
      %v1928 = vadd.f32 %v1678, %v1927
      %v1929 = vpop.f32.mrf.mxu0
      %v1930 = vadd.f32 %v1674, %v1929
      %v1931 = vpop.f32.mrf.mxu0
      %v1932 = vadd.f32 %v1678, %v1931
      %1933 = vmatprep.mubr.bf16.mxu0 %v581
      %1934 = vmatmul.mubr.bf16.gmra.mxu0 %v580
      %v1935 = vpop.f32.mrf.mxu0
      %v1936 = vadd.f32 %v1674, %v1935
      %v1937 = vpop.f32.mrf.mxu0
      %v1938 = vadd.f32 %v1678, %v1937
      %v1939 = vpop.f32.mrf.mxu0
      %v1940 = vadd.f32 %v1674, %v1939
      %v1941 = vpop.f32.mrf.mxu0
      %v1942 = vadd.f32 %v1678, %v1941
      %1943 = vmatprep.mubr.bf16.mxu0 %v583
      %1944 = vmatmul.mubr.bf16.gmra.mxu0 %v582
      %v1945 = vpop.f32.mrf.mxu0
      %v1946 = vadd.f32 %v1674, %v1945
      %v1947 = vpop.f32.mrf.mxu0
      %v1948 = vadd.f32 %v1678, %v1947
      %v1949 = vpop.f32.mrf.mxu0
      %v1950 = vadd.f32 %v1674, %v1949
      %v1951 = vpop.f32.mrf.mxu0
      %v1952 = vadd.f32 %v1678, %v1951
      %1953 = vdwg.mxu0
      %v1954 = vmul.f32 %v1876, %v1878
      %v1955 = vmul.f32 %v1880, %v1882
      %v1956 = vmul.f32 %v1886, %v1888
      %v1957 = vmul.f32 %v1890, %v1892
      %v1958 = vmul.f32 %v1896, %v1898
      %v1959 = vmul.f32 %v1900, %v1902
      %v1960 = vmul.f32 %v1906, %v1908
      %v1961 = vmul.f32 %v1910, %v1912
      %v1962 = vmul.f32 %v1916, %v1918
      %v1963 = vmul.f32 %v1920, %v1922
      %v1964 = vmul.f32 %v1926, %v1928
      %v1965 = vmul.f32 %v1930, %v1932
      %v1966 = vmul.f32 %v1936, %v1938
      %v1967 = vmul.f32 %v1940, %v1942
      %v1968 = vmul.f32 %v1946, %v1948
      %v1969 = vmul.f32 %v1950, %v1952
      %v1970 = vadd.f32 %v1619, %v1954
      %v1971 = vadd.f32 %v1620, %v1955
      %v1972 = vadd.f32 %v1621, %v1956
      %v1973 = vadd.f32 %v1622, %v1957
      %v1974 = vadd.f32 %v1623, %v1958
      %v1975 = vadd.f32 %v1624, %v1959
      %v1976 = vadd.f32 %v1625, %v1960
      %v1977 = vadd.f32 %v1626, %v1961
      %v1978 = vadd.f32 %v1627, %v1962
      %v1979 = vadd.f32 %v1628, %v1963
      %v1980 = vadd.f32 %v1629, %v1964
      %v1981 = vadd.f32 %v1630, %v1965
      %v1982 = vadd.f32 %v1631, %v1966
      %v1983 = vadd.f32 %v1632, %v1967
      %v1984 = vadd.f32 %v1633, %v1968
      %v1985 = vadd.f32 %v1634, %v1969
      %v1986 = vpack.c.bf16 %v1971, %v1970
      %v1987 = vpack.c.bf16 %v1973, %v1972
      %v1988 = vpack.c.bf16 %v1975, %v1974
      %v1989 = vpack.c.bf16 %v1977, %v1976
      %v1990 = vpack.c.bf16 %v1979, %v1978
      %v1991 = vpack.c.bf16 %v1981, %v1980
      %v1992 = vpack.c.bf16 %v1983, %v1982
      %v1993 = vpack.c.bf16 %v1985, %v1984
      %v1994 = vld [vmem:[%s5] sm:$0xf]
      %v1995 = vld [vmem:[%s5 + $0x4] sm:$0xf]
      %v1996 = vld [vmem:[%s5 + $0x8] sm:$0xf]
      %v1997 = vld [vmem:[%s5 + $0xc] sm:$0xf]
      %v1998 = vld [vmem:[%s5 + $0x10] sm:$0xf]
      %v1999 = vld [vmem:[%s5 + $0x14] sm:$0xf]
      %v2000 = vld [vmem:[%s5 + $0x18] sm:$0xf]
      %v2001 = vld [vmem:[%s5 + $0x1c] sm:$0xf]
      %v2002 = vld [vmem:[%s5 + $0x20] sm:$0xf]
      %v2003 = vld [vmem:[%s5 + $0x24] sm:$0xf]
      %v2004 = vld [vmem:[%s5 + $0x28] sm:$0xf]
      %v2005 = vld [vmem:[%s5 + $0x2c] sm:$0xf]
      %v2006 = vld [vmem:[%s5 + $0x30] sm:$0xf]
      %v2007 = vld [vmem:[%s5 + $0x34] sm:$0xf]
      %v2008 = vld [vmem:[%s5 + $0x38] sm:$0xf]
      %v2009 = vld [vmem:[%s5 + $0x3c] sm:$0xf]
      %v2010 = vld [vmem:[%s6] sm:$0x1]
      %v2012 = vlaneseq
      %v2013 = vshrl.u32 %v2012, 7
      %v2014 = vsub.s32 0, %v2013
      %v2015 = vrot.slane %v2010, %v2014
      %v2033 = vunpack.c.l.b16 %v1994
      %v2034 = vunpack.c.l.b16 %v1995
      %v2035 = vunpack.c.l.b16 %v1996
      %v2036 = vunpack.c.l.b16 %v1997
      %v2037 = vunpack.c.l.b16 %v1998
      %v2038 = vunpack.c.l.b16 %v1999
      %v2039 = vunpack.c.l.b16 %v2000
      %v2040 = vunpack.c.l.b16 %v2001
      %v2041 = vunpack.c.l.b16 %v2002
      %v2042 = vunpack.c.l.b16 %v2003
      %v2043 = vunpack.c.l.b16 %v2004
      %v2044 = vunpack.c.l.b16 %v2005
      %v2045 = vunpack.c.l.b16 %v2006
      %v2046 = vunpack.c.l.b16 %v2007
      %v2047 = vunpack.c.l.b16 %v2008
      %v2048 = vunpack.c.l.b16 %v2009
      %v2049 = vpack.c.b16 %v2034, %v2033
      %v2050 = vpack.c.b16 %v2036, %v2035
      %v2051 = vpack.c.b16 %v2038, %v2037
      %v2052 = vpack.c.b16 %v2040, %v2039
      %v2053 = vpack.c.b16 %v2042, %v2041
      %v2054 = vpack.c.b16 %v2044, %v2043
      %v2055 = vpack.c.b16 %v2046, %v2045
      %v2056 = vpack.c.b16 %v2048, %v2047
      %2065 = vmatprep.subr.bf16.mxu0 0
      %2066 = vmatpush1.bf16.msra.mxu0 %v2056
      %2067 = vmatprep.subr.bf16.mxu0 0
      %2068 = vmatpush1.bf16.msra.mxu0 %v2055
      %2069 = vmatprep.subr.bf16.mxu0 0
      %2070 = vmatpush1.bf16.msra.mxu0 %v2054
      %2071 = vmatprep.subr.bf16.mxu0 0
      %2072 = vmatpush1.bf16.msra.mxu0 %v2053
      %2073 = vmatprep.subr.bf16.mxu0 0
      %2074 = vmatpush1.bf16.msra.mxu0 %v2052
      %2075 = vmatprep.subr.bf16.mxu0 0
      %2076 = vmatpush1.bf16.msra.mxu0 %v2051
      %2077 = vmatprep.subr.bf16.mxu0 0
      %2078 = vmatpush1.bf16.msra.mxu0 %v2050
      %2079 = vmatprep.subr.bf16.mxu0 0
      %2080 = vmatpush1.bf16.msra.mxu0 %v2049
      %2081 = vmatprep.subr.bf16.mxu0 0
      %2082 = vmatpush2.bf16.msra.mxu0 0
      %2083 = vmatprep.subr.bf16.mxu0 0
      %2084 = vmatpush2.bf16.msra.mxu0 0
      %2085 = vmatprep.subr.bf16.mxu0 0
      %2086 = vmatpush2.bf16.msra.mxu0 0
      %2087 = vmatprep.subr.bf16.mxu0 0
      %2088 = vmatpush2.bf16.msra.mxu0 0
      %2089 = vmatprep.subr.bf16.mxu0 0
      %2090 = vmatpush2.bf16.msra.mxu0 0
      %2091 = vmatprep.subr.bf16.mxu0 0
      %2092 = vmatpush2.bf16.msra.mxu0 0
      %2093 = vmatprep.subr.bf16.mxu0 0
      %2094 = vmatpush2.bf16.msra.mxu0 0
      %2095 = vmatprep.subr.bf16.mxu0 0
      %2096 = vmatpush2.bf16.msra.mxu0 0
      %2097 = vmatprep.mubr.bf16.mxu0 0
      %2098 = vmatmul.mubr.bf16.gmra.mxu0 %v1986
      %v2099 = vpop.f32.mrf.mxu0
      %v2100 = vadd.f32 %v2015, %v2099
      %v2101 = vpop.f32.mrf.mxu0
      %v2102 = vpop.f32.mrf.mxu0
      %v2103 = vadd.f32 %v2015, %v2102
      %v2104 = vpop.f32.mrf.mxu0
      %2105 = vmatprep.mubr.bf16.mxu0 0
      %2106 = vmatmul.mubr.bf16.gmra.mxu0 %v1987
      %v2107 = vpop.f32.mrf.mxu0
      %v2108 = vadd.f32 %v2015, %v2107
      %v2109 = vpop.f32.mrf.mxu0
      %v2110 = vpop.f32.mrf.mxu0
      %v2111 = vadd.f32 %v2015, %v2110
      %v2112 = vpop.f32.mrf.mxu0
      %2113 = vmatprep.mubr.bf16.mxu0 0
      %2114 = vmatmul.mubr.bf16.gmra.mxu0 %v1988
      %v2115 = vpop.f32.mrf.mxu0
      %v2116 = vadd.f32 %v2015, %v2115
      %v2117 = vpop.f32.mrf.mxu0
      %v2118 = vpop.f32.mrf.mxu0
      %v2119 = vadd.f32 %v2015, %v2118
      %v2120 = vpop.f32.mrf.mxu0
      %2121 = vmatprep.mubr.bf16.mxu0 0
      %2122 = vmatmul.mubr.bf16.gmra.mxu0 %v1989
      %v2123 = vpop.f32.mrf.mxu0
      %v2124 = vadd.f32 %v2015, %v2123
      %v2125 = vpop.f32.mrf.mxu0
      %v2126 = vpop.f32.mrf.mxu0
      %v2127 = vadd.f32 %v2015, %v2126
      %v2128 = vpop.f32.mrf.mxu0
      %2129 = vmatprep.mubr.bf16.mxu0 0
      %2130 = vmatmul.mubr.bf16.gmra.mxu0 %v1990
      %v2131 = vpop.f32.mrf.mxu0
      %v2132 = vadd.f32 %v2015, %v2131
      %v2133 = vpop.f32.mrf.mxu0
      %v2134 = vpop.f32.mrf.mxu0
      %v2135 = vadd.f32 %v2015, %v2134
      %v2136 = vpop.f32.mrf.mxu0
      %2137 = vmatprep.mubr.bf16.mxu0 0
      %2138 = vmatmul.mubr.bf16.gmra.mxu0 %v1991
      %v2139 = vpop.f32.mrf.mxu0
      %v2140 = vadd.f32 %v2015, %v2139
      %v2141 = vpop.f32.mrf.mxu0
      %v2142 = vpop.f32.mrf.mxu0
      %v2143 = vadd.f32 %v2015, %v2142
      %v2144 = vpop.f32.mrf.mxu0
      %2145 = vmatprep.mubr.bf16.mxu0 0
      %2146 = vmatmul.mubr.bf16.gmra.mxu0 %v1992
      %v2147 = vpop.f32.mrf.mxu0
      %v2148 = vadd.f32 %v2015, %v2147
      %v2149 = vpop.f32.mrf.mxu0
      %v2150 = vpop.f32.mrf.mxu0
      %v2151 = vadd.f32 %v2015, %v2150
      %v2152 = vpop.f32.mrf.mxu0
      %2153 = vmatprep.mubr.bf16.mxu0 0
      %2154 = vmatmul.mubr.bf16.gmra.mxu0 %v1993
      %v2155 = vpop.f32.mrf.mxu0
      %v2156 = vadd.f32 %v2015, %v2155
      %v2157 = vpop.f32.mrf.mxu0
      %v2158 = vpop.f32.mrf.mxu0
      %v2159 = vadd.f32 %v2015, %v2158
      %v2160 = vpop.f32.mrf.mxu0
      %2161 = vdwg.mxu0
      %v2162 = vpack.c.bf16 %v2103, %v2100
      %v2163 = vpack.c.bf16 %v2111, %v2108
      %v2164 = vpack.c.bf16 %v2119, %v2116
      %v2165 = vpack.c.bf16 %v2127, %v2124
      %v2166 = vpack.c.bf16 %v2135, %v2132
      %v2167 = vpack.c.bf16 %v2143, %v2140
      %v2168 = vpack.c.bf16 %v2151, %v2148
      %v2169 = vpack.c.bf16 %v2159, %v2156
      %v2178 = vunpack.c.l.b16 %v2162
      %v2179 = vunpack.c.h.b16 %v2162
      %v2180 = vunpack.c.l.b16 %v2163
      %v2181 = vunpack.c.h.b16 %v2163
      %v2182 = vunpack.c.l.b16 %v2164
      %v2183 = vunpack.c.h.b16 %v2164
      %v2184 = vunpack.c.l.b16 %v2165
      %v2185 = vunpack.c.h.b16 %v2165
      %v2186 = vunpack.c.l.b16 %v2166
      %v2187 = vunpack.c.h.b16 %v2166
      %v2188 = vunpack.c.l.b16 %v2167
      %v2189 = vunpack.c.h.b16 %v2167
      %v2190 = vunpack.c.l.b16 %v2168
      %v2191 = vunpack.c.h.b16 %v2168
      %v2192 = vunpack.c.l.b16 %v2169
      %v2193 = vunpack.c.h.b16 %v2169
      %v2194 = vpack.c.b16 %v2178, %v2178
      %v2195 = vpack.c.b16 %v2179, %v2179
      %v2196 = vpack.c.b16 %v2180, %v2180
      %v2197 = vpack.c.b16 %v2181, %v2181
      %v2198 = vpack.c.b16 %v2182, %v2182
      %v2199 = vpack.c.b16 %v2183, %v2183
      %v2200 = vpack.c.b16 %v2184, %v2184
      %v2201 = vpack.c.b16 %v2185, %v2185
      %v2202 = vpack.c.b16 %v2186, %v2186
      %v2203 = vpack.c.b16 %v2187, %v2187
      %v2204 = vpack.c.b16 %v2188, %v2188
      %v2205 = vpack.c.b16 %v2189, %v2189
      %v2206 = vpack.c.b16 %v2190, %v2190
      %v2207 = vpack.c.b16 %v2191, %v2191
      %v2208 = vpack.c.b16 %v2192, %v2192
      %v2209 = vpack.c.b16 %v2193, %v2193
      %2226 = vst [vmem:[%s280] sm:$0xf] %v2194
      %2227 = vst [vmem:[%s280 + $0x4] sm:$0xf] %v2195
      %2228 = vst [vmem:[%s280 + $0x8] sm:$0xf] %v2196
      %2229 = vst [vmem:[%s280 + $0xc] sm:$0xf] %v2197
      %2230 = vst [vmem:[%s280 + $0x10] sm:$0xf] %v2198
      %2231 = vst [vmem:[%s280 + $0x14] sm:$0xf] %v2199
      %2232 = vst [vmem:[%s280 + $0x18] sm:$0xf] %v2200
      %2233 = vst [vmem:[%s280 + $0x1c] sm:$0xf] %v2201
      %2234 = vst [vmem:[%s280 + $0x20] sm:$0xf] %v2202
      %2235 = vst [vmem:[%s280 + $0x24] sm:$0xf] %v2203
      %2236 = vst [vmem:[%s280 + $0x28] sm:$0xf] %v2204
      %2237 = vst [vmem:[%s280 + $0x2c] sm:$0xf] %v2205
      %2238 = vst [vmem:[%s280 + $0x30] sm:$0xf] %v2206
      %2239 = vst [vmem:[%s280 + $0x34] sm:$0xf] %v2207
      %2240 = vst [vmem:[%s280 + $0x38] sm:$0xf] %v2208
      %2241 = vst [vmem:[%s280 + $0x3c] sm:$0xf] %v2209
      %s2242 = smul.u32 16, %s18
      %p2243 = scmp.lt.s32.totalorder %s2242, 31
      %s2244 = scalar_select %p2243, %s2242, 31
      %s2245 = smul.addr %s2244, 4
      %s2246 = scalar_lea.vmem %s7, %s2245
      // Predicated region
      $region49: #{mutan_forward.1} parent=47 // pred_check
        %p2247 = pneg %p188
      $region50: #{mutan_forward.1} parent=47 // pred_check_branch
        %2249 = sbr.rel (%p2247) target = $region52
      $region51: #{mutan_forward.1} parent=47 // pred_region
        %s2250 = smul.u32 16, %s18
      $region52: #{mutan_forward.1} parent=47 // pred_fallthru
        _
    $region48: #{mutan_forward.1} parent=5 // pred_fallthru
      _
    %p2251 = scmp.le.s32.totalorder 2, %s13
    // Predicated region
    $region53: #{mutan_forward.1} parent=5 // pred_check
      %p2252 = pneg %p2251
    $region54: #{mutan_forward.1} parent=5 // pred_check_branch
      %2254 = sbr.rel (%p2252) target = $region56
    $region55: #{mutan_forward.1} parent=5 // pred_region
      %s2255 = ssub.s32 %s13, 2
      // Predicated region
      $region57: #{mutan_forward.1} parent=55 // pred_check
        %p2256 = pneg %p194
      $region58: #{mutan_forward.1} parent=55 // pred_check_branch
        %2258 = sbr.rel (%p2256) target = $region60
      $region59: #{mutan_forward.1} parent=55 // pred_region
        %s2259 = smul.u32 16, %s19
        %p2260 = scmp.lt.s32.totalorder %s2259, 31
        %s2261 = scalar_select %p2260, %s2259, 31
        %s2262 = smul.addr %s2261, 4
        %s2263 = scalar_lea.vmem %s7, %s2262
      $region60: #{mutan_forward.1} parent=55 // pred_fallthru
        _
    $region56: #{mutan_forward.1} parent=5 // pred_fallthru
      _
  $region6: #{mutan_forward.1} parent=0 // loop_footer
    %s17 = sadd.s32 1, %s13
  $region7: #{mutan_forward.1} parent=0 // loop_footer_branch
    %12 = sbr.rel target = $region3
  $region8: #{mutan_forward.1} parent=0 // loop_exit
    _

// kernel: mutan_forward.1
$region0: #{mutan_forward.1}
  #allocation0 [shape = 'u32[]', space=smem, size = 0x4, offset = 0x4, fixed_abs, tag = 'smem constant byte address 0x4 - core index']
  #allocation1 [shape = 'u32[144,128]{1,0:T(1,128)}', space=vmem, size = 0x12000, scoped, tag = 'internal scratch']
  %s0 = inlined_call_operand.vmem [shape: bf16[256,128], index: 0, kind: input, shape index: {}]
  %s1 = inlined_call_operand.vmem [shape: bf16[128,256], index: 1, kind: input, shape index: {}]
  %s2 = inlined_call_operand.vmem [shape: f32[1,256], index: 2, kind: input, shape index: {}]
  %s3 = inlined_call_operand.vmem [shape: bf16[4,256,256], index: 3, kind: input, shape index: {}]
  %s4 = inlined_call_operand.vmem [shape: f32[4,1,256], index: 4, kind: input, shape index: {}]
  %s5 = inlined_call_operand.vmem [shape: bf16[128,128], index: 5, kind: input, shape index: {}]
  %s6 = inlined_call_operand.vmem [shape: f32[1,128], index: 6, kind: input, shape index: {}]
  %s7 = inlined_call_operand.vmem [shape: bf16[256,128], index: 7, kind: output, shape index: {}]
  %s8 = sld [smem:[#allocation0]]
  $region61: #{mutan_forward.1} parent=0
    _
  %s10 = ssub.s32 1, %s8
  %s11 = scalar_select 0, %s10, %s8
  loop: start=0, step=1, limit=4
  $region2: #{mutan_forward.1} parent=0 // loop_pre_header
    _
  $region3: #{mutan_forward.1} parent=0 // loop_header
    %s13 = sphi 0, %s17
    %p14 = scmp.ge.s32.totalorder %s13, 4
    %s23 = sphi 0, %s25
    %s26 = sphi 0, %s23
    %s27 = sphi 0, %s26
    %s43 = sphi 0, %s27
    %s47 = sphi 0, %s47
    %s49 = sphi 0, %s47
    %s50 = sphi 0, %s49
    %s64 = sphi 0, %s50
    %s68 = sphi 0, %s68
    %s70 = sphi 0, %s68
    %s71 = sphi 0, %s70
    %s85 = sphi 0, %s71
    %s89 = sphi 0, %s89
    %s91 = sphi 0, %s89
    %s92 = sphi 0, %s91
    %s106 = sphi 0, %s92
    %s110 = sphi 0, %s110
    %s112 = sphi 0, %s110
    %s113 = sphi 0, %s112
    %s127 = sphi 0, %s113
    %s131 = sphi 0, %s131
    %s133 = sphi 0, %s131
    %s134 = sphi 0, %s133
    %s148 = sphi 0, %s134
    %s152 = sphi 0, %s152
    %s154 = sphi 0, %s152
    %s155 = sphi 0, %s154
    %s169 = sphi 0, %s155
    %s175 = sphi 0, %s177
    %s178 = sphi 0, %s175
    %s179 = sphi 0, %s178
    %s195 = sphi 0, %s179
  $region4: #{mutan_forward.1} parent=0 // loop_header_branch
    %16 = sbr.rel (%p14) target = $region8
  $region5: #{mutan_forward.1} parent=0 // loop_body
    %s18 = ssub.s32 %s13, 1
    %s19 = ssub.s32 %s13, 2
    %s20 = sadd.s32 %s13, 1
    %s21 = ssub.s32 %s13, %s20
    %p22 = scmp.eq.s32.totalorder %s21, 0
    %s24 = sadd.s32 %s23, 1
    %s25 = scalar_select %p22, %s23, %s24
    %p28 = pneg %p22
    %p29 = scmp.eq.s32.totalorder %s13, 1
    %p30 = por %p28, %p29
    %p31 = scmp.ne.s32.totalorder %s23, %s26
    %p32 = scmp.eq.s32.totalorder %s13, 0
    %p33 = por %p31, %p32
    %p34 = scmp.ne.s32.totalorder %s23, %s26
    %p35 = scmp.eq.s32.totalorder %s18, 1
    %p36 = por %p34, %p35
    %p37 = scmp.ne.s32.totalorder %s26, %s27
    %p38 = scmp.eq.s32.totalorder %s18, 0
    %p39 = por %p37, %p38
    %p40 = scmp.ne.s32.totalorder %s26, %s27
    %p41 = scmp.eq.s32.totalorder %s19, 1
    %p42 = por %p40, %p41
    %p44 = scmp.ne.s32.totalorder %s27, %s43
    %p45 = scmp.eq.s32.totalorder %s19, 0
    %p46 = por %p44, %p45
    %s48 = sadd.s32 %s47, 1
    %p51 = scmp.eq.s32.totalorder %s13, 1
    %p52 = scmp.ne.s32.totalorder %s47, %s49
    %p53 = scmp.eq.s32.totalorder %s13, 0
    %p54 = por %p52, %p53
    %p55 = scmp.ne.s32.totalorder %s47, %s49
    %p56 = scmp.eq.s32.totalorder %s18, 1
    %p57 = por %p55, %p56
    %p58 = scmp.ne.s32.totalorder %s49, %s50
    %p59 = scmp.eq.s32.totalorder %s18, 0
    %p60 = por %p58, %p59
    %p61 = scmp.ne.s32.totalorder %s49, %s50
    %p62 = scmp.eq.s32.totalorder %s19, 1
    %p63 = por %p61, %p62
    %p65 = scmp.ne.s32.totalorder %s50, %s64
    %p66 = scmp.eq.s32.totalorder %s19, 0
    %p67 = por %p65, %p66
    %s69 = sadd.s32 %s68, 1
    %p72 = scmp.eq.s32.totalorder %s13, 1
    %p73 = scmp.ne.s32.totalorder %s68, %s70
    %p74 = scmp.eq.s32.totalorder %s13, 0
    %p75 = por %p73, %p74
    %p76 = scmp.ne.s32.totalorder %s68, %s70
    %p77 = scmp.eq.s32.totalorder %s18, 1
    %p78 = por %p76, %p77
    %p79 = scmp.ne.s32.totalorder %s70, %s71
    %p80 = scmp.eq.s32.totalorder %s18, 0
    %p81 = por %p79, %p80
    %p82 = scmp.ne.s32.totalorder %s70, %s71
    %p83 = scmp.eq.s32.totalorder %s19, 1
    %p84 = por %p82, %p83
    %p86 = scmp.ne.s32.totalorder %s71, %s85
    %p87 = scmp.eq.s32.totalorder %s19, 0
    %p88 = por %p86, %p87
    %s90 = sadd.s32 %s89, 1
    %p93 = scmp.eq.s32.totalorder %s13, 1
    %p94 = scmp.ne.s32.totalorder %s89, %s91
    %p95 = scmp.eq.s32.totalorder %s13, 0
    %p96 = por %p94, %p95
    %p97 = scmp.ne.s32.totalorder %s89, %s91
    %p98 = scmp.eq.s32.totalorder %s18, 1
    %p99 = por %p97, %p98
    %p100 = scmp.ne.s32.totalorder %s91, %s92
    %p101 = scmp.eq.s32.totalorder %s18, 0
    %p102 = por %p100, %p101
    %p103 = scmp.ne.s32.totalorder %s91, %s92
    %p104 = scmp.eq.s32.totalorder %s19, 1
    %p105 = por %p103, %p104
    %p107 = scmp.ne.s32.totalorder %s92, %s106
    %p108 = scmp.eq.s32.totalorder %s19, 0
    %p109 = por %p107, %p108
    %s111 = sadd.s32 %s110, 1
    %p114 = scmp.eq.s32.totalorder %s13, 1
    %p115 = scmp.ne.s32.totalorder %s110, %s112
    %p116 = scmp.eq.s32.totalorder %s13, 0
    %p117 = por %p115, %p116
    %p118 = scmp.ne.s32.totalorder %s110, %s112
    %p119 = scmp.eq.s32.totalorder %s18, 1
    %p120 = por %p118, %p119
    %p121 = scmp.ne.s32.totalorder %s112, %s113
    %p122 = scmp.eq.s32.totalorder %s18, 0
    %p123 = por %p121, %p122
    %p124 = scmp.ne.s32.totalorder %s112, %s113
    %p125 = scmp.eq.s32.totalorder %s19, 1
    %p126 = por %p124, %p125
    %p128 = scmp.ne.s32.totalorder %s113, %s127
    %p129 = scmp.eq.s32.totalorder %s19, 0
    %p130 = por %p128, %p129
    %s132 = sadd.s32 %s131, 1
    %p135 = scmp.eq.s32.totalorder %s13, 1
    %p136 = scmp.ne.s32.totalorder %s131, %s133
    %p137 = scmp.eq.s32.totalorder %s13, 0
    %p138 = por %p136, %p137
    %p139 = scmp.ne.s32.totalorder %s131, %s133
    %p140 = scmp.eq.s32.totalorder %s18, 1
    %p141 = por %p139, %p140
    %p142 = scmp.ne.s32.totalorder %s133, %s134
    %p143 = scmp.eq.s32.totalorder %s18, 0
    %p144 = por %p142, %p143
    %p145 = scmp.ne.s32.totalorder %s133, %s134
    %p146 = scmp.eq.s32.totalorder %s19, 1
    %p147 = por %p145, %p146
    %p149 = scmp.ne.s32.totalorder %s134, %s148
    %p150 = scmp.eq.s32.totalorder %s19, 0
    %p151 = por %p149, %p150
    %s153 = sadd.s32 %s152, 1
    %p156 = scmp.eq.s32.totalorder %s13, 1
    %p157 = scmp.ne.s32.totalorder %s152, %s154
    %p158 = scmp.eq.s32.totalorder %s13, 0
    %p159 = por %p157, %p158
    %p160 = scmp.ne.s32.totalorder %s152, %s154
    %p161 = scmp.eq.s32.totalorder %s18, 1
    %p162 = por %p160, %p161
    %p163 = scmp.ne.s32.totalorder %s154, %s155
    %p164 = scmp.eq.s32.totalorder %s18, 0
    %p165 = por %p163, %p164
    %p166 = scmp.ne.s32.totalorder %s154, %s155
    %p167 = scmp.eq.s32.totalorder %s19, 1
    %p168 = por %p166, %p167
    %p170 = scmp.ne.s32.totalorder %s155, %s169
    %p171 = scmp.eq.s32.totalorder %s19, 0
    %p172 = por %p170, %p171
    %s173 = ssub.s32 %s13, %s20
    %p174 = scmp.eq.s32.totalorder %s173, 0
    %s176 = sadd.s32 %s175, 1
    %s177 = scalar_select %p174, %s175, %s176
    %p180 = pneg %p174
    %p181 = scmp.eq.s32.totalorder %s13, 1
    %p182 = por %p180, %p181
    %p183 = scmp.ne.s32.totalorder %s175, %s178
    %p184 = scmp.eq.s32.totalorder %s13, 0
    %p185 = por %p183, %p184
    %p186 = scmp.ne.s32.totalorder %s175, %s178
    %p187 = scmp.eq.s32.totalorder %s18, 1
    %p188 = por %p186, %p187
    %p189 = scmp.ne.s32.totalorder %s178, %s179
    %p190 = scmp.eq.s32.totalorder %s18, 0
    %p191 = por %p189, %p190
    %p192 = scmp.ne.s32.totalorder %s178, %s179
    %p193 = scmp.eq.s32.totalorder %s19, 1
    %p194 = por %p192, %p193
    %p196 = scmp.ne.s32.totalorder %s179, %s195
    %p197 = scmp.eq.s32.totalorder %s19, 0
    %p198 = por %p196, %p197
    %p199 = scmp.le.s32.totalorder 1, %s13
    %p200 = scmp.lt.s32.totalorder %s13, 3
    %p201 = pnand %p199, %p200
    %p202 = pneg %p201
    // Predicated region
    $region9: #{mutan_forward.1} parent=5 // pred_check
      _
    $region10: #{mutan_forward.1} parent=5 // pred_check_branch
      %204 = sbr.rel (%p201) target = $region12
    $region11: #{mutan_forward.1} parent=5 // pred_region
      %s205 = ssub.s32 %s13, 1
      // Predicated region
      $region13: #{mutan_forward.1} parent=11 // pred_check
        %p206 = pneg %p60
      $region14: #{mutan_forward.1} parent=11 // pred_check_branch
        %208 = sbr.rel (%p206) target = $region16
      $region15: #{mutan_forward.1} parent=11 // pred_region
        _
      $region16: #{mutan_forward.1} parent=11 // pred_fallthru
        _
      // Predicated region
      $region17: #{mutan_forward.1} parent=11 // pred_check
        %p209 = pneg %p81
      $region18: #{mutan_forward.1} parent=11 // pred_check_branch
        %211 = sbr.rel (%p209) target = $region20
      $region19: #{mutan_forward.1} parent=11 // pred_region
        _
      $region20: #{mutan_forward.1} parent=11 // pred_fallthru
        _
      // Predicated region
      $region21: #{mutan_forward.1} parent=11 // pred_check
        %p212 = pneg %p102
      $region22: #{mutan_forward.1} parent=11 // pred_check_branch
        %214 = sbr.rel (%p212) target = $region24
      $region23: #{mutan_forward.1} parent=11 // pred_region
        _
      $region24: #{mutan_forward.1} parent=11 // pred_fallthru
        _
      // Predicated region
      $region25: #{mutan_forward.1} parent=11 // pred_check
        %p215 = pneg %p123
      $region26: #{mutan_forward.1} parent=11 // pred_check_branch
        %217 = sbr.rel (%p215) target = $region28
      $region27: #{mutan_forward.1} parent=11 // pred_region
        _
      $region28: #{mutan_forward.1} parent=11 // pred_fallthru
        _
      // Predicated region
      $region29: #{mutan_forward.1} parent=11 // pred_check
        %p218 = pneg %p144
      $region30: #{mutan_forward.1} parent=11 // pred_check_branch
        %220 = sbr.rel (%p218) target = $region32
      $region31: #{mutan_forward.1} parent=11 // pred_region
        _
      $region32: #{mutan_forward.1} parent=11 // pred_fallthru
        _
      // Predicated region
      $region33: #{mutan_forward.1} parent=11 // pred_check
        %p221 = pneg %p165
      $region34: #{mutan_forward.1} parent=11 // pred_check_branch
        %223 = sbr.rel (%p221) target = $region36
      $region35: #{mutan_forward.1} parent=11 // pred_region
        _
      $region36: #{mutan_forward.1} parent=11 // pred_fallthru
        _
    $region12: #{mutan_forward.1} parent=5 // pred_fallthru
      _
    %p224 = scmp.lt.s32.totalorder %s13, 2
    // Predicated region
    $region37: #{mutan_forward.1} parent=5 // pred_check
      %p225 = pneg %p224
    $region38: #{mutan_forward.1} parent=5 // pred_check_branch
      %227 = sbr.rel (%p225) target = $region40
    $region39: #{mutan_forward.1} parent=5 // pred_region
      // Predicated region
      $region41: #{mutan_forward.1} parent=39 // pred_check
        %p228 = pneg %p33
      $region42: #{mutan_forward.1} parent=39 // pred_check_branch
        %230 = sbr.rel (%p228) target = $region44
      $region43: #{mutan_forward.1} parent=39 // pred_region
        %s231 = smul.u32 16, %s13
        %p232 = scmp.lt.s32.totalorder %s231, 31
        %s233 = scalar_select %p232, %s231, 31
        %s234 = smul.addr %s233, 4
        %s235 = scalar_lea.vmem %s0, %s234
        %s236 = smul.u32 16, %s13
      $region44: #{mutan_forward.1} parent=39 // pred_fallthru
        _
    $region40: #{mutan_forward.1} parent=5 // pred_fallthru
      _
    %p237 = scmp.le.s32.totalorder 1, %s13
    %p238 = scmp.lt.s32.totalorder %s13, 3
    %p239 = pnand %p237, %p238
    %p240 = pneg %p239
    // Predicated region
    $region45: #{mutan_forward.1} parent=5 // pred_check
      _
    $region46: #{mutan_forward.1} parent=5 // pred_check_branch
      %242 = sbr.rel (%p239) target = $region48
    $region47: #{mutan_forward.1} parent=5 // pred_region
      %s243 = ssub.s32 %s13, 1
      %s244 = smul.u32 16, %s18
      %p245 = scmp.lt.s32.totalorder %s244, 31
      %s246 = scalar_select %p245, %s244, 31
      %s247 = smul.addr %s246, 4
      %s248 = scalar_lea.vmem %s0, %s247
      %p249 = pneg %p39
      %p250 = pneg %p36
      %p251 = pneg %p60
      %p252 = pneg %p57
      %p253 = pneg %p81
      %p254 = pneg %p78
      %p255 = pneg %p102
      %p256 = pneg %p99
      %p257 = pneg %p123
      %p258 = pneg %p120
      %p259 = pneg %p144
      %p260 = pneg %p141
      %p261 = pneg %p165
      %p262 = pneg %p162
      %p263 = pneg %p191
      %p264 = pneg %p188
      %s265 = smul.u32 16, %s18
      %p266 = scmp.lt.s32.totalorder %s265, 31
      %s267 = scalar_select %p266, %s265, 31
      %s268 = smul.addr %s267, 4
      %s269 = scalar_lea.vmem %s7, %s268
      %s270 = smul.u32 16, %s18
      %p271 = scmp.lt.s32.totalorder %s270, 31
      %s272 = scalar_select %p271, %s270, 31
      %s273 = smul.addr %s272, 4
      %s274 = scalar_lea.vmem %s0, %s273
      %s275 = smul.u32 16, %s18
      %s276 = smul.u32 16, %s18
      %p277 = scmp.lt.s32.totalorder %s276, 31
      %s278 = scalar_select %p277, %s276, 31
      %s279 = smul.addr %s278, 4
      %s280 = scalar_lea.vmem %s7, %s279
      %s281 = smul.u32 16, %s18
      %v283 = vld [vmem:[%s274] sm:$0xf]
      %v284 = vld [vmem:[%s274 + $0x4] sm:$0xf]
      %v285 = vld [vmem:[%s274 + $0x8] sm:$0xf]
      %v286 = vld [vmem:[%s274 + $0xc] sm:$0xf]
      %v287 = vld [vmem:[%s274 + $0x10] sm:$0xf]
      %v288 = vld [vmem:[%s274 + $0x14] sm:$0xf]
      %v289 = vld [vmem:[%s274 + $0x18] sm:$0xf]
      %v290 = vld [vmem:[%s274 + $0x1c] sm:$0xf]
      %v291 = vld [vmem:[%s274 + $0x20] sm:$0xf]
      %v292 = vld [vmem:[%s274 + $0x24] sm:$0xf]
      %v293 = vld [vmem:[%s274 + $0x28] sm:$0xf]
      %v294 = vld [vmem:[%s274 + $0x2c] sm:$0xf]
      %v295 = vld [vmem:[%s274 + $0x30] sm:$0xf]
      %v296 = vld [vmem:[%s274 + $0x34] sm:$0xf]
      %v297 = vld [vmem:[%s274 + $0x38] sm:$0xf]
      %v298 = vld [vmem:[%s274 + $0x3c] sm:$0xf]
      %v299 = vld [vmem:[%s1] sm:$0xff]
      %v300 = vld [vmem:[%s1 + $0x8] sm:$0xff]
      %v301 = vld [vmem:[%s1 + $0x10] sm:$0xff]
      %v302 = vld [vmem:[%s1 + $0x18] sm:$0xff]
      %v303 = vld [vmem:[%s1 + $0x20] sm:$0xff]
      %v304 = vld [vmem:[%s1 + $0x28] sm:$0xff]
      %v305 = vld [vmem:[%s1 + $0x30] sm:$0xff]
      %v306 = vld [vmem:[%s1 + $0x38] sm:$0xff]
      %v307 = vld [vmem:[%s1 + $0x40] sm:$0xff]
      %v308 = vld [vmem:[%s1 + $0x48] sm:$0xff]
      %v309 = vld [vmem:[%s1 + $0x50] sm:$0xff]
      %v310 = vld [vmem:[%s1 + $0x58] sm:$0xff]
      %v311 = vld [vmem:[%s1 + $0x60] sm:$0xff]
      %v312 = vld [vmem:[%s1 + $0x68] sm:$0xff]
      %v313 = vld [vmem:[%s1 + $0x70] sm:$0xff]
      %v314 = vld [vmem:[%s1 + $0x78] sm:$0xff]
      %v315 = vld [vmem:[%s2] sm:$0x3]
      %v317 = vlaneseq
      %v318 = vshrl.u32 %v317, 7
      %v319 = vsub.s32 0, %v318
      %v320 = vrot.slane %v315, %v319
      %v321 = vlaneseq
      %v322 = vshrl.u32 %v321, 7
      %v323 = vsub.s32 1, %v322
      %v324 = vrot.slane %v315, %v323
      %v343 = vunpack.c.l.b16 %v283
      %v344 = vunpack.c.l.b16 %v284
      %v345 = vunpack.c.l.b16 %v285
      %v346 = vunpack.c.l.b16 %v286
      %v347 = vunpack.c.l.b16 %v287
      %v348 = vunpack.c.l.b16 %v288
      %v349 = vunpack.c.l.b16 %v289
      %v350 = vunpack.c.l.b16 %v290
      %v351 = vunpack.c.l.b16 %v291
      %v352 = vunpack.c.l.b16 %v292
      %v353 = vunpack.c.l.b16 %v293
      %v354 = vunpack.c.l.b16 %v294
      %v355 = vunpack.c.l.b16 %v295
      %v356 = vunpack.c.l.b16 %v296
      %v357 = vunpack.c.l.b16 %v297
      %v358 = vunpack.c.l.b16 %v298
      %v359 = vpack.c.b16 %v344, %v343
      %v360 = vpack.c.b16 %v346, %v345
      %v361 = vpack.c.b16 %v348, %v347
      %v362 = vpack.c.b16 %v350, %v349
      %v363 = vpack.c.b16 %v352, %v351
      %v364 = vpack.c.b16 %v354, %v353
      %v365 = vpack.c.b16 %v356, %v355
      %v366 = vpack.c.b16 %v358, %v357
      %v391 = vunpack.c.l.b16 %v299
      %v392 = vunpack.c.h.b16 %v299
      %v393 = vunpack.c.l.b16 %v300
      %v394 = vunpack.c.h.b16 %v300
      %v395 = vunpack.c.l.b16 %v301
      %v396 = vunpack.c.h.b16 %v301
      %v397 = vunpack.c.l.b16 %v302
      %v398 = vunpack.c.h.b16 %v302
      %v399 = vunpack.c.l.b16 %v303
      %v400 = vunpack.c.h.b16 %v303
      %v401 = vunpack.c.l.b16 %v304
      %v402 = vunpack.c.h.b16 %v304
      %v403 = vunpack.c.l.b16 %v305
      %v404 = vunpack.c.h.b16 %v305
      %v405 = vunpack.c.l.b16 %v306
      %v406 = vunpack.c.h.b16 %v306
      %v407 = vunpack.c.l.b16 %v307
      %v408 = vunpack.c.h.b16 %v307
      %v409 = vunpack.c.l.b16 %v308
      %v410 = vunpack.c.h.b16 %v308
      %v411 = vunpack.c.l.b16 %v309
      %v412 = vunpack.c.h.b16 %v309
      %v413 = vunpack.c.l.b16 %v310
      %v414 = vunpack.c.h.b16 %v310
      %v415 = vunpack.c.l.b16 %v311
      %v416 = vunpack.c.h.b16 %v311
      %v417 = vunpack.c.l.b16 %v312
      %v418 = vunpack.c.h.b16 %v312
      %v419 = vunpack.c.l.b16 %v313
      %v420 = vunpack.c.h.b16 %v313
      %v421 = vunpack.c.l.b16 %v314
      %v422 = vunpack.c.h.b16 %v314
      %v423 = vpack.c.b16 %v393, %v391
      %v424 = vpack.c.b16 %v394, %v392
      %v425 = vpack.c.b16 %v397, %v395
      %v426 = vpack.c.b16 %v398, %v396
      %v427 = vpack.c.b16 %v401, %v399
      %v428 = vpack.c.b16 %v402, %v400
      %v429 = vpack.c.b16 %v405, %v403
      %v430 = vpack.c.b16 %v406, %v404
      %v431 = vpack.c.b16 %v409, %v407
      %v432 = vpack.c.b16 %v410, %v408
      %v433 = vpack.c.b16 %v413, %v411
      %v434 = vpack.c.b16 %v414, %v412
      %v435 = vpack.c.b16 %v417, %v415
      %v436 = vpack.c.b16 %v418, %v416
      %v437 = vpack.c.b16 %v421, %v419
      %v438 = vpack.c.b16 %v422, %v420
      %455 = vmatprep.subr.bf16.mxu0 %v438
      %456 = vmatpush1.bf16.msra.mxu0 %v437
      %457 = vmatprep.subr.bf16.mxu0 %v436
      %458 = vmatpush1.bf16.msra.mxu0 %v435
      %459 = vmatprep.subr.bf16.mxu0 %v434
      %460 = vmatpush1.bf16.msra.mxu0 %v433
      %461 = vmatprep.subr.bf16.mxu0 %v432
      %462 = vmatpush1.bf16.msra.mxu0 %v431
      %463 = vmatprep.subr.bf16.mxu0 %v430
      %464 = vmatpush1.bf16.msra.mxu0 %v429
      %465 = vmatprep.subr.bf16.mxu0 %v428
      %466 = vmatpush1.bf16.msra.mxu0 %v427
      %467 = vmatprep.subr.bf16.mxu0 %v426
      %468 = vmatpush1.bf16.msra.mxu0 %v425
      %469 = vmatprep.subr.bf16.mxu0 %v424
      %470 = vmatpush1.bf16.msra.mxu0 %v423
      %471 = vmatprep.subr.bf16.mxu0 0
      %472 = vmatpush2.bf16.msra.mxu0 0
      %473 = vmatprep.subr.bf16.mxu0 0
      %474 = vmatpush2.bf16.msra.mxu0 0
      %475 = vmatprep.subr.bf16.mxu0 0
      %476 = vmatpush2.bf16.msra.mxu0 0
      %477 = vmatprep.subr.bf16.mxu0 0
      %478 = vmatpush2.bf16.msra.mxu0 0
      %479 = vmatprep.subr.bf16.mxu0 0
      %480 = vmatpush2.bf16.msra.mxu0 0
      %481 = vmatprep.subr.bf16.mxu0 0
      %482 = vmatpush2.bf16.msra.mxu0 0
      %483 = vmatprep.subr.bf16.mxu0 0
      %484 = vmatpush2.bf16.msra.mxu0 0
      %485 = vmatprep.subr.bf16.mxu0 0
      %486 = vmatpush2.bf16.msra.mxu0 0
      %487 = vmatprep.mubr.bf16.mxu0 0
      %488 = vmatmul.mubr.bf16.gmra.mxu0 %v359
      %v489 = vpop.f32.mrf.mxu0
      %v490 = vadd.f32 %v320, %v489
      %v491 = vpop.f32.mrf.mxu0
      %v492 = vadd.f32 %v324, %v491
      %v493 = vpop.f32.mrf.mxu0
      %v494 = vadd.f32 %v320, %v493
      %v495 = vpop.f32.mrf.mxu0
      %v496 = vadd.f32 %v324, %v495
      %497 = vmatprep.mubr.bf16.mxu0 0
      %498 = vmatmul.mubr.bf16.gmra.mxu0 %v360
      %v499 = vpop.f32.mrf.mxu0
      %v500 = vadd.f32 %v320, %v499
      %v501 = vpop.f32.mrf.mxu0
      %v502 = vadd.f32 %v324, %v501
      %v503 = vpop.f32.mrf.mxu0
      %v504 = vadd.f32 %v320, %v503
      %v505 = vpop.f32.mrf.mxu0
      %v506 = vadd.f32 %v324, %v505
      %507 = vmatprep.mubr.bf16.mxu0 0
      %508 = vmatmul.mubr.bf16.gmra.mxu0 %v361
      %v509 = vpop.f32.mrf.mxu0
      %v510 = vadd.f32 %v320, %v509
      %v511 = vpop.f32.mrf.mxu0
      %v512 = vadd.f32 %v324, %v511
      %v513 = vpop.f32.mrf.mxu0
      %v514 = vadd.f32 %v320, %v513
      %v515 = vpop.f32.mrf.mxu0
      %v516 = vadd.f32 %v324, %v515
      %517 = vmatprep.mubr.bf16.mxu0 0
      %518 = vmatmul.mubr.bf16.gmra.mxu0 %v362
      %v519 = vpop.f32.mrf.mxu0
      %v520 = vadd.f32 %v320, %v519
      %v521 = vpop.f32.mrf.mxu0
      %v522 = vadd.f32 %v324, %v521
      %v523 = vpop.f32.mrf.mxu0
      %v524 = vadd.f32 %v320, %v523
      %v525 = vpop.f32.mrf.mxu0
      %v526 = vadd.f32 %v324, %v525
      %527 = vmatprep.mubr.bf16.mxu0 0
      %528 = vmatmul.mubr.bf16.gmra.mxu0 %v363
      %v529 = vpop.f32.mrf.mxu0
      %v530 = vadd.f32 %v320, %v529
      %v531 = vpop.f32.mrf.mxu0
      %v532 = vadd.f32 %v324, %v531
      %v533 = vpop.f32.mrf.mxu0
      %v534 = vadd.f32 %v320, %v533
      %v535 = vpop.f32.mrf.mxu0
      %v536 = vadd.f32 %v324, %v535
      %537 = vmatprep.mubr.bf16.mxu0 0
      %538 = vmatmul.mubr.bf16.gmra.mxu0 %v364
      %v539 = vpop.f32.mrf.mxu0
      %v540 = vadd.f32 %v320, %v539
      %v541 = vpop.f32.mrf.mxu0
      %v542 = vadd.f32 %v324, %v541
      %v543 = vpop.f32.mrf.mxu0
      %v544 = vadd.f32 %v320, %v543
      %v545 = vpop.f32.mrf.mxu0
      %v546 = vadd.f32 %v324, %v545
      %547 = vmatprep.mubr.bf16.mxu0 0
      %548 = vmatmul.mubr.bf16.gmra.mxu0 %v365
      %v549 = vpop.f32.mrf.mxu0
      %v550 = vadd.f32 %v320, %v549
      %v551 = vpop.f32.mrf.mxu0
      %v552 = vadd.f32 %v324, %v551
      %v553 = vpop.f32.mrf.mxu0
      %v554 = vadd.f32 %v320, %v553
      %v555 = vpop.f32.mrf.mxu0
      %v556 = vadd.f32 %v324, %v555
      %557 = vmatprep.mubr.bf16.mxu0 0
      %558 = vmatmul.mubr.bf16.gmra.mxu0 %v366
      %v559 = vpop.f32.mrf.mxu0
      %v560 = vadd.f32 %v320, %v559
      %v561 = vpop.f32.mrf.mxu0
      %v562 = vadd.f32 %v324, %v561
      %v563 = vpop.f32.mrf.mxu0
      %v564 = vadd.f32 %v320, %v563
      %v565 = vpop.f32.mrf.mxu0
      %v566 = vadd.f32 %v324, %v565
      %567 = vdwg.mxu0
      %v568 = vpack.c.bf16 %v494, %v490
      %v569 = vpack.c.bf16 %v496, %v492
      %v570 = vpack.c.bf16 %v504, %v500
      %v571 = vpack.c.bf16 %v506, %v502
      %v572 = vpack.c.bf16 %v514, %v510
      %v573 = vpack.c.bf16 %v516, %v512
      %v574 = vpack.c.bf16 %v524, %v520
      %v575 = vpack.c.bf16 %v526, %v522
      %v576 = vpack.c.bf16 %v534, %v530
      %v577 = vpack.c.bf16 %v536, %v532
      %v578 = vpack.c.bf16 %v544, %v540
      %v579 = vpack.c.bf16 %v546, %v542
      %v580 = vpack.c.bf16 %v554, %v550
      %v581 = vpack.c.bf16 %v556, %v552
      %v582 = vpack.c.bf16 %v564, %v560
      %v583 = vpack.c.bf16 %v566, %v562
      %v584 = vld [vmem:[%s3] sm:$0xff]
      %v585 = vld [vmem:[%s3 + $0x8] sm:$0xff]
      %v586 = vld [vmem:[%s3 + $0x10] sm:$0xff]
      %v587 = vld [vmem:[%s3 + $0x18] sm:$0xff]
      %v588 = vld [vmem:[%s3 + $0x20] sm:$0xff]
      %v589 = vld [vmem:[%s3 + $0x28] sm:$0xff]
      %v590 = vld [vmem:[%s3 + $0x30] sm:$0xff]
      %v591 = vld [vmem:[%s3 + $0x38] sm:$0xff]
      %v592 = vld [vmem:[%s3 + $0x40] sm:$0xff]
      %v593 = vld [vmem:[%s3 + $0x48] sm:$0xff]
      %v594 = vld [vmem:[%s3 + $0x50] sm:$0xff]
      %v595 = vld [vmem:[%s3 + $0x58] sm:$0xff]
      %v596 = vld [vmem:[%s3 + $0x60] sm:$0xff]
      %v597 = vld [vmem:[%s3 + $0x68] sm:$0xff]
      %v598 = vld [vmem:[%s3 + $0x70] sm:$0xff]
      %v599 = vld [vmem:[%s3 + $0x78] sm:$0xff]
      %v600 = vld [vmem:[%s3 + $0x80] sm:$0xff]
      %v601 = vld [vmem:[%s3 + $0x88] sm:$0xff]
      %v602 = vld [vmem:[%s3 + $0x90] sm:$0xff]
      %v603 = vld [vmem:[%s3 + $0x98] sm:$0xff]
      %v604 = vld [vmem:[%s3 + $0xa0] sm:$0xff]
      %v605 = vld [vmem:[%s3 + $0xa8] sm:$0xff]
      %v606 = vld [vmem:[%s3 + $0xb0] sm:$0xff]
      %v607 = vld [vmem:[%s3 + $0xb8] sm:$0xff]
      %v608 = vld [vmem:[%s3 + $0xc0] sm:$0xff]
      %v609 = vld [vmem:[%s3 + $0xc8] sm:$0xff]
      %v610 = vld [vmem:[%s3 + $0xd0] sm:$0xff]
      %v611 = vld [vmem:[%s3 + $0xd8] sm:$0xff]
      %v612 = vld [vmem:[%s3 + $0xe0] sm:$0xff]
      %v613 = vld [vmem:[%s3 + $0xe8] sm:$0xff]
      %v614 = vld [vmem:[%s3 + $0xf0] sm:$0xff]
      %v615 = vld [vmem:[%s3 + $0xf8] sm:$0xff]
      %v616 = vld [vmem:[%s4] sm:$0x3]
      %v618 = vlaneseq
      %v619 = vshrl.u32 %v618, 7
      %v620 = vsub.s32 0, %v619
      %v621 = vrot.slane %v616, %v620
      %v622 = vlaneseq
      %v623 = vshrl.u32 %v622, 7
      %v624 = vsub.s32 1, %v623
      %v625 = vrot.slane %v616, %v624
      %v660 = vunpack.c.l.b16 %v584
      %v661 = vunpack.c.h.b16 %v584
      %v662 = vunpack.c.l.b16 %v585
      %v663 = vunpack.c.h.b16 %v585
      %v664 = vunpack.c.l.b16 %v586
      %v665 = vunpack.c.h.b16 %v586
      %v666 = vunpack.c.l.b16 %v587
      %v667 = vunpack.c.h.b16 %v587
      %v668 = vunpack.c.l.b16 %v588
      %v669 = vunpack.c.h.b16 %v588
      %v670 = vunpack.c.l.b16 %v589
      %v671 = vunpack.c.h.b16 %v589
      %v672 = vunpack.c.l.b16 %v590
      %v673 = vunpack.c.h.b16 %v590
      %v674 = vunpack.c.l.b16 %v591
      %v675 = vunpack.c.h.b16 %v591
      %v676 = vunpack.c.l.b16 %v592
      %v677 = vunpack.c.h.b16 %v592
      %v678 = vunpack.c.l.b16 %v593
      %v679 = vunpack.c.h.b16 %v593
      %v680 = vunpack.c.l.b16 %v594
      %v681 = vunpack.c.h.b16 %v594
      %v682 = vunpack.c.l.b16 %v595
      %v683 = vunpack.c.h.b16 %v595
      %v684 = vunpack.c.l.b16 %v596
      %v685 = vunpack.c.h.b16 %v596
      %v686 = vunpack.c.l.b16 %v597
      %v687 = vunpack.c.h.b16 %v597
      %v688 = vunpack.c.l.b16 %v598
      %v689 = vunpack.c.h.b16 %v598
      %v690 = vunpack.c.l.b16 %v599
      %v691 = vunpack.c.h.b16 %v599
      %v692 = vunpack.c.l.b16 %v600
      %v693 = vunpack.c.h.b16 %v600
      %v694 = vunpack.c.l.b16 %v601
      %v695 = vunpack.c.h.b16 %v601
      %v696 = vunpack.c.l.b16 %v602
      %v697 = vunpack.c.h.b16 %v602
      %v698 = vunpack.c.l.b16 %v603
      %v699 = vunpack.c.h.b16 %v603
      %v700 = vunpack.c.l.b16 %v604
      %v701 = vunpack.c.h.b16 %v604
      %v702 = vunpack.c.l.b16 %v605
      %v703 = vunpack.c.h.b16 %v605
      %v704 = vunpack.c.l.b16 %v606
      %v705 = vunpack.c.h.b16 %v606
      %v706 = vunpack.c.l.b16 %v607
      %v707 = vunpack.c.h.b16 %v607
      %v708 = vunpack.c.l.b16 %v608
      %v709 = vunpack.c.h.b16 %v608
      %v710 = vunpack.c.l.b16 %v609
      %v711 = vunpack.c.h.b16 %v609
      %v712 = vunpack.c.l.b16 %v610
      %v713 = vunpack.c.h.b16 %v610
      %v714 = vunpack.c.l.b16 %v611
      %v715 = vunpack.c.h.b16 %v611
      %v716 = vunpack.c.l.b16 %v612
      %v717 = vunpack.c.h.b16 %v612
      %v718 = vunpack.c.l.b16 %v613
      %v719 = vunpack.c.h.b16 %v613
      %v720 = vunpack.c.l.b16 %v614
      %v721 = vunpack.c.h.b16 %v614
      %v722 = vunpack.c.l.b16 %v615
      %v723 = vunpack.c.h.b16 %v615
      %v724 = vpack.c.b16 %v662, %v660
      %v725 = vpack.c.b16 %v663, %v661
      %v726 = vpack.c.b16 %v666, %v664
      %v727 = vpack.c.b16 %v667, %v665
      %v728 = vpack.c.b16 %v670, %v668
      %v729 = vpack.c.b16 %v671, %v669
      %v730 = vpack.c.b16 %v674, %v672
      %v731 = vpack.c.b16 %v675, %v673
      %v732 = vpack.c.b16 %v678, %v676
      %v733 = vpack.c.b16 %v679, %v677
      %v734 = vpack.c.b16 %v682, %v680
      %v735 = vpack.c.b16 %v683, %v681
      %v736 = vpack.c.b16 %v686, %v684
      %v737 = vpack.c.b16 %v687, %v685
      %v738 = vpack.c.b16 %v690, %v688
      %v739 = vpack.c.b16 %v691, %v689
      %v740 = vpack.c.b16 %v694, %v692
      %v741 = vpack.c.b16 %v695, %v693
      %v742 = vpack.c.b16 %v698, %v696
      %v743 = vpack.c.b16 %v699, %v697
      %v744 = vpack.c.b16 %v702, %v700
      %v745 = vpack.c.b16 %v703, %v701
      %v746 = vpack.c.b16 %v706, %v704
      %v747 = vpack.c.b16 %v707, %v705
      %v748 = vpack.c.b16 %v710, %v708
      %v749 = vpack.c.b16 %v711, %v709
      %v750 = vpack.c.b16 %v714, %v712
      %v751 = vpack.c.b16 %v715, %v713
      %v752 = vpack.c.b16 %v718, %v716
      %v753 = vpack.c.b16 %v719, %v717
      %v754 = vpack.c.b16 %v722, %v720
      %v755 = vpack.c.b16 %v723, %v721
      %788 = vmatprep.subr.bf16.mxu0 %v739
      %789 = vmatpush1.bf16.msra.mxu0 %v738
      %790 = vmatprep.subr.bf16.mxu0 %v737
      %791 = vmatpush1.bf16.msra.mxu0 %v736
      %792 = vmatprep.subr.bf16.mxu0 %v735
      %793 = vmatpush1.bf16.msra.mxu0 %v734
      %794 = vmatprep.subr.bf16.mxu0 %v733
      %795 = vmatpush1.bf16.msra.mxu0 %v732
      %796 = vmatprep.subr.bf16.mxu0 %v731
      %797 = vmatpush1.bf16.msra.mxu0 %v730
      %798 = vmatprep.subr.bf16.mxu0 %v729
      %799 = vmatpush1.bf16.msra.mxu0 %v728
      %800 = vmatprep.subr.bf16.mxu0 %v727
      %801 = vmatpush1.bf16.msra.mxu0 %v726
      %802 = vmatprep.subr.bf16.mxu0 %v725
      %803 = vmatpush1.bf16.msra.mxu0 %v724
      %804 = vmatprep.subr.bf16.mxu0 %v755
      %805 = vmatpush2.bf16.msra.mxu0 %v754
      %806 = vmatprep.subr.bf16.mxu0 %v753
      %807 = vmatpush2.bf16.msra.mxu0 %v752
      %808 = vmatprep.subr.bf16.mxu0 %v751
      %809 = vmatpush2.bf16.msra.mxu0 %v750
      %810 = vmatprep.subr.bf16.mxu0 %v749
      %811 = vmatpush2.bf16.msra.mxu0 %v748
      %812 = vmatprep.subr.bf16.mxu0 %v747
      %813 = vmatpush2.bf16.msra.mxu0 %v746
      %814 = vmatprep.subr.bf16.mxu0 %v745
      %815 = vmatpush2.bf16.msra.mxu0 %v744
      %816 = vmatprep.subr.bf16.mxu0 %v743
      %817 = vmatpush2.bf16.msra.mxu0 %v742
      %818 = vmatprep.subr.bf16.mxu0 %v741
      %819 = vmatpush2.bf16.msra.mxu0 %v740
      %820 = vmatprep.mubr.bf16.mxu0 %v569
      %821 = vmatmul.mubr.bf16.gmra.mxu0 %v568
      %v822 = vpop.f32.mrf.mxu0
      %v823 = vadd.f32 %v621, %v822
      %v824 = vpop.f32.mrf.mxu0
      %v825 = vadd.f32 %v625, %v824
      %v826 = vpop.f32.mrf.mxu0
      %v827 = vadd.f32 %v621, %v826
      %v828 = vpop.f32.mrf.mxu0
      %v829 = vadd.f32 %v625, %v828
      %830 = vmatprep.mubr.bf16.mxu0 %v571
      %831 = vmatmul.mubr.bf16.gmra.mxu0 %v570
      %v832 = vpop.f32.mrf.mxu0
      %v833 = vadd.f32 %v621, %v832
      %v834 = vpop.f32.mrf.mxu0
      %v835 = vadd.f32 %v625, %v834
      %v836 = vpop.f32.mrf.mxu0
      %v837 = vadd.f32 %v621, %v836
      %v838 = vpop.f32.mrf.mxu0
      %v839 = vadd.f32 %v625, %v838
      %840 = vmatprep.mubr.bf16.mxu0 %v573
      %841 = vmatmul.mubr.bf16.gmra.mxu0 %v572
      %v842 = vpop.f32.mrf.mxu0
      %v843 = vadd.f32 %v621, %v842
      %v844 = vpop.f32.mrf.mxu0
      %v845 = vadd.f32 %v625, %v844
      %v846 = vpop.f32.mrf.mxu0
      %v847 = vadd.f32 %v621, %v846
      %v848 = vpop.f32.mrf.mxu0
      %v849 = vadd.f32 %v625, %v848
      %850 = vmatprep.mubr.bf16.mxu0 %v575
      %851 = vmatmul.mubr.bf16.gmra.mxu0 %v574
      %v852 = vpop.f32.mrf.mxu0
      %v853 = vadd.f32 %v621, %v852
      %v854 = vpop.f32.mrf.mxu0
      %v855 = vadd.f32 %v625, %v854
      %v856 = vpop.f32.mrf.mxu0
      %v857 = vadd.f32 %v621, %v856
      %v858 = vpop.f32.mrf.mxu0
      %v859 = vadd.f32 %v625, %v858
      %860 = vmatprep.mubr.bf16.mxu0 %v577
      %861 = vmatmul.mubr.bf16.gmra.mxu0 %v576
      %v862 = vpop.f32.mrf.mxu0
      %v863 = vadd.f32 %v621, %v862
      %v864 = vpop.f32.mrf.mxu0
      %v865 = vadd.f32 %v625, %v864
      %v866 = vpop.f32.mrf.mxu0
      %v867 = vadd.f32 %v621, %v866
      %v868 = vpop.f32.mrf.mxu0
      %v869 = vadd.f32 %v625, %v868
      %870 = vmatprep.mubr.bf16.mxu0 %v579
      %871 = vmatmul.mubr.bf16.gmra.mxu0 %v578
      %v872 = vpop.f32.mrf.mxu0
      %v873 = vadd.f32 %v621, %v872
      %v874 = vpop.f32.mrf.mxu0
      %v875 = vadd.f32 %v625, %v874
      %v876 = vpop.f32.mrf.mxu0
      %v877 = vadd.f32 %v621, %v876
      %v878 = vpop.f32.mrf.mxu0
      %v879 = vadd.f32 %v625, %v878
      %880 = vmatprep.mubr.bf16.mxu0 %v581
      %881 = vmatmul.mubr.bf16.gmra.mxu0 %v580
      %v882 = vpop.f32.mrf.mxu0
      %v883 = vadd.f32 %v621, %v882
      %v884 = vpop.f32.mrf.mxu0
      %v885 = vadd.f32 %v625, %v884
      %v886 = vpop.f32.mrf.mxu0
      %v887 = vadd.f32 %v621, %v886
      %v888 = vpop.f32.mrf.mxu0
      %v889 = vadd.f32 %v625, %v888
      %890 = vmatprep.mubr.bf16.mxu0 %v583
      %891 = vmatmul.mubr.bf16.gmra.mxu0 %v582
      %v892 = vpop.f32.mrf.mxu0
      %v893 = vadd.f32 %v621, %v892
      %v894 = vpop.f32.mrf.mxu0
      %v895 = vadd.f32 %v625, %v894
      %v896 = vpop.f32.mrf.mxu0
      %v897 = vadd.f32 %v621, %v896
      %v898 = vpop.f32.mrf.mxu0
      %v899 = vadd.f32 %v625, %v898
      %900 = vdwg.mxu0
      %v901 = vmul.f32 %v823, %v825
      %v902 = vmul.f32 %v827, %v829
      %v903 = vmul.f32 %v833, %v835
      %v904 = vmul.f32 %v837, %v839
      %v905 = vmul.f32 %v843, %v845
      %v906 = vmul.f32 %v847, %v849
      %v907 = vmul.f32 %v853, %v855
      %v908 = vmul.f32 %v857, %v859
      %v909 = vmul.f32 %v863, %v865
      %v910 = vmul.f32 %v867, %v869
      %v911 = vmul.f32 %v873, %v875
      %v912 = vmul.f32 %v877, %v879
      %v913 = vmul.f32 %v883, %v885
      %v914 = vmul.f32 %v887, %v889
      %v915 = vmul.f32 %v893, %v895
      %v916 = vmul.f32 %v897, %v899
      %v917 = vadd.f32 %v901, 0.0
      %v918 = vadd.f32 %v902, 0.0
      %v919 = vadd.f32 %v903, 0.0
      %v920 = vadd.f32 %v904, 0.0
      %v921 = vadd.f32 %v905, 0.0
      %v922 = vadd.f32 %v906, 0.0
      %v923 = vadd.f32 %v907, 0.0
      %v924 = vadd.f32 %v908, 0.0
      %v925 = vadd.f32 %v909, 0.0
      %v926 = vadd.f32 %v910, 0.0
      %v927 = vadd.f32 %v911, 0.0
      %v928 = vadd.f32 %v912, 0.0
      %v929 = vadd.f32 %v913, 0.0
      %v930 = vadd.f32 %v914, 0.0
      %v931 = vadd.f32 %v915, 0.0
      %v932 = vadd.f32 %v916, 0.0
      %s933 = scalar_lea.vmem %s3, 256
      %v934 = vld [vmem:[%s933] sm:$0xff]
      %v935 = vld [vmem:[%s933 + $0x8] sm:$0xff]
      %v936 = vld [vmem:[%s933 + $0x10] sm:$0xff]
      %v937 = vld [vmem:[%s933 + $0x18] sm:$0xff]
      %v938 = vld [vmem:[%s933 + $0x20] sm:$0xff]
      %v939 = vld [vmem:[%s933 + $0x28] sm:$0xff]
      %v940 = vld [vmem:[%s933 + $0x30] sm:$0xff]
      %v941 = vld [vmem:[%s933 + $0x38] sm:$0xff]
      %v942 = vld [vmem:[%s933 + $0x40] sm:$0xff]
      %v943 = vld [vmem:[%s933 + $0x48] sm:$0xff]
      %v944 = vld [vmem:[%s933 + $0x50] sm:$0xff]
      %v945 = vld [vmem:[%s933 + $0x58] sm:$0xff]
      %v946 = vld [vmem:[%s933 + $0x60] sm:$0xff]
      %v947 = vld [vmem:[%s933 + $0x68] sm:$0xff]
      %v948 = vld [vmem:[%s933 + $0x70] sm:$0xff]
      %v949 = vld [vmem:[%s933 + $0x78] sm:$0xff]
      %v950 = vld [vmem:[%s933 + $0x80] sm:$0xff]
      %v951 = vld [vmem:[%s933 + $0x88] sm:$0xff]
      %v952 = vld [vmem:[%s933 + $0x90] sm:$0xff]
      %v953 = vld [vmem:[%s933 + $0x98] sm:$0xff]
      %v954 = vld [vmem:[%s933 + $0xa0] sm:$0xff]
      %v955 = vld [vmem:[%s933 + $0xa8] sm:$0xff]
      %v956 = vld [vmem:[%s933 + $0xb0] sm:$0xff]
      %v957 = vld [vmem:[%s933 + $0xb8] sm:$0xff]
      %v958 = vld [vmem:[%s933 + $0xc0] sm:$0xff]
      %v959 = vld [vmem:[%s933 + $0xc8] sm:$0xff]
      %v960 = vld [vmem:[%s933 + $0xd0] sm:$0xff]
      %v961 = vld [vmem:[%s933 + $0xd8] sm:$0xff]
      %v962 = vld [vmem:[%s933 + $0xe0] sm:$0xff]
      %v963 = vld [vmem:[%s933 + $0xe8] sm:$0xff]
      %v964 = vld [vmem:[%s933 + $0xf0] sm:$0xff]
      %v965 = vld [vmem:[%s933 + $0xf8] sm:$0xff]
      %s966 = scalar_lea.vmem %s4, 2
      %v967 = vld [vmem:[%s966] sm:$0x3]
      %v969 = vlaneseq
      %v970 = vshrl.u32 %v969, 7
      %v971 = vsub.s32 0, %v970
      %v972 = vrot.slane %v967, %v971
      %v973 = vlaneseq
      %v974 = vshrl.u32 %v973, 7
      %v975 = vsub.s32 1, %v974
      %v976 = vrot.slane %v967, %v975
      %v1011 = vunpack.c.l.b16 %v934
      %v1012 = vunpack.c.h.b16 %v934
      %v1013 = vunpack.c.l.b16 %v935
      %v1014 = vunpack.c.h.b16 %v935
      %v1015 = vunpack.c.l.b16 %v936
      %v1016 = vunpack.c.h.b16 %v936
      %v1017 = vunpack.c.l.b16 %v937
      %v1018 = vunpack.c.h.b16 %v937
      %v1019 = vunpack.c.l.b16 %v938
      %v1020 = vunpack.c.h.b16 %v938
      %v1021 = vunpack.c.l.b16 %v939
      %v1022 = vunpack.c.h.b16 %v939
      %v1023 = vunpack.c.l.b16 %v940
      %v1024 = vunpack.c.h.b16 %v940
      %v1025 = vunpack.c.l.b16 %v941
      %v1026 = vunpack.c.h.b16 %v941
      %v1027 = vunpack.c.l.b16 %v942
      %v1028 = vunpack.c.h.b16 %v942
      %v1029 = vunpack.c.l.b16 %v943
      %v1030 = vunpack.c.h.b16 %v943
      %v1031 = vunpack.c.l.b16 %v944
      %v1032 = vunpack.c.h.b16 %v944
      %v1033 = vunpack.c.l.b16 %v945
      %v1034 = vunpack.c.h.b16 %v945
      %v1035 = vunpack.c.l.b16 %v946
      %v1036 = vunpack.c.h.b16 %v946
      %v1037 = vunpack.c.l.b16 %v947
      %v1038 = vunpack.c.h.b16 %v947
      %v1039 = vunpack.c.l.b16 %v948
      %v1040 = vunpack.c.h.b16 %v948
      %v1041 = vunpack.c.l.b16 %v949
      %v1042 = vunpack.c.h.b16 %v949
      %v1043 = vunpack.c.l.b16 %v950
      %v1044 = vunpack.c.h.b16 %v950
      %v1045 = vunpack.c.l.b16 %v951
      %v1046 = vunpack.c.h.b16 %v951
      %v1047 = vunpack.c.l.b16 %v952
      %v1048 = vunpack.c.h.b16 %v952
      %v1049 = vunpack.c.l.b16 %v953
      %v1050 = vunpack.c.h.b16 %v953
      %v1051 = vunpack.c.l.b16 %v954
      %v1052 = vunpack.c.h.b16 %v954
      %v1053 = vunpack.c.l.b16 %v955
      %v1054 = vunpack.c.h.b16 %v955
      %v1055 = vunpack.c.l.b16 %v956
      %v1056 = vunpack.c.h.b16 %v956
      %v1057 = vunpack.c.l.b16 %v957
      %v1058 = vunpack.c.h.b16 %v957
      %v1059 = vunpack.c.l.b16 %v958
      %v1060 = vunpack.c.h.b16 %v958
      %v1061 = vunpack.c.l.b16 %v959
      %v1062 = vunpack.c.h.b16 %v959
      %v1063 = vunpack.c.l.b16 %v960
      %v1064 = vunpack.c.h.b16 %v960
      %v1065 = vunpack.c.l.b16 %v961
      %v1066 = vunpack.c.h.b16 %v961
      %v1067 = vunpack.c.l.b16 %v962
      %v1068 = vunpack.c.h.b16 %v962
      %v1069 = vunpack.c.l.b16 %v963
      %v1070 = vunpack.c.h.b16 %v963
      %v1071 = vunpack.c.l.b16 %v964
      %v1072 = vunpack.c.h.b16 %v964
      %v1073 = vunpack.c.l.b16 %v965
      %v1074 = vunpack.c.h.b16 %v965
      %v1075 = vpack.c.b16 %v1013, %v1011
      %v1076 = vpack.c.b16 %v1014, %v1012
      %v1077 = vpack.c.b16 %v1017, %v1015
      %v1078 = vpack.c.b16 %v1018, %v1016
      %v1079 = vpack.c.b16 %v1021, %v1019
      %v1080 = vpack.c.b16 %v1022, %v1020
      %v1081 = vpack.c.b16 %v1025, %v1023
      %v1082 = vpack.c.b16 %v1026, %v1024
      %v1083 = vpack.c.b16 %v1029, %v1027
      %v1084 = vpack.c.b16 %v1030, %v1028
      %v1085 = vpack.c.b16 %v1033, %v1031
      %v1086 = vpack.c.b16 %v1034, %v1032
      %v1087 = vpack.c.b16 %v1037, %v1035
      %v1088 = vpack.c.b16 %v1038, %v1036
      %v1089 = vpack.c.b16 %v1041, %v1039
      %v1090 = vpack.c.b16 %v1042, %v1040
      %v1091 = vpack.c.b16 %v1045, %v1043
      %v1092 = vpack.c.b16 %v1046, %v1044
      %v1093 = vpack.c.b16 %v1049, %v1047
      %v1094 = vpack.c.b16 %v1050, %v1048
      %v1095 = vpack.c.b16 %v1053, %v1051
      %v1096 = vpack.c.b16 %v1054, %v1052
      %v1097 = vpack.c.b16 %v1057, %v1055
      %v1098 = vpack.c.b16 %v1058, %v1056
      %v1099 = vpack.c.b16 %v1061, %v1059
      %v1100 = vpack.c.b16 %v1062, %v1060
      %v1101 = vpack.c.b16 %v1065, %v1063
      %v1102 = vpack.c.b16 %v1066, %v1064
      %v1103 = vpack.c.b16 %v1069, %v1067
      %v1104 = vpack.c.b16 %v1070, %v1068
      %v1105 = vpack.c.b16 %v1073, %v1071
      %v1106 = vpack.c.b16 %v1074, %v1072
      %1139 = vmatprep.subr.bf16.mxu0 %v1090
      %1140 = vmatpush1.bf16.msra.mxu0 %v1089
      %1141 = vmatprep.subr.bf16.mxu0 %v1088
      %1142 = vmatpush1.bf16.msra.mxu0 %v1087
      %1143 = vmatprep.subr.bf16.mxu0 %v1086
      %1144 = vmatpush1.bf16.msra.mxu0 %v1085
      %1145 = vmatprep.subr.bf16.mxu0 %v1084
      %1146 = vmatpush1.bf16.msra.mxu0 %v1083
      %1147 = vmatprep.subr.bf16.mxu0 %v1082
      %1148 = vmatpush1.bf16.msra.mxu0 %v1081
      %1149 = vmatprep.subr.bf16.mxu0 %v1080
      %1150 = vmatpush1.bf16.msra.mxu0 %v1079
      %1151 = vmatprep.subr.bf16.mxu0 %v1078
      %1152 = vmatpush1.bf16.msra.mxu0 %v1077
      %1153 = vmatprep.subr.bf16.mxu0 %v1076
      %1154 = vmatpush1.bf16.msra.mxu0 %v1075
      %1155 = vmatprep.subr.bf16.mxu0 %v1106
      %1156 = vmatpush2.bf16.msra.mxu0 %v1105
      %1157 = vmatprep.subr.bf16.mxu0 %v1104
      %1158 = vmatpush2.bf16.msra.mxu0 %v1103
      %1159 = vmatprep.subr.bf16.mxu0 %v1102
      %1160 = vmatpush2.bf16.msra.mxu0 %v1101
      %1161 = vmatprep.subr.bf16.mxu0 %v1100
      %1162 = vmatpush2.bf16.msra.mxu0 %v1099
      %1163 = vmatprep.subr.bf16.mxu0 %v1098
      %1164 = vmatpush2.bf16.msra.mxu0 %v1097
      %1165 = vmatprep.subr.bf16.mxu0 %v1096
      %1166 = vmatpush2.bf16.msra.mxu0 %v1095
      %1167 = vmatprep.subr.bf16.mxu0 %v1094
      %1168 = vmatpush2.bf16.msra.mxu0 %v1093
      %1169 = vmatprep.subr.bf16.mxu0 %v1092
      %1170 = vmatpush2.bf16.msra.mxu0 %v1091
      %1171 = vmatprep.mubr.bf16.mxu0 %v569
      %1172 = vmatmul.mubr.bf16.gmra.mxu0 %v568
      %v1173 = vpop.f32.mrf.mxu0
      %v1174 = vadd.f32 %v972, %v1173
      %v1175 = vpop.f32.mrf.mxu0
      %v1176 = vadd.f32 %v976, %v1175
      %v1177 = vpop.f32.mrf.mxu0
      %v1178 = vadd.f32 %v972, %v1177
      %v1179 = vpop.f32.mrf.mxu0
      %v1180 = vadd.f32 %v976, %v1179
      %1181 = vmatprep.mubr.bf16.mxu0 %v571
      %1182 = vmatmul.mubr.bf16.gmra.mxu0 %v570
      %v1183 = vpop.f32.mrf.mxu0
      %v1184 = vadd.f32 %v972, %v1183
      %v1185 = vpop.f32.mrf.mxu0
      %v1186 = vadd.f32 %v976, %v1185
      %v1187 = vpop.f32.mrf.mxu0
      %v1188 = vadd.f32 %v972, %v1187
      %v1189 = vpop.f32.mrf.mxu0
      %v1190 = vadd.f32 %v976, %v1189
      %1191 = vmatprep.mubr.bf16.mxu0 %v573
      %1192 = vmatmul.mubr.bf16.gmra.mxu0 %v572
      %v1193 = vpop.f32.mrf.mxu0
      %v1194 = vadd.f32 %v972, %v1193
      %v1195 = vpop.f32.mrf.mxu0
      %v1196 = vadd.f32 %v976, %v1195
      %v1197 = vpop.f32.mrf.mxu0
      %v1198 = vadd.f32 %v972, %v1197
      %v1199 = vpop.f32.mrf.mxu0
      %v1200 = vadd.f32 %v976, %v1199
      %1201 = vmatprep.mubr.bf16.mxu0 %v575
      %1202 = vmatmul.mubr.bf16.gmra.mxu0 %v574
      %v1203 = vpop.f32.mrf.mxu0
      %v1204 = vadd.f32 %v972, %v1203
      %v1205 = vpop.f32.mrf.mxu0
      %v1206 = vadd.f32 %v976, %v1205
      %v1207 = vpop.f32.mrf.mxu0
      %v1208 = vadd.f32 %v972, %v1207
      %v1209 = vpop.f32.mrf.mxu0
      %v1210 = vadd.f32 %v976, %v1209
      %1211 = vmatprep.mubr.bf16.mxu0 %v577
      %1212 = vmatmul.mubr.bf16.gmra.mxu0 %v576
      %v1213 = vpop.f32.mrf.mxu0
      %v1214 = vadd.f32 %v972, %v1213
      %v1215 = vpop.f32.mrf.mxu0
      %v1216 = vadd.f32 %v976, %v1215
      %v1217 = vpop.f32.mrf.mxu0
      %v1218 = vadd.f32 %v972, %v1217
      %v1219 = vpop.f32.mrf.mxu0
      %v1220 = vadd.f32 %v976, %v1219
      %1221 = vmatprep.mubr.bf16.mxu0 %v579
      %1222 = vmatmul.mubr.bf16.gmra.mxu0 %v578
      %v1223 = vpop.f32.mrf.mxu0
      %v1224 = vadd.f32 %v972, %v1223
      %v1225 = vpop.f32.mrf.mxu0
      %v1226 = vadd.f32 %v976, %v1225
      %v1227 = vpop.f32.mrf.mxu0
      %v1228 = vadd.f32 %v972, %v1227
      %v1229 = vpop.f32.mrf.mxu0
      %v1230 = vadd.f32 %v976, %v1229
      %1231 = vmatprep.mubr.bf16.mxu0 %v581
      %1232 = vmatmul.mubr.bf16.gmra.mxu0 %v580
      %v1233 = vpop.f32.mrf.mxu0
      %v1234 = vadd.f32 %v972, %v1233
      %v1235 = vpop.f32.mrf.mxu0
      %v1236 = vadd.f32 %v976, %v1235
      %v1237 = vpop.f32.mrf.mxu0
      %v1238 = vadd.f32 %v972, %v1237
      %v1239 = vpop.f32.mrf.mxu0
      %v1240 = vadd.f32 %v976, %v1239
      %1241 = vmatprep.mubr.bf16.mxu0 %v583
      %1242 = vmatmul.mubr.bf16.gmra.mxu0 %v582
      %v1243 = vpop.f32.mrf.mxu0
      %v1244 = vadd.f32 %v972, %v1243
      %v1245 = vpop.f32.mrf.mxu0
      %v1246 = vadd.f32 %v976, %v1245
      %v1247 = vpop.f32.mrf.mxu0
      %v1248 = vadd.f32 %v972, %v1247
      %v1249 = vpop.f32.mrf.mxu0
      %v1250 = vadd.f32 %v976, %v1249
      %1251 = vdwg.mxu0
      %v1252 = vmul.f32 %v1174, %v1176
      %v1253 = vmul.f32 %v1178, %v1180
      %v1254 = vmul.f32 %v1184, %v1186
      %v1255 = vmul.f32 %v1188, %v1190
      %v1256 = vmul.f32 %v1194, %v1196
      %v1257 = vmul.f32 %v1198, %v1200
      %v1258 = vmul.f32 %v1204, %v1206
      %v1259 = vmul.f32 %v1208, %v1210
      %v1260 = vmul.f32 %v1214, %v1216
      %v1261 = vmul.f32 %v1218, %v1220
      %v1262 = vmul.f32 %v1224, %v1226
      %v1263 = vmul.f32 %v1228, %v1230
      %v1264 = vmul.f32 %v1234, %v1236
      %v1265 = vmul.f32 %v1238, %v1240
      %v1266 = vmul.f32 %v1244, %v1246
      %v1267 = vmul.f32 %v1248, %v1250
      %v1268 = vadd.f32 %v917, %v1252
      %v1269 = vadd.f32 %v918, %v1253
      %v1270 = vadd.f32 %v919, %v1254
      %v1271 = vadd.f32 %v920, %v1255
      %v1272 = vadd.f32 %v921, %v1256
      %v1273 = vadd.f32 %v922, %v1257
      %v1274 = vadd.f32 %v923, %v1258
      %v1275 = vadd.f32 %v924, %v1259
      %v1276 = vadd.f32 %v925, %v1260
      %v1277 = vadd.f32 %v926, %v1261
      %v1278 = vadd.f32 %v927, %v1262
      %v1279 = vadd.f32 %v928, %v1263
      %v1280 = vadd.f32 %v929, %v1264
      %v1281 = vadd.f32 %v930, %v1265
      %v1282 = vadd.f32 %v931, %v1266
      %v1283 = vadd.f32 %v932, %v1267
      %s1284 = scalar_lea.vmem %s3, 512
      %v1285 = vld [vmem:[%s1284] sm:$0xff]
      %v1286 = vld [vmem:[%s1284 + $0x8] sm:$0xff]
      %v1287 = vld [vmem:[%s1284 + $0x10] sm:$0xff]
      %v1288 = vld [vmem:[%s1284 + $0x18] sm:$0xff]
      %v1289 = vld [vmem:[%s1284 + $0x20] sm:$0xff]
      %v1290 = vld [vmem:[%s1284 + $0x28] sm:$0xff]
      %v1291 = vld [vmem:[%s1284 + $0x30] sm:$0xff]
      %v1292 = vld [vmem:[%s1284 + $0x38] sm:$0xff]
      %v1293 = vld [vmem:[%s1284 + $0x40] sm:$0xff]
      %v1294 = vld [vmem:[%s1284 + $0x48] sm:$0xff]
      %v1295 = vld [vmem:[%s1284 + $0x50] sm:$0xff]
      %v1296 = vld [vmem:[%s1284 + $0x58] sm:$0xff]
      %v1297 = vld [vmem:[%s1284 + $0x60] sm:$0xff]
      %v1298 = vld [vmem:[%s1284 + $0x68] sm:$0xff]
      %v1299 = vld [vmem:[%s1284 + $0x70] sm:$0xff]
      %v1300 = vld [vmem:[%s1284 + $0x78] sm:$0xff]
      %v1301 = vld [vmem:[%s1284 + $0x80] sm:$0xff]
      %v1302 = vld [vmem:[%s1284 + $0x88] sm:$0xff]
      %v1303 = vld [vmem:[%s1284 + $0x90] sm:$0xff]
      %v1304 = vld [vmem:[%s1284 + $0x98] sm:$0xff]
      %v1305 = vld [vmem:[%s1284 + $0xa0] sm:$0xff]
      %v1306 = vld [vmem:[%s1284 + $0xa8] sm:$0xff]
      %v1307 = vld [vmem:[%s1284 + $0xb0] sm:$0xff]
      %v1308 = vld [vmem:[%s1284 + $0xb8] sm:$0xff]
      %v1309 = vld [vmem:[%s1284 + $0xc0] sm:$0xff]
      %v1310 = vld [vmem:[%s1284 + $0xc8] sm:$0xff]
      %v1311 = vld [vmem:[%s1284 + $0xd0] sm:$0xff]
      %v1312 = vld [vmem:[%s1284 + $0xd8] sm:$0xff]
      %v1313 = vld [vmem:[%s1284 + $0xe0] sm:$0xff]
      %v1314 = vld [vmem:[%s1284 + $0xe8] sm:$0xff]
      %v1315 = vld [vmem:[%s1284 + $0xf0] sm:$0xff]
      %v1316 = vld [vmem:[%s1284 + $0xf8] sm:$0xff]
      %s1317 = scalar_lea.vmem %s4, 4
      %v1318 = vld [vmem:[%s1317] sm:$0x3]
      %v1320 = vlaneseq
      %v1321 = vshrl.u32 %v1320, 7
      %v1322 = vsub.s32 0, %v1321
      %v1323 = vrot.slane %v1318, %v1322
      %v1324 = vlaneseq
      %v1325 = vshrl.u32 %v1324, 7
      %v1326 = vsub.s32 1, %v1325
      %v1327 = vrot.slane %v1318, %v1326
      %v1362 = vunpack.c.l.b16 %v1285
      %v1363 = vunpack.c.h.b16 %v1285
      %v1364 = vunpack.c.l.b16 %v1286
      %v1365 = vunpack.c.h.b16 %v1286
      %v1366 = vunpack.c.l.b16 %v1287
      %v1367 = vunpack.c.h.b16 %v1287
      %v1368 = vunpack.c.l.b16 %v1288
      %v1369 = vunpack.c.h.b16 %v1288
      %v1370 = vunpack.c.l.b16 %v1289
      %v1371 = vunpack.c.h.b16 %v1289
      %v1372 = vunpack.c.l.b16 %v1290
      %v1373 = vunpack.c.h.b16 %v1290
      %v1374 = vunpack.c.l.b16 %v1291
      %v1375 = vunpack.c.h.b16 %v1291
      %v1376 = vunpack.c.l.b16 %v1292
      %v1377 = vunpack.c.h.b16 %v1292
      %v1378 = vunpack.c.l.b16 %v1293
      %v1379 = vunpack.c.h.b16 %v1293
      %v1380 = vunpack.c.l.b16 %v1294
      %v1381 = vunpack.c.h.b16 %v1294
      %v1382 = vunpack.c.l.b16 %v1295
      %v1383 = vunpack.c.h.b16 %v1295
      %v1384 = vunpack.c.l.b16 %v1296
      %v1385 = vunpack.c.h.b16 %v1296
      %v1386 = vunpack.c.l.b16 %v1297
      %v1387 = vunpack.c.h.b16 %v1297
      %v1388 = vunpack.c.l.b16 %v1298
      %v1389 = vunpack.c.h.b16 %v1298
      %v1390 = vunpack.c.l.b16 %v1299
      %v1391 = vunpack.c.h.b16 %v1299
      %v1392 = vunpack.c.l.b16 %v1300
      %v1393 = vunpack.c.h.b16 %v1300
      %v1394 = vunpack.c.l.b16 %v1301
      %v1395 = vunpack.c.h.b16 %v1301
      %v1396 = vunpack.c.l.b16 %v1302
      %v1397 = vunpack.c.h.b16 %v1302
      %v1398 = vunpack.c.l.b16 %v1303
      %v1399 = vunpack.c.h.b16 %v1303
      %v1400 = vunpack.c.l.b16 %v1304
      %v1401 = vunpack.c.h.b16 %v1304
      %v1402 = vunpack.c.l.b16 %v1305
      %v1403 = vunpack.c.h.b16 %v1305
      %v1404 = vunpack.c.l.b16 %v1306
      %v1405 = vunpack.c.h.b16 %v1306
      %v1406 = vunpack.c.l.b16 %v1307
      %v1407 = vunpack.c.h.b16 %v1307
      %v1408 = vunpack.c.l.b16 %v1308
      %v1409 = vunpack.c.h.b16 %v1308
      %v1410 = vunpack.c.l.b16 %v1309
      %v1411 = vunpack.c.h.b16 %v1309
      %v1412 = vunpack.c.l.b16 %v1310
      %v1413 = vunpack.c.h.b16 %v1310
      %v1414 = vunpack.c.l.b16 %v1311
      %v1415 = vunpack.c.h.b16 %v1311
      %v1416 = vunpack.c.l.b16 %v1312
      %v1417 = vunpack.c.h.b16 %v1312
      %v1418 = vunpack.c.l.b16 %v1313
      %v1419 = vunpack.c.h.b16 %v1313
      %v1420 = vunpack.c.l.b16 %v1314
      %v1421 = vunpack.c.h.b16 %v1314
      %v1422 = vunpack.c.l.b16 %v1315
      %v1423 = vunpack.c.h.b16 %v1315
      %v1424 = vunpack.c.l.b16 %v1316
      %v1425 = vunpack.c.h.b16 %v1316
      %v1426 = vpack.c.b16 %v1364, %v1362
      %v1427 = vpack.c.b16 %v1365, %v1363
      %v1428 = vpack.c.b16 %v1368, %v1366
      %v1429 = vpack.c.b16 %v1369, %v1367
      %v1430 = vpack.c.b16 %v1372, %v1370
      %v1431 = vpack.c.b16 %v1373, %v1371
      %v1432 = vpack.c.b16 %v1376, %v1374
      %v1433 = vpack.c.b16 %v1377, %v1375
      %v1434 = vpack.c.b16 %v1380, %v1378
      %v1435 = vpack.c.b16 %v1381, %v1379
      %v1436 = vpack.c.b16 %v1384, %v1382
      %v1437 = vpack.c.b16 %v1385, %v1383
      %v1438 = vpack.c.b16 %v1388, %v1386
      %v1439 = vpack.c.b16 %v1389, %v1387
      %v1440 = vpack.c.b16 %v1392, %v1390
      %v1441 = vpack.c.b16 %v1393, %v1391
      %v1442 = vpack.c.b16 %v1396, %v1394
      %v1443 = vpack.c.b16 %v1397, %v1395
      %v1444 = vpack.c.b16 %v1400, %v1398
      %v1445 = vpack.c.b16 %v1401, %v1399
      %v1446 = vpack.c.b16 %v1404, %v1402
      %v1447 = vpack.c.b16 %v1405, %v1403
      %v1448 = vpack.c.b16 %v1408, %v1406
      %v1449 = vpack.c.b16 %v1409, %v1407
      %v1450 = vpack.c.b16 %v1412, %v1410
      %v1451 = vpack.c.b16 %v1413, %v1411
      %v1452 = vpack.c.b16 %v1416, %v1414
      %v1453 = vpack.c.b16 %v1417, %v1415
      %v1454 = vpack.c.b16 %v1420, %v1418
      %v1455 = vpack.c.b16 %v1421, %v1419
      %v1456 = vpack.c.b16 %v1424, %v1422
      %v1457 = vpack.c.b16 %v1425, %v1423
      %1490 = vmatprep.subr.bf16.mxu0 %v1441
      %1491 = vmatpush1.bf16.msra.mxu0 %v1440
      %1492 = vmatprep.subr.bf16.mxu0 %v1439
      %1493 = vmatpush1.bf16.msra.mxu0 %v1438
      %1494 = vmatprep.subr.bf16.mxu0 %v1437
      %1495 = vmatpush1.bf16.msra.mxu0 %v1436
      %1496 = vmatprep.subr.bf16.mxu0 %v1435
      %1497 = vmatpush1.bf16.msra.mxu0 %v1434
      %1498 = vmatprep.subr.bf16.mxu0 %v1433
      %1499 = vmatpush1.bf16.msra.mxu0 %v1432
      %1500 = vmatprep.subr.bf16.mxu0 %v1431
      %1501 = vmatpush1.bf16.msra.mxu0 %v1430
      %1502 = vmatprep.subr.bf16.mxu0 %v1429
      %1503 = vmatpush1.bf16.msra.mxu0 %v1428
      %1504 = vmatprep.subr.bf16.mxu0 %v1427
      %1505 = vmatpush1.bf16.msra.mxu0 %v1426
      %1506 = vmatprep.subr.bf16.mxu0 %v1457
      %1507 = vmatpush2.bf16.msra.mxu0 %v1456
      %1508 = vmatprep.subr.bf16.mxu0 %v1455
      %1509 = vmatpush2.bf16.msra.mxu0 %v1454
      %1510 = vmatprep.subr.bf16.mxu0 %v1453
      %1511 = vmatpush2.bf16.msra.mxu0 %v1452
      %1512 = vmatprep.subr.bf16.mxu0 %v1451
      %1513 = vmatpush2.bf16.msra.mxu0 %v1450
      %1514 = vmatprep.subr.bf16.mxu0 %v1449
      %1515 = vmatpush2.bf16.msra.mxu0 %v1448
      %1516 = vmatprep.subr.bf16.mxu0 %v1447
      %1517 = vmatpush2.bf16.msra.mxu0 %v1446
      %1518 = vmatprep.subr.bf16.mxu0 %v1445
      %1519 = vmatpush2.bf16.msra.mxu0 %v1444
      %1520 = vmatprep.subr.bf16.mxu0 %v1443
      %1521 = vmatpush2.bf16.msra.mxu0 %v1442
      %1522 = vmatprep.mubr.bf16.mxu0 %v569
      %1523 = vmatmul.mubr.bf16.gmra.mxu0 %v568
      %v1524 = vpop.f32.mrf.mxu0
      %v1525 = vadd.f32 %v1323, %v1524
      %v1526 = vpop.f32.mrf.mxu0
      %v1527 = vadd.f32 %v1327, %v1526
      %v1528 = vpop.f32.mrf.mxu0
      %v1529 = vadd.f32 %v1323, %v1528
      %v1530 = vpop.f32.mrf.mxu0
      %v1531 = vadd.f32 %v1327, %v1530
      %1532 = vmatprep.mubr.bf16.mxu0 %v571
      %1533 = vmatmul.mubr.bf16.gmra.mxu0 %v570
      %v1534 = vpop.f32.mrf.mxu0
      %v1535 = vadd.f32 %v1323, %v1534
      %v1536 = vpop.f32.mrf.mxu0
      %v1537 = vadd.f32 %v1327, %v1536
      %v1538 = vpop.f32.mrf.mxu0
      %v1539 = vadd.f32 %v1323, %v1538
      %v1540 = vpop.f32.mrf.mxu0
      %v1541 = vadd.f32 %v1327, %v1540
      %1542 = vmatprep.mubr.bf16.mxu0 %v573
      %1543 = vmatmul.mubr.bf16.gmra.mxu0 %v572
      %v1544 = vpop.f32.mrf.mxu0
      %v1545 = vadd.f32 %v1323, %v1544
      %v1546 = vpop.f32.mrf.mxu0
      %v1547 = vadd.f32 %v1327, %v1546
      %v1548 = vpop.f32.mrf.mxu0
      %v1549 = vadd.f32 %v1323, %v1548
      %v1550 = vpop.f32.mrf.mxu0
      %v1551 = vadd.f32 %v1327, %v1550
      %1552 = vmatprep.mubr.bf16.mxu0 %v575
      %1553 = vmatmul.mubr.bf16.gmra.mxu0 %v574
      %v1554 = vpop.f32.mrf.mxu0
      %v1555 = vadd.f32 %v1323, %v1554
      %v1556 = vpop.f32.mrf.mxu0
      %v1557 = vadd.f32 %v1327, %v1556
      %v1558 = vpop.f32.mrf.mxu0
      %v1559 = vadd.f32 %v1323, %v1558
      %v1560 = vpop.f32.mrf.mxu0
      %v1561 = vadd.f32 %v1327, %v1560
      %1562 = vmatprep.mubr.bf16.mxu0 %v577
      %1563 = vmatmul.mubr.bf16.gmra.mxu0 %v576
      %v1564 = vpop.f32.mrf.mxu0
      %v1565 = vadd.f32 %v1323, %v1564
      %v1566 = vpop.f32.mrf.mxu0
      %v1567 = vadd.f32 %v1327, %v1566
      %v1568 = vpop.f32.mrf.mxu0
      %v1569 = vadd.f32 %v1323, %v1568
      %v1570 = vpop.f32.mrf.mxu0
      %v1571 = vadd.f32 %v1327, %v1570
      %1572 = vmatprep.mubr.bf16.mxu0 %v579
      %1573 = vmatmul.mubr.bf16.gmra.mxu0 %v578
      %v1574 = vpop.f32.mrf.mxu0
      %v1575 = vadd.f32 %v1323, %v1574
      %v1576 = vpop.f32.mrf.mxu0
      %v1577 = vadd.f32 %v1327, %v1576
      %v1578 = vpop.f32.mrf.mxu0
      %v1579 = vadd.f32 %v1323, %v1578
      %v1580 = vpop.f32.mrf.mxu0
      %v1581 = vadd.f32 %v1327, %v1580
      %1582 = vmatprep.mubr.bf16.mxu0 %v581
      %1583 = vmatmul.mubr.bf16.gmra.mxu0 %v580
      %v1584 = vpop.f32.mrf.mxu0
      %v1585 = vadd.f32 %v1323, %v1584
      %v1586 = vpop.f32.mrf.mxu0
      %v1587 = vadd.f32 %v1327, %v1586
      %v1588 = vpop.f32.mrf.mxu0
      %v1589 = vadd.f32 %v1323, %v1588
      %v1590 = vpop.f32.mrf.mxu0
      %v1591 = vadd.f32 %v1327, %v1590
      %1592 = vmatprep.mubr.bf16.mxu0 %v583
      %1593 = vmatmul.mubr.bf16.gmra.mxu0 %v582
      %v1594 = vpop.f32.mrf.mxu0
      %v1595 = vadd.f32 %v1323, %v1594
      %v1596 = vpop.f32.mrf.mxu0
      %v1597 = vadd.f32 %v1327, %v1596
      %v1598 = vpop.f32.mrf.mxu0
      %v1599 = vadd.f32 %v1323, %v1598
      %v1600 = vpop.f32.mrf.mxu0
      %v1601 = vadd.f32 %v1327, %v1600
      %1602 = vdwg.mxu0
      %v1603 = vmul.f32 %v1525, %v1527
      %v1604 = vmul.f32 %v1529, %v1531
      %v1605 = vmul.f32 %v1535, %v1537
      %v1606 = vmul.f32 %v1539, %v1541
      %v1607 = vmul.f32 %v1545, %v1547
      %v1608 = vmul.f32 %v1549, %v1551
      %v1609 = vmul.f32 %v1555, %v1557
      %v1610 = vmul.f32 %v1559, %v1561
      %v1611 = vmul.f32 %v1565, %v1567
      %v1612 = vmul.f32 %v1569, %v1571
      %v1613 = vmul.f32 %v1575, %v1577
      %v1614 = vmul.f32 %v1579, %v1581
      %v1615 = vmul.f32 %v1585, %v1587
      %v1616 = vmul.f32 %v1589, %v1591
      %v1617 = vmul.f32 %v1595, %v1597
      %v1618 = vmul.f32 %v1599, %v1601
      %v1619 = vadd.f32 %v1268, %v1603
      %v1620 = vadd.f32 %v1269, %v1604
      %v1621 = vadd.f32 %v1270, %v1605
      %v1622 = vadd.f32 %v1271, %v1606
      %v1623 = vadd.f32 %v1272, %v1607
      %v1624 = vadd.f32 %v1273, %v1608
      %v1625 = vadd.f32 %v1274, %v1609
      %v1626 = vadd.f32 %v1275, %v1610
      %v1627 = vadd.f32 %v1276, %v1611
      %v1628 = vadd.f32 %v1277, %v1612
      %v1629 = vadd.f32 %v1278, %v1613
      %v1630 = vadd.f32 %v1279, %v1614
      %v1631 = vadd.f32 %v1280, %v1615
      %v1632 = vadd.f32 %v1281, %v1616
      %v1633 = vadd.f32 %v1282, %v1617
      %v1634 = vadd.f32 %v1283, %v1618
      %s1635 = scalar_lea.vmem %s3, 768
      %v1636 = vld [vmem:[%s1635] sm:$0xff]
      %v1637 = vld [vmem:[%s1635 + $0x8] sm:$0xff]
      %v1638 = vld [vmem:[%s1635 + $0x10] sm:$0xff]
      %v1639 = vld [vmem:[%s1635 + $0x18] sm:$0xff]
      %v1640 = vld [vmem:[%s1635 + $0x20] sm:$0xff]
      %v1641 = vld [vmem:[%s1635 + $0x28] sm:$0xff]
      %v1642 = vld [vmem:[%s1635 + $0x30] sm:$0xff]
      %v1643 = vld [vmem:[%s1635 + $0x38] sm:$0xff]
      %v1644 = vld [vmem:[%s1635 + $0x40] sm:$0xff]
      %v1645 = vld [vmem:[%s1635 + $0x48] sm:$0xff]
      %v1646 = vld [vmem:[%s1635 + $0x50] sm:$0xff]
      %v1647 = vld [vmem:[%s1635 + $0x58] sm:$0xff]
      %v1648 = vld [vmem:[%s1635 + $0x60] sm:$0xff]
      %v1649 = vld [vmem:[%s1635 + $0x68] sm:$0xff]
      %v1650 = vld [vmem:[%s1635 + $0x70] sm:$0xff]
      %v1651 = vld [vmem:[%s1635 + $0x78] sm:$0xff]
      %v1652 = vld [vmem:[%s1635 + $0x80] sm:$0xff]
      %v1653 = vld [vmem:[%s1635 + $0x88] sm:$0xff]
      %v1654 = vld [vmem:[%s1635 + $0x90] sm:$0xff]
      %v1655 = vld [vmem:[%s1635 + $0x98] sm:$0xff]
      %v1656 = vld [vmem:[%s1635 + $0xa0] sm:$0xff]
      %v1657 = vld [vmem:[%s1635 + $0xa8] sm:$0xff]
      %v1658 = vld [vmem:[%s1635 + $0xb0] sm:$0xff]
      %v1659 = vld [vmem:[%s1635 + $0xb8] sm:$0xff]
      %v1660 = vld [vmem:[%s1635 + $0xc0] sm:$0xff]
      %v1661 = vld [vmem:[%s1635 + $0xc8] sm:$0xff]
      %v1662 = vld [vmem:[%s1635 + $0xd0] sm:$0xff]
      %v1663 = vld [vmem:[%s1635 + $0xd8] sm:$0xff]
      %v1664 = vld [vmem:[%s1635 + $0xe0] sm:$0xff]
      %v1665 = vld [vmem:[%s1635 + $0xe8] sm:$0xff]
      %v1666 = vld [vmem:[%s1635 + $0xf0] sm:$0xff]
      %v1667 = vld [vmem:[%s1635 + $0xf8] sm:$0xff]
      %s1668 = scalar_lea.vmem %s4, 6
      %v1669 = vld [vmem:[%s1668] sm:$0x3]
      %v1671 = vlaneseq
      %v1672 = vshrl.u32 %v1671, 7
      %v1673 = vsub.s32 0, %v1672
      %v1674 = vrot.slane %v1669, %v1673
      %v1675 = vlaneseq
      %v1676 = vshrl.u32 %v1675, 7
      %v1677 = vsub.s32 1, %v1676
      %v1678 = vrot.slane %v1669, %v1677
      %v1713 = vunpack.c.l.b16 %v1636
      %v1714 = vunpack.c.h.b16 %v1636
      %v1715 = vunpack.c.l.b16 %v1637
      %v1716 = vunpack.c.h.b16 %v1637
      %v1717 = vunpack.c.l.b16 %v1638
      %v1718 = vunpack.c.h.b16 %v1638
      %v1719 = vunpack.c.l.b16 %v1639
      %v1720 = vunpack.c.h.b16 %v1639
      %v1721 = vunpack.c.l.b16 %v1640
      %v1722 = vunpack.c.h.b16 %v1640
      %v1723 = vunpack.c.l.b16 %v1641
      %v1724 = vunpack.c.h.b16 %v1641
      %v1725 = vunpack.c.l.b16 %v1642
      %v1726 = vunpack.c.h.b16 %v1642
      %v1727 = vunpack.c.l.b16 %v1643
      %v1728 = vunpack.c.h.b16 %v1643
      %v1729 = vunpack.c.l.b16 %v1644
      %v1730 = vunpack.c.h.b16 %v1644
      %v1731 = vunpack.c.l.b16 %v1645
      %v1732 = vunpack.c.h.b16 %v1645
      %v1733 = vunpack.c.l.b16 %v1646
      %v1734 = vunpack.c.h.b16 %v1646
      %v1735 = vunpack.c.l.b16 %v1647
      %v1736 = vunpack.c.h.b16 %v1647
      %v1737 = vunpack.c.l.b16 %v1648
      %v1738 = vunpack.c.h.b16 %v1648
      %v1739 = vunpack.c.l.b16 %v1649
      %v1740 = vunpack.c.h.b16 %v1649
      %v1741 = vunpack.c.l.b16 %v1650
      %v1742 = vunpack.c.h.b16 %v1650
      %v1743 = vunpack.c.l.b16 %v1651
      %v1744 = vunpack.c.h.b16 %v1651
      %v1745 = vunpack.c.l.b16 %v1652
      %v1746 = vunpack.c.h.b16 %v1652
      %v1747 = vunpack.c.l.b16 %v1653
      %v1748 = vunpack.c.h.b16 %v1653
      %v1749 = vunpack.c.l.b16 %v1654
      %v1750 = vunpack.c.h.b16 %v1654
      %v1751 = vunpack.c.l.b16 %v1655
      %v1752 = vunpack.c.h.b16 %v1655
      %v1753 = vunpack.c.l.b16 %v1656
      %v1754 = vunpack.c.h.b16 %v1656
      %v1755 = vunpack.c.l.b16 %v1657
      %v1756 = vunpack.c.h.b16 %v1657
      %v1757 = vunpack.c.l.b16 %v1658
      %v1758 = vunpack.c.h.b16 %v1658
      %v1759 = vunpack.c.l.b16 %v1659
      %v1760 = vunpack.c.h.b16 %v1659
      %v1761 = vunpack.c.l.b16 %v1660
      %v1762 = vunpack.c.h.b16 %v1660
      %v1763 = vunpack.c.l.b16 %v1661
      %v1764 = vunpack.c.h.b16 %v1661
      %v1765 = vunpack.c.l.b16 %v1662
      %v1766 = vunpack.c.h.b16 %v1662
      %v1767 = vunpack.c.l.b16 %v1663
      %v1768 = vunpack.c.h.b16 %v1663
      %v1769 = vunpack.c.l.b16 %v1664
      %v1770 = vunpack.c.h.b16 %v1664
      %v1771 = vunpack.c.l.b16 %v1665
      %v1772 = vunpack.c.h.b16 %v1665
      %v1773 = vunpack.c.l.b16 %v1666
      %v1774 = vunpack.c.h.b16 %v1666
      %v1775 = vunpack.c.l.b16 %v1667
      %v1776 = vunpack.c.h.b16 %v1667
      %v1777 = vpack.c.b16 %v1715, %v1713
      %v1778 = vpack.c.b16 %v1716, %v1714
      %v1779 = vpack.c.b16 %v1719, %v1717
      %v1780 = vpack.c.b16 %v1720, %v1718
      %v1781 = vpack.c.b16 %v1723, %v1721
      %v1782 = vpack.c.b16 %v1724, %v1722
      %v1783 = vpack.c.b16 %v1727, %v1725
      %v1784 = vpack.c.b16 %v1728, %v1726
      %v1785 = vpack.c.b16 %v1731, %v1729
      %v1786 = vpack.c.b16 %v1732, %v1730
      %v1787 = vpack.c.b16 %v1735, %v1733
      %v1788 = vpack.c.b16 %v1736, %v1734
      %v1789 = vpack.c.b16 %v1739, %v1737
      %v1790 = vpack.c.b16 %v1740, %v1738
      %v1791 = vpack.c.b16 %v1743, %v1741
      %v1792 = vpack.c.b16 %v1744, %v1742
      %v1793 = vpack.c.b16 %v1747, %v1745
      %v1794 = vpack.c.b16 %v1748, %v1746
      %v1795 = vpack.c.b16 %v1751, %v1749
      %v1796 = vpack.c.b16 %v1752, %v1750
      %v1797 = vpack.c.b16 %v1755, %v1753
      %v1798 = vpack.c.b16 %v1756, %v1754
      %v1799 = vpack.c.b16 %v1759, %v1757
      %v1800 = vpack.c.b16 %v1760, %v1758
      %v1801 = vpack.c.b16 %v1763, %v1761
      %v1802 = vpack.c.b16 %v1764, %v1762
      %v1803 = vpack.c.b16 %v1767, %v1765
      %v1804 = vpack.c.b16 %v1768, %v1766
      %v1805 = vpack.c.b16 %v1771, %v1769
      %v1806 = vpack.c.b16 %v1772, %v1770
      %v1807 = vpack.c.b16 %v1775, %v1773
      %v1808 = vpack.c.b16 %v1776, %v1774
      %1841 = vmatprep.subr.bf16.mxu0 %v1792
      %1842 = vmatpush1.bf16.msra.mxu0 %v1791
      %1843 = vmatprep.subr.bf16.mxu0 %v1790
      %1844 = vmatpush1.bf16.msra.mxu0 %v1789
      %1845 = vmatprep.subr.bf16.mxu0 %v1788
      %1846 = vmatpush1.bf16.msra.mxu0 %v1787
      %1847 = vmatprep.subr.bf16.mxu0 %v1786
      %1848 = vmatpush1.bf16.msra.mxu0 %v1785
      %1849 = vmatprep.subr.bf16.mxu0 %v1784
      %1850 = vmatpush1.bf16.msra.mxu0 %v1783
      %1851 = vmatprep.subr.bf16.mxu0 %v1782
      %1852 = vmatpush1.bf16.msra.mxu0 %v1781
      %1853 = vmatprep.subr.bf16.mxu0 %v1780
      %1854 = vmatpush1.bf16.msra.mxu0 %v1779
      %1855 = vmatprep.subr.bf16.mxu0 %v1778
      %1856 = vmatpush1.bf16.msra.mxu0 %v1777
      %1857 = vmatprep.subr.bf16.mxu0 %v1808
      %1858 = vmatpush2.bf16.msra.mxu0 %v1807
      %1859 = vmatprep.subr.bf16.mxu0 %v1806
      %1860 = vmatpush2.bf16.msra.mxu0 %v1805
      %1861 = vmatprep.subr.bf16.mxu0 %v1804
      %1862 = vmatpush2.bf16.msra.mxu0 %v1803
      %1863 = vmatprep.subr.bf16.mxu0 %v1802
      %1864 = vmatpush2.bf16.msra.mxu0 %v1801
      %1865 = vmatprep.subr.bf16.mxu0 %v1800
      %1866 = vmatpush2.bf16.msra.mxu0 %v1799
      %1867 = vmatprep.subr.bf16.mxu0 %v1798
      %1868 = vmatpush2.bf16.msra.mxu0 %v1797
      %1869 = vmatprep.subr.bf16.mxu0 %v1796
      %1870 = vmatpush2.bf16.msra.mxu0 %v1795
      %1871 = vmatprep.subr.bf16.mxu0 %v1794
      %1872 = vmatpush2.bf16.msra.mxu0 %v1793
      %1873 = vmatprep.mubr.bf16.mxu0 %v569
      %1874 = vmatmul.mubr.bf16.gmra.mxu0 %v568
      %v1875 = vpop.f32.mrf.mxu0
      %v1876 = vadd.f32 %v1674, %v1875
      %v1877 = vpop.f32.mrf.mxu0
      %v1878 = vadd.f32 %v1678, %v1877
      %v1879 = vpop.f32.mrf.mxu0
      %v1880 = vadd.f32 %v1674, %v1879
      %v1881 = vpop.f32.mrf.mxu0
      %v1882 = vadd.f32 %v1678, %v1881
      %1883 = vmatprep.mubr.bf16.mxu0 %v571
      %1884 = vmatmul.mubr.bf16.gmra.mxu0 %v570
      %v1885 = vpop.f32.mrf.mxu0
      %v1886 = vadd.f32 %v1674, %v1885
      %v1887 = vpop.f32.mrf.mxu0
      %v1888 = vadd.f32 %v1678, %v1887
      %v1889 = vpop.f32.mrf.mxu0
      %v1890 = vadd.f32 %v1674, %v1889
      %v1891 = vpop.f32.mrf.mxu0
      %v1892 = vadd.f32 %v1678, %v1891
      %1893 = vmatprep.mubr.bf16.mxu0 %v573
      %1894 = vmatmul.mubr.bf16.gmra.mxu0 %v572
      %v1895 = vpop.f32.mrf.mxu0
      %v1896 = vadd.f32 %v1674, %v1895
      %v1897 = vpop.f32.mrf.mxu0
      %v1898 = vadd.f32 %v1678, %v1897
      %v1899 = vpop.f32.mrf.mxu0
      %v1900 = vadd.f32 %v1674, %v1899
      %v1901 = vpop.f32.mrf.mxu0
      %v1902 = vadd.f32 %v1678, %v1901
      %1903 = vmatprep.mubr.bf16.mxu0 %v575
      %1904 = vmatmul.mubr.bf16.gmra.mxu0 %v574
      %v1905 = vpop.f32.mrf.mxu0
      %v1906 = vadd.f32 %v1674, %v1905
      %v1907 = vpop.f32.mrf.mxu0
      %v1908 = vadd.f32 %v1678, %v1907
      %v1909 = vpop.f32.mrf.mxu0
      %v1910 = vadd.f32 %v1674, %v1909
      %v1911 = vpop.f32.mrf.mxu0
      %v1912 = vadd.f32 %v1678, %v1911
      %1913 = vmatprep.mubr.bf16.mxu0 %v577
      %1914 = vmatmul.mubr.bf16.gmra.mxu0 %v576
      %v1915 = vpop.f32.mrf.mxu0
      %v1916 = vadd.f32 %v1674, %v1915
      %v1917 = vpop.f32.mrf.mxu0
      %v1918 = vadd.f32 %v1678, %v1917
      %v1919 = vpop.f32.mrf.mxu0
      %v1920 = vadd.f32 %v1674, %v1919
      %v1921 = vpop.f32.mrf.mxu0
      %v1922 = vadd.f32 %v1678, %v1921
      %1923 = vmatprep.mubr.bf16.mxu0 %v579
      %1924 = vmatmul.mubr.bf16.gmra.mxu0 %v578
      %v1925 = vpop.f32.mrf.mxu0
      %v1926 = vadd.f32 %v1674, %v1925
      %v1927 = vpop.f32.mrf.mxu0
      %v1928 = vadd.f32 %v1678, %v1927
      %v1929 = vpop.f32.mrf.mxu0
      %v1930 = vadd.f32 %v1674, %v1929
      %v1931 = vpop.f32.mrf.mxu0
      %v1932 = vadd.f32 %v1678, %v1931
      %1933 = vmatprep.mubr.bf16.mxu0 %v581
      %1934 = vmatmul.mubr.bf16.gmra.mxu0 %v580
      %v1935 = vpop.f32.mrf.mxu0
      %v1936 = vadd.f32 %v1674, %v1935
      %v1937 = vpop.f32.mrf.mxu0
      %v1938 = vadd.f32 %v1678, %v1937
      %v1939 = vpop.f32.mrf.mxu0
      %v1940 = vadd.f32 %v1674, %v1939
      %v1941 = vpop.f32.mrf.mxu0
      %v1942 = vadd.f32 %v1678, %v1941
      %1943 = vmatprep.mubr.bf16.mxu0 %v583
      %1944 = vmatmul.mubr.bf16.gmra.mxu0 %v582
      %v1945 = vpop.f32.mrf.mxu0
      %v1946 = vadd.f32 %v1674, %v1945
      %v1947 = vpop.f32.mrf.mxu0
      %v1948 = vadd.f32 %v1678, %v1947
      %v1949 = vpop.f32.mrf.mxu0
      %v1950 = vadd.f32 %v1674, %v1949
      %v1951 = vpop.f32.mrf.mxu0
      %v1952 = vadd.f32 %v1678, %v1951
      %1953 = vdwg.mxu0
      %v1954 = vmul.f32 %v1876, %v1878
      %v1955 = vmul.f32 %v1880, %v1882
      %v1956 = vmul.f32 %v1886, %v1888
      %v1957 = vmul.f32 %v1890, %v1892
      %v1958 = vmul.f32 %v1896, %v1898
      %v1959 = vmul.f32 %v1900, %v1902
      %v1960 = vmul.f32 %v1906, %v1908
      %v1961 = vmul.f32 %v1910, %v1912
      %v1962 = vmul.f32 %v1916, %v1918
      %v1963 = vmul.f32 %v1920, %v1922
      %v1964 = vmul.f32 %v1926, %v1928
      %v1965 = vmul.f32 %v1930, %v1932
      %v1966 = vmul.f32 %v1936, %v1938
      %v1967 = vmul.f32 %v1940, %v1942
      %v1968 = vmul.f32 %v1946, %v1948
      %v1969 = vmul.f32 %v1950, %v1952
      %v1970 = vadd.f32 %v1619, %v1954
      %v1971 = vadd.f32 %v1620, %v1955
      %v1972 = vadd.f32 %v1621, %v1956
      %v1973 = vadd.f32 %v1622, %v1957
      %v1974 = vadd.f32 %v1623, %v1958
      %v1975 = vadd.f32 %v1624, %v1959
      %v1976 = vadd.f32 %v1625, %v1960
      %v1977 = vadd.f32 %v1626, %v1961
      %v1978 = vadd.f32 %v1627, %v1962
      %v1979 = vadd.f32 %v1628, %v1963
      %v1980 = vadd.f32 %v1629, %v1964
      %v1981 = vadd.f32 %v1630, %v1965
      %v1982 = vadd.f32 %v1631, %v1966
      %v1983 = vadd.f32 %v1632, %v1967
      %v1984 = vadd.f32 %v1633, %v1968
      %v1985 = vadd.f32 %v1634, %v1969
      %v1986 = vpack.c.bf16 %v1971, %v1970
      %v1987 = vpack.c.bf16 %v1973, %v1972
      %v1988 = vpack.c.bf16 %v1975, %v1974
      %v1989 = vpack.c.bf16 %v1977, %v1976
      %v1990 = vpack.c.bf16 %v1979, %v1978
      %v1991 = vpack.c.bf16 %v1981, %v1980
      %v1992 = vpack.c.bf16 %v1983, %v1982
      %v1993 = vpack.c.bf16 %v1985, %v1984
      %v1994 = vld [vmem:[%s5] sm:$0xf]
      %v1995 = vld [vmem:[%s5 + $0x4] sm:$0xf]
      %v1996 = vld [vmem:[%s5 + $0x8] sm:$0xf]
      %v1997 = vld [vmem:[%s5 + $0xc] sm:$0xf]
      %v1998 = vld [vmem:[%s5 + $0x10] sm:$0xf]
      %v1999 = vld [vmem:[%s5 + $0x14] sm:$0xf]
      %v2000 = vld [vmem:[%s5 + $0x18] sm:$0xf]
      %v2001 = vld [vmem:[%s5 + $0x1c] sm:$0xf]
      %v2002 = vld [vmem:[%s5 + $0x20] sm:$0xf]
      %v2003 = vld [vmem:[%s5 + $0x24] sm:$0xf]
      %v2004 = vld [vmem:[%s5 + $0x28] sm:$0xf]
      %v2005 = vld [vmem:[%s5 + $0x2c] sm:$0xf]
      %v2006 = vld [vmem:[%s5 + $0x30] sm:$0xf]
      %v2007 = vld [vmem:[%s5 + $0x34] sm:$0xf]
      %v2008 = vld [vmem:[%s5 + $0x38] sm:$0xf]
      %v2009 = vld [vmem:[%s5 + $0x3c] sm:$0xf]
      %v2010 = vld [vmem:[%s6] sm:$0x1]
      %v2012 = vlaneseq
      %v2013 = vshrl.u32 %v2012, 7
      %v2014 = vsub.s32 0, %v2013
      %v2015 = vrot.slane %v2010, %v2014
      %v2033 = vunpack.c.l.b16 %v1994
      %v2034 = vunpack.c.l.b16 %v1995
      %v2035 = vunpack.c.l.b16 %v1996
      %v2036 = vunpack.c.l.b16 %v1997
      %v2037 = vunpack.c.l.b16 %v1998
      %v2038 = vunpack.c.l.b16 %v1999
      %v2039 = vunpack.c.l.b16 %v2000
      %v2040 = vunpack.c.l.b16 %v2001
      %v2041 = vunpack.c.l.b16 %v2002
      %v2042 = vunpack.c.l.b16 %v2003
      %v2043 = vunpack.c.l.b16 %v2004
      %v2044 = vunpack.c.l.b16 %v2005
      %v2045 = vunpack.c.l.b16 %v2006
      %v2046 = vunpack.c.l.b16 %v2007
      %v2047 = vunpack.c.l.b16 %v2008
      %v2048 = vunpack.c.l.b16 %v2009
      %v2049 = vpack.c.b16 %v2034, %v2033
      %v2050 = vpack.c.b16 %v2036, %v2035
      %v2051 = vpack.c.b16 %v2038, %v2037
      %v2052 = vpack.c.b16 %v2040, %v2039
      %v2053 = vpack.c.b16 %v2042, %v2041
      %v2054 = vpack.c.b16 %v2044, %v2043
      %v2055 = vpack.c.b16 %v2046, %v2045
      %v2056 = vpack.c.b16 %v2048, %v2047
      %2065 = vmatprep.subr.bf16.mxu0 0
      %2066 = vmatpush1.bf16.msra.mxu0 %v2056
      %2067 = vmatprep.subr.bf16.mxu0 0
      %2068 = vmatpush1.bf16.msra.mxu0 %v2055
      %2069 = vmatprep.subr.bf16.mxu0 0
      %2070 = vmatpush1.bf16.msra.mxu0 %v2054
      %2071 = vmatprep.subr.bf16.mxu0 0
      %2072 = vmatpush1.bf16.msra.mxu0 %v2053
      %2073 = vmatprep.subr.bf16.mxu0 0
      %2074 = vmatpush1.bf16.msra.mxu0 %v2052
      %2075 = vmatprep.subr.bf16.mxu0 0
      %2076 = vmatpush1.bf16.msra.mxu0 %v2051
      %2077 = vmatprep.subr.bf16.mxu0 0
      %2078 = vmatpush1.bf16.msra.mxu0 %v2050
      %2079 = vmatprep.subr.bf16.mxu0 0
      %2080 = vmatpush1.bf16.msra.mxu0 %v2049
      %2081 = vmatprep.subr.bf16.mxu0 0
      %2082 = vmatpush2.bf16.msra.mxu0 0
      %2083 = vmatprep.subr.bf16.mxu0 0
      %2084 = vmatpush2.bf16.msra.mxu0 0
      %2085 = vmatprep.subr.bf16.mxu0 0
      %2086 = vmatpush2.bf16.msra.mxu0 0
      %2087 = vmatprep.subr.bf16.mxu0 0
      %2088 = vmatpush2.bf16.msra.mxu0 0
      %2089 = vmatprep.subr.bf16.mxu0 0
      %2090 = vmatpush2.bf16.msra.mxu0 0
      %2091 = vmatprep.subr.bf16.mxu0 0
      %2092 = vmatpush2.bf16.msra.mxu0 0
      %2093 = vmatprep.subr.bf16.mxu0 0
      %2094 = vmatpush2.bf16.msra.mxu0 0
      %2095 = vmatprep.subr.bf16.mxu0 0
      %2096 = vmatpush2.bf16.msra.mxu0 0
      %2097 = vmatprep.mubr.bf16.mxu0 0
      %2098 = vmatmul.mubr.bf16.gmra.mxu0 %v1986
      %v2099 = vpop.f32.mrf.mxu0
      %v2100 = vadd.f32 %v2015, %v2099
      %v2101 = vpop.f32.mrf.mxu0
      %v2102 = vpop.f32.mrf.mxu0
      %v2103 = vadd.f32 %v2015, %v2102
      %v2104 = vpop.f32.mrf.mxu0
      %2105 = vmatprep.mubr.bf16.mxu0 0
      %2106 = vmatmul.mubr.bf16.gmra.mxu0 %v1987
      %v2107 = vpop.f32.mrf.mxu0
      %v2108 = vadd.f32 %v2015, %v2107
      %v2109 = vpop.f32.mrf.mxu0
      %v2110 = vpop.f32.mrf.mxu0
      %v2111 = vadd.f32 %v2015, %v2110
      %v2112 = vpop.f32.mrf.mxu0
      %2113 = vmatprep.mubr.bf16.mxu0 0
      %2114 = vmatmul.mubr.bf16.gmra.mxu0 %v1988
      %v2115 = vpop.f32.mrf.mxu0
      %v2116 = vadd.f32 %v2015, %v2115
      %v2117 = vpop.f32.mrf.mxu0
      %v2118 = vpop.f32.mrf.mxu0
      %v2119 = vadd.f32 %v2015, %v2118
      %v2120 = vpop.f32.mrf.mxu0
      %2121 = vmatprep.mubr.bf16.mxu0 0
      %2122 = vmatmul.mubr.bf16.gmra.mxu0 %v1989
      %v2123 = vpop.f32.mrf.mxu0
      %v2124 = vadd.f32 %v2015, %v2123
      %v2125 = vpop.f32.mrf.mxu0
      %v2126 = vpop.f32.mrf.mxu0
      %v2127 = vadd.f32 %v2015, %v2126
      %v2128 = vpop.f32.mrf.mxu0
      %2129 = vmatprep.mubr.bf16.mxu0 0
      %2130 = vmatmul.mubr.bf16.gmra.mxu0 %v1990
      %v2131 = vpop.f32.mrf.mxu0
      %v2132 = vadd.f32 %v2015, %v2131
      %v2133 = vpop.f32.mrf.mxu0
      %v2134 = vpop.f32.mrf.mxu0
      %v2135 = vadd.f32 %v2015, %v2134
      %v2136 = vpop.f32.mrf.mxu0
      %2137 = vmatprep.mubr.bf16.mxu0 0
      %2138 = vmatmul.mubr.bf16.gmra.mxu0 %v1991
      %v2139 = vpop.f32.mrf.mxu0
      %v2140 = vadd.f32 %v2015, %v2139
      %v2141 = vpop.f32.mrf.mxu0
      %v2142 = vpop.f32.mrf.mxu0
      %v2143 = vadd.f32 %v2015, %v2142
      %v2144 = vpop.f32.mrf.mxu0
      %2145 = vmatprep.mubr.bf16.mxu0 0
      %2146 = vmatmul.mubr.bf16.gmra.mxu0 %v1992
      %v2147 = vpop.f32.mrf.mxu0
      %v2148 = vadd.f32 %v2015, %v2147
      %v2149 = vpop.f32.mrf.mxu0
      %v2150 = vpop.f32.mrf.mxu0
      %v2151 = vadd.f32 %v2015, %v2150
      %v2152 = vpop.f32.mrf.mxu0
      %2153 = vmatprep.mubr.bf16.mxu0 0
      %2154 = vmatmul.mubr.bf16.gmra.mxu0 %v1993
      %v2155 = vpop.f32.mrf.mxu0
      %v2156 = vadd.f32 %v2015, %v2155
      %v2157 = vpop.f32.mrf.mxu0
      %v2158 = vpop.f32.mrf.mxu0
      %v2159 = vadd.f32 %v2015, %v2158
      %v2160 = vpop.f32.mrf.mxu0
      %2161 = vdwg.mxu0
      %v2162 = vpack.c.bf16 %v2103, %v2100
      %v2163 = vpack.c.bf16 %v2111, %v2108
      %v2164 = vpack.c.bf16 %v2119, %v2116
      %v2165 = vpack.c.bf16 %v2127, %v2124
      %v2166 = vpack.c.bf16 %v2135, %v2132
      %v2167 = vpack.c.bf16 %v2143, %v2140
      %v2168 = vpack.c.bf16 %v2151, %v2148
      %v2169 = vpack.c.bf16 %v2159, %v2156
      %v2178 = vunpack.c.l.b16 %v2162
      %v2179 = vunpack.c.h.b16 %v2162
      %v2180 = vunpack.c.l.b16 %v2163
      %v2181 = vunpack.c.h.b16 %v2163
      %v2182 = vunpack.c.l.b16 %v2164
      %v2183 = vunpack.c.h.b16 %v2164
      %v2184 = vunpack.c.l.b16 %v2165
      %v2185 = vunpack.c.h.b16 %v2165
      %v2186 = vunpack.c.l.b16 %v2166
      %v2187 = vunpack.c.h.b16 %v2166
      %v2188 = vunpack.c.l.b16 %v2167
      %v2189 = vunpack.c.h.b16 %v2167
      %v2190 = vunpack.c.l.b16 %v2168
      %v2191 = vunpack.c.h.b16 %v2168
      %v2192 = vunpack.c.l.b16 %v2169
      %v2193 = vunpack.c.h.b16 %v2169
      %v2194 = vpack.c.b16 %v2178, %v2178
      %v2195 = vpack.c.b16 %v2179, %v2179
      %v2196 = vpack.c.b16 %v2180, %v2180
      %v2197 = vpack.c.b16 %v2181, %v2181
      %v2198 = vpack.c.b16 %v2182, %v2182
      %v2199 = vpack.c.b16 %v2183, %v2183
      %v2200 = vpack.c.b16 %v2184, %v2184
      %v2201 = vpack.c.b16 %v2185, %v2185
      %v2202 = vpack.c.b16 %v2186, %v2186
      %v2203 = vpack.c.b16 %v2187, %v2187
      %v2204 = vpack.c.b16 %v2188, %v2188
      %v2205 = vpack.c.b16 %v2189, %v2189
      %v2206 = vpack.c.b16 %v2190, %v2190
      %v2207 = vpack.c.b16 %v2191, %v2191
      %v2208 = vpack.c.b16 %v2192, %v2192
      %v2209 = vpack.c.b16 %v2193, %v2193
      %2226 = vst [vmem:[%s280] sm:$0xf] %v2194
      %2227 = vst [vmem:[%s280 + $0x4] sm:$0xf] %v2195
      %2228 = vst [vmem:[%s280 + $0x8] sm:$0xf] %v2196
      %2229 = vst [vmem:[%s280 + $0xc] sm:$0xf] %v2197
      %2230 = vst [vmem:[%s280 + $0x10] sm:$0xf] %v2198
      %2231 = vst [vmem:[%s280 + $0x14] sm:$0xf] %v2199
      %2232 = vst [vmem:[%s280 + $0x18] sm:$0xf] %v2200
      %2233 = vst [vmem:[%s280 + $0x1c] sm:$0xf] %v2201
      %2234 = vst [vmem:[%s280 + $0x20] sm:$0xf] %v2202
      %2235 = vst [vmem:[%s280 + $0x24] sm:$0xf] %v2203
      %2236 = vst [vmem:[%s280 + $0x28] sm:$0xf] %v2204
      %2237 = vst [vmem:[%s280 + $0x2c] sm:$0xf] %v2205
      %2238 = vst [vmem:[%s280 + $0x30] sm:$0xf] %v2206
      %2239 = vst [vmem:[%s280 + $0x34] sm:$0xf] %v2207
      %2240 = vst [vmem:[%s280 + $0x38] sm:$0xf] %v2208
      %2241 = vst [vmem:[%s280 + $0x3c] sm:$0xf] %v2209
      %s2242 = smul.u32 16, %s18
      %p2243 = scmp.lt.s32.totalorder %s2242, 31
      %s2244 = scalar_select %p2243, %s2242, 31
      %s2245 = smul.addr %s2244, 4
      %s2246 = scalar_lea.vmem %s7, %s2245
      // Predicated region
      $region49: #{mutan_forward.1} parent=47 // pred_check
        %p2247 = pneg %p188
      $region50: #{mutan_forward.1} parent=47 // pred_check_branch
        %2249 = sbr.rel (%p2247) target = $region52
      $region51: #{mutan_forward.1} parent=47 // pred_region
        %s2250 = smul.u32 16, %s18
      $region52: #{mutan_forward.1} parent=47 // pred_fallthru
        _
    $region48: #{mutan_forward.1} parent=5 // pred_fallthru
      _
    %p2251 = scmp.le.s32.totalorder 2, %s13
    // Predicated region
    $region53: #{mutan_forward.1} parent=5 // pred_check
      %p2252 = pneg %p2251
    $region54: #{mutan_forward.1} parent=5 // pred_check_branch
      %2254 = sbr.rel (%p2252) target = $region56
    $region55: #{mutan_forward.1} parent=5 // pred_region
      %s2255 = ssub.s32 %s13, 2
      // Predicated region
      $region57: #{mutan_forward.1} parent=55 // pred_check
        %p2256 = pneg %p194
      $region58: #{mutan_forward.1} parent=55 // pred_check_branch
        %2258 = sbr.rel (%p2256) target = $region60
      $region59: #{mutan_forward.1} parent=55 // pred_region
        %s2259 = smul.u32 16, %s19
        %p2260 = scmp.lt.s32.totalorder %s2259, 31
        %s2261 = scalar_select %p2260, %s2259, 31
        %s2262 = smul.addr %s2261, 4
        %s2263 = scalar_lea.vmem %s7, %s2262
      $region60: #{mutan_forward.1} parent=55 // pred_fallthru
        _
    $region56: #{mutan_forward.1} parent=5 // pred_fallthru
      _
  $region6: #{mutan_forward.1} parent=0 // loop_footer
    %s17 = sadd.s32 1, %s13
  $region7: #{mutan_forward.1} parent=0 // loop_footer_branch
    %12 = sbr.rel target = $region3
  $region8: #{mutan_forward.1} parent=0 // loop_exit
    _

</llo_original>
